<compile_context>
chip_gen: v7x
topology: tpu7x:2x2x1
jax: 0.10.0
libtpu: 0.0.40
codegen_flags: <defaults>
</compile_context>

<pallas_src>
import jax
import jax.numpy as jnp
from jax import lax
from jax.experimental import pallas as pl
from jax.experimental.pallas import tpu as pltpu

# Problem sizes (small, consistent with a Conv2d-based Concat head).
N, CIN, H, W = 2, 4, 16, 16
NUM_NETS = 3
COUT = 128                       # per-net output channels
C_TOTAL = NUM_NETS * COUT        # 384 (multiple of 128 -> lane aligned)
HW = H * W                       # 256 spatial positions (lane dim)
CINP = CIN + 1                   # +1 ones-row for the folded bias


def concat_kernel(x_ref, w_ref, o_ref):
    """One grid step processes x_ref.shape[0] batch elements.

    x_ref: (BN, CIN+1, HW)     activations + ones row (spatial on lanes)
    w_ref: (CIN+1, C_TOTAL)    fused [weights; bias] slab, lane-dense
    o_ref: (BN, C_TOTAL, HW)   fused / concatenated output
    """
    w = w_ref[...]
    for b in range(x_ref.shape[0]):      # static: 1 (v7x grid) or N (collapsed)
        o_ref[b] = lax.dot_general(
            w, x_ref[b],
            dimension_numbers=(((0,), (0,)), ((), ())),   # contract CIN+1
            preferred_element_type=jnp.float32,
            precision=jax.lax.Precision.HIGHEST,
        ).astype(o_ref.dtype)


def _per_batch_grid():
    """True -> one grid step per batch element (multi-TC chips, e.g. v7x);
       False -> one grid step for the whole batch (single-TC v5e / v6e)."""
    try:
        kind = jax.devices()[0].device_kind.lower()
    except Exception:
        return True  # safe default: per-batch grid is correct everywhere
    if "v5" in kind or "v6" in kind:
        return False
    return True


def concat_forward(x_nchw, weights, biases):
    """x_nchw : (N, CIN, H, W) f32
       weights: (NUM_NETS, CIN, COUT) f32   (net k: y = x @ weights[k] + biases[k])
       biases : (NUM_NETS, COUT) f32
       returns: (N, NUM_NETS*COUT, H, W) f32  == torch.cat([net(x)...], dim=1)
    """
    n, cin, h, w = x_nchw.shape
    hw = h * w

    # Free reshape NCHW -> (N, CIN, H*W); append ones-row to fold the bias.
    x_flat = x_nchw.reshape(n, cin, hw)
    x_aug = jnp.concatenate(
        [x_flat, jnp.ones((n, 1, hw), dtype=x_flat.dtype)], axis=1)  # (N, CIN+1, HW)

    # Fuse all heads into one lane-dense (CIN+1, C_TOTAL) slab:
    #   w_aug[c, k*COUT+d] = weights[k, c, d];   w_aug[CIN, k*COUT+d] = biases[k, d]
    w_fused = jnp.transpose(weights, (1, 0, 2)).reshape(cin, C_TOTAL)
    w_aug = jnp.concatenate([w_fused, biases.reshape(1, C_TOTAL)], axis=0)

    if _per_batch_grid():
        grid = (n,)
        bn = 1
        x_map = lambda b: (b, 0, 0)
        o_map = lambda b: (b, 0, 0)
        dim_sem = ("parallel",)          # one batch element per TensorCore
    else:
        grid = (1,)
        bn = n
        x_map = lambda b: (0, 0, 0)
        o_map = lambda b: (0, 0, 0)
        dim_sem = ("arbitrary",)         # single-TC chips: one step, no overhead

    cost = pl.CostEstimate(
        flops=2 * n * C_TOTAL * CINP * hw,
        transcendentals=0,
        bytes_accessed=(x_aug.size + w_aug.size + n * C_TOTAL * hw) * 4,
    )

    out = pl.pallas_call(
        concat_kernel,
        out_shape=jax.ShapeDtypeStruct((n, C_TOTAL, hw), jnp.float32),
        grid_spec=pl.GridSpec(
            grid=grid,
            in_specs=[
                pl.BlockSpec((bn, CINP, hw), x_map),
                # grid-invariant weight slab: fetched once, single-buffered
                pl.BlockSpec((CINP, C_TOTAL), lambda b: (0, 0),
                             pipeline_mode=pl.Buffered(1)),
            ],
            out_specs=pl.BlockSpec((bn, C_TOTAL, hw), o_map),
        ),
        compiler_params=pltpu.CompilerParams(dimension_semantics=dim_sem),
        cost_estimate=cost,
    )(x_aug, w_aug)

    # Free reshape back to NCHW.
    return out.reshape(n, C_TOTAL, h, w)


if __name__ == "__main__":
    key = jax.random.PRNGKey(0)
    kx, kw, kb = jax.random.split(key, 3)

    x = jax.random.normal(kx, (N, CIN, H, W), dtype=jnp.float32)
    # Deterministic synthetic parameters for the NUM_NETS 1x1-conv sub-nets.
    weights = 0.1 * jax.random.normal(kw, (NUM_NETS, CIN, COUT), dtype=jnp.float32)
    biases = 0.1 * jax.random.normal(kb, (NUM_NETS, COUT), dtype=jnp.float32)

    out = jax.block_until_ready(concat_forward(x, weights, biases))

    # Pure-JAX reference: per-net 1x1 conv then concat along channel dim.
    ref = jnp.einsum("nchw,kcd->nkdhw", x, weights,
                     precision=jax.lax.Precision.HIGHEST) \
        + biases[None, :, :, None, None]
    ref = ref.reshape(N, NUM_NETS * COUT, H, W)

    assert out.shape == (N, NUM_NETS * COUT, H, W)
    assert jnp.allclose(out, ref, atol=1e-4, rtol=1e-4)
    print("KERNEL_OK")
</pallas_src>

<mosaic_0001>
module attributes {stable_mosaic.version = 11 : i64} {
  func.func @concat_kernel(%arg0: i32, %arg1: memref<1x5x256xf32, #tpu.memory_space<vmem>>, %arg2: memref<5x384xf32, #tpu.memory_space<vmem>>, %arg3: memref<1x384x256xf32, #tpu.memory_space<vmem>>) attributes {dimension_semantics = [#tpu.dimension_semantics<parallel>], iteration_bounds = array<i64: 2>, scalar_prefetch = 0 : i64, scratch_operands = 0 : i64, tpu.core_type = #tpu.core_type<tc>, window_params = [{transform_indices = @transform_0, window_bounds = array<i64: 1, 5, 256>}, {pipeline_mode = #tpu.pipeline_mode<synchronous>, transform_indices = @transform_1, window_bounds = array<i64: 5, 384>}, {transform_indices = @transform_2, window_bounds = array<i64: 1, 384, 256>}]} {
    %c0 = arith.constant 0 : index
    %c0_0 = arith.constant 0 : index
    %0 = vector.load %arg2[%c0, %c0_0] : memref<5x384xf32, #tpu.memory_space<vmem>>, vector<5x384xf32>
    %c0_1 = arith.constant 0 : index
    %c0_2 = arith.constant 0 : index
    %c0_3 = arith.constant 0 : index
    %1 = vector.load %arg1[%c0_1, %c0_2, %c0_3] : memref<1x5x256xf32, #tpu.memory_space<vmem>>, vector<1x5x256xf32>
    %2 = vector.shape_cast %1 : vector<1x5x256xf32> to vector<5x256xf32>
    %cst = arith.constant dense<0.000000e+00> : vector<384x256xf32>
    %3 = tpu.matmul %0, %2, %cst {dimension_numbers = #tpu.dot_dimension_numbers<[0], [0], [1], [1], [0, 1, 1, 1], [], []>, precision = #tpu.contract_precision<fp32>} : vector<5x384xf32>, vector<5x256xf32>, vector<384x256xf32> -> vector<384x256xf32>
    %c0_4 = arith.constant 0 : index
    %c0_5 = arith.constant 0 : index
    %c0_6 = arith.constant 0 : index
    %4 = vector.load %arg3[%c0_4, %c0_5, %c0_6] : memref<1x384x256xf32, #tpu.memory_space<vmem>>, vector<1x384x256xf32>
    %5 = vector.shape_cast %4 : vector<1x384x256xf32> to vector<384x256xf32>
    %6 = vector.shape_cast %3 : vector<384x256xf32> to vector<1x384x256xf32>
    tpu.vector_store %arg3[%c0_4, %c0_5, %c0_6], %6 {strides = array<i32>} : memref<1x384x256xf32, #tpu.memory_space<vmem>>, vector<1x384x256xf32>,
    return
  }
  func.func @transform_0(%arg0: i32) -> (i32, i32, i32) {
    %c0_i32 = arith.constant 0 : i32
    %c0_i32_0 = arith.constant 0 : i32
    %c0_i32_1 = arith.constant 0 : i32
    return %arg0, %c0_i32, %c0_i32_0 : i32, i32, i32
  }
  func.func @transform_1(%arg0: i32) -> (i32, i32) {
    %c0_i32 = arith.constant 0 : i32
    %c0_i32_0 = arith.constant 0 : i32
    %c0_i32_1 = arith.constant 0 : i32
    return %c0_i32, %c0_i32_0 : i32, i32
  }
  func.func @transform_2(%arg0: i32) -> (i32, i32, i32) {
    %c0_i32 = arith.constant 0 : i32
    %c0_i32_0 = arith.constant 0 : i32
    %c0_i32_1 = arith.constant 0 : i32
    return %arg0, %c0_i32, %c0_i32_0 : i32, i32, i32
  }
}

</mosaic_0001>

<llo_original>
// kernel: tpu_custom_call.1
$region0: #{tpu_custom_call.1}
  #allocation0 [shape = 'u32[]', space=smem, size = 0x4, offset = 0x4, fixed_abs, tag = 'smem constant byte address 0x4 - core index']
  #allocation1 [shape = 'u32[144,128]{1,0:T(1,128)}', space=vmem, size = 0x12000, scoped, tag = 'internal scratch']
  %s0 = inlined_call_operand.vmem [shape: f32[2,5,256], index: 0, kind: input, shape index: {}]
  %s1 = inlined_call_operand.vmem [shape: f32[5,384], index: 1, kind: input, shape index: {}]
  %s2 = inlined_call_operand.hbm [shape: f32[2,384,256], index: 2, kind: output, shape index: {}]
  %s3 = sld [smem:[#allocation0]]
  $region41: #{tpu_custom_call.1} parent=0
    _
  %s5 = ssub.s32 1, %s3
  %s6 = scalar_select 0, %s5, %s3
  $region1: #{tpu_custom_call.1} parent=0
    #allocation2 [shape = 'u8[786432]{0}', space=vmem, size = 0xc0000, scoped, tag = 'output window, operand 0']
    #allocation3 [shape = 's32[2]{0}', space=sflag, size = 0x8, scoped, tag = 'scoped memory for tpu_custom_call.1']
    %7 = vsyncpa [#allocation3], 0
    %s8 = scalar_lea.sflag [#allocation3], 1
    %9 = vsyncpa %s8, 0
    loop: start=0, step=1, limit=4
    $region2: #{tpu_custom_call.1} parent=1 // loop_pre_header
      _
    $region3: #{tpu_custom_call.1} parent=1 // loop_header
      %s11 = sphi 0, %s15
      %p12 = scmp.ge.s32.totalorder %s11, 4
      %s21 = sphi 0, %s23
      %s24 = sphi 0, %s21
      %s25 = sphi 0, %s24
      %s41 = sphi 0, %s25
      %s45 = sphi 0, %s45
      %s47 = sphi 0, %s45
      %s48 = sphi 0, %s47
      %s62 = sphi 0, %s48
      %s68 = sphi 0, %s70
      %s71 = sphi 0, %s68
      %s72 = sphi 0, %s71
      %s88 = sphi 0, %s72
    $region4: #{tpu_custom_call.1} parent=1 // loop_header_branch
      %14 = sbr.rel (%p12) target = $region8
    $region5: #{tpu_custom_call.1} parent=1 // loop_body
      %s16 = ssub.s32 %s11, 1
      %s17 = ssub.s32 %s11, 2
      %s18 = sadd.s32 %s11, 1
      %s19 = ssub.s32 %s11, %s18
      %p20 = scmp.eq.s32.totalorder %s19, 0
      %s22 = sadd.s32 %s21, 1
      %s23 = scalar_select %p20, %s21, %s22
      %p26 = pneg %p20
      %p27 = scmp.eq.s32.totalorder %s11, 1
      %p28 = por %p26, %p27
      %p29 = scmp.ne.s32.totalorder %s21, %s24
      %p30 = scmp.eq.s32.totalorder %s11, 0
      %p31 = por %p29, %p30
      %p32 = scmp.ne.s32.totalorder %s21, %s24
      %p33 = scmp.eq.s32.totalorder %s16, 1
      %p34 = por %p32, %p33
      %p35 = scmp.ne.s32.totalorder %s24, %s25
      %p36 = scmp.eq.s32.totalorder %s16, 0
      %p37 = por %p35, %p36
      %p38 = scmp.ne.s32.totalorder %s24, %s25
      %p39 = scmp.eq.s32.totalorder %s17, 1
      %p40 = por %p38, %p39
      %p42 = scmp.ne.s32.totalorder %s25, %s41
      %p43 = scmp.eq.s32.totalorder %s17, 0
      %p44 = por %p42, %p43
      %s46 = sadd.s32 %s45, 1
      %p49 = scmp.eq.s32.totalorder %s11, 1
      %p50 = scmp.ne.s32.totalorder %s45, %s47
      %p51 = scmp.eq.s32.totalorder %s11, 0
      %p52 = por %p50, %p51
      %p53 = scmp.ne.s32.totalorder %s45, %s47
      %p54 = scmp.eq.s32.totalorder %s16, 1
      %p55 = por %p53, %p54
      %p56 = scmp.ne.s32.totalorder %s47, %s48
      %p57 = scmp.eq.s32.totalorder %s16, 0
      %p58 = por %p56, %p57
      %p59 = scmp.ne.s32.totalorder %s47, %s48
      %p60 = scmp.eq.s32.totalorder %s17, 1
      %p61 = por %p59, %p60
      %p63 = scmp.ne.s32.totalorder %s48, %s62
      %p64 = scmp.eq.s32.totalorder %s17, 0
      %p65 = por %p63, %p64
      %s66 = ssub.s32 %s11, %s18
      %p67 = scmp.eq.s32.totalorder %s66, 0
      %s69 = sadd.s32 %s68, 1
      %s70 = scalar_select %p67, %s68, %s69
      %p73 = pneg %p67
      %p74 = scmp.eq.s32.totalorder %s11, 1
      %p75 = por %p73, %p74
      %p76 = scmp.ne.s32.totalorder %s68, %s71
      %p77 = scmp.eq.s32.totalorder %s11, 0
      %p78 = por %p76, %p77
      %p79 = scmp.ne.s32.totalorder %s68, %s71
      %p80 = scmp.eq.s32.totalorder %s16, 1
      %p81 = por %p79, %p80
      %p82 = scmp.ne.s32.totalorder %s71, %s72
      %p83 = scmp.eq.s32.totalorder %s16, 0
      %p84 = por %p82, %p83
      %p85 = scmp.ne.s32.totalorder %s71, %s72
      %p86 = scmp.eq.s32.totalorder %s17, 1
      %p87 = por %p85, %p86
      %p89 = scmp.ne.s32.totalorder %s72, %s88
      %p90 = scmp.eq.s32.totalorder %s17, 0
      %p91 = por %p89, %p90
      %p92 = scmp.le.s32.totalorder 1, %s11
      %p93 = scmp.lt.s32.totalorder %s11, 3
      %p94 = pnand %p92, %p93
      %p95 = pneg %p94
      // Predicated region
      $region9: #{tpu_custom_call.1} parent=5 // pred_check
        _
      $region10: #{tpu_custom_call.1} parent=5 // pred_check_branch
        %97 = sbr.rel (%p94) target = $region12
      $region11: #{tpu_custom_call.1} parent=5 // pred_region
        %s98 = ssub.s32 %s11, 1
        // Predicated region
        $region13: #{tpu_custom_call.1} parent=11 // pred_check
          %p99 = pneg %p58
        $region14: #{tpu_custom_call.1} parent=11 // pred_check_branch
          %101 = sbr.rel (%p99) target = $region16
        $region15: #{tpu_custom_call.1} parent=11 // pred_region
          _
        $region16: #{tpu_custom_call.1} parent=11 // pred_fallthru
          _
      $region12: #{tpu_custom_call.1} parent=5 // pred_fallthru
        _
      %p102 = scmp.lt.s32.totalorder %s11, 2
      // Predicated region
      $region17: #{tpu_custom_call.1} parent=5 // pred_check
        %p103 = pneg %p102
      $region18: #{tpu_custom_call.1} parent=5 // pred_check_branch
        %105 = sbr.rel (%p103) target = $region20
      $region19: #{tpu_custom_call.1} parent=5 // pred_region
        // Predicated region
        $region21: #{tpu_custom_call.1} parent=19 // pred_check
          %p106 = pneg %p31
        $region22: #{tpu_custom_call.1} parent=19 // pred_check_branch
          %108 = sbr.rel (%p106) target = $region24
        $region23: #{tpu_custom_call.1} parent=19 // pred_region
          %p109 = scmp.lt.s32.totalorder %s11, 1
          %s110 = scalar_select %p109, %s11, 1
          %s111 = smul.addr %s110, 2
          %s112 = smul.addr %s111, 8
          %s113 = scalar_lea.vmem %s0, %s112
        $region24: #{tpu_custom_call.1} parent=19 // pred_fallthru
          _
      $region20: #{tpu_custom_call.1} parent=5 // pred_fallthru
        _
      %p114 = scmp.le.s32.totalorder 1, %s11
      %p115 = scmp.lt.s32.totalorder %s11, 3
      %p116 = pnand %p114, %p115
      %p117 = pneg %p116
      // Predicated region
      $region25: #{tpu_custom_call.1} parent=5 // pred_check
        _
      $region26: #{tpu_custom_call.1} parent=5 // pred_check_branch
        %119 = sbr.rel (%p116) target = $region28
      $region27: #{tpu_custom_call.1} parent=5 // pred_region
        %s120 = ssub.s32 %s11, 1
        %p121 = scmp.lt.s32.totalorder %s16, 1
        %s122 = scalar_select %p121, %s16, 1
        %s123 = smul.addr %s122, 2
        %s124 = smul.addr %s123, 8
        %s125 = scalar_lea.vmem %s0, %s124
        %p126 = pneg %p37
        %p127 = pneg %p34
        %p128 = pneg %p58
        %p129 = pneg %p55
        %p130 = pneg %p84
        %p131 = pneg %p81
        %s132 = sand.u32 %s71, 1
        %s133 = scalar_lea.sflag [#allocation3], %s132
        %s134 = sand.u32 %s71, 1
        %s135 = smul.addr %s134, 768
        %s136 = scalar_lea.vmem [#allocation2], %s135
        %p137 = scmp.lt.s32.totalorder %s16, 1
        %s138 = scalar_select %p137, %s16, 1
        %s139 = smul.addr %s138, 2
        %s140 = smul.addr %s139, 8
        %s141 = scalar_lea.vmem %s0, %s140
        %v142 = vld [vmem:[%s1] sm:$0x1f]
        %v143 = vld [vmem:[%s1 + $0x8] sm:$0x1f]
        %v144 = vld [vmem:[%s1 + $0x10] sm:$0x1f]
        %v145 = vld [vmem:[%s141] sm:$0x1f]
        %v146 = vld [vmem:[%s141 + $0x8] sm:$0x1f]
        %147 = vxpose.xlu0.b32.start [1/16] %v142, 128
        %148 = vxpose.xlu0.b32.cont [2/16] 0.0, 128
        %149 = vxpose.xlu0.b32.cont [3/16] 0.0, 128
        %150 = vxpose.xlu0.b32.cont [4/16] 0.0, 128
        %151 = vxpose.xlu0.b32.cont [5/16] 0.0, 128
        %152 = vxpose.xlu0.b32.cont [6/16] 0.0, 128
        %153 = vxpose.xlu0.b32.cont [7/16] 0.0, 128
        %154 = vxpose.xlu0.b32.cont [8/16] 0.0, 128
        %155 = vxpose.xlu0.b32.cont [9/16] 0.0, 128
        %156 = vxpose.xlu0.b32.cont [10/16] 0.0, 128
        %157 = vxpose.xlu0.b32.cont [11/16] 0.0, 128
        %158 = vxpose.xlu0.b32.cont [12/16] 0.0, 128
        %159 = vxpose.xlu0.b32.cont [13/16] 0.0, 128
        %160 = vxpose.xlu0.b32.cont [14/16] 0.0, 128
        %161 = vxpose.xlu0.b32.cont [15/16] 0.0, 128
        %162 = vxpose.xlu0.b32.end [16/16] 0.0, 128
        %v163 = vpop.trf.xlu0
        %v164 = vpop.trf.xlu0
        %v165 = vpop.trf.xlu0
        %v166 = vpop.trf.xlu0
        %v167 = vpop.trf.xlu0
        %v168 = vpop.trf.xlu0
        %v169 = vpop.trf.xlu0
        %v170 = vpop.trf.xlu0
        %v171 = vpop.trf.xlu0
        %v172 = vpop.trf.xlu0
        %v173 = vpop.trf.xlu0
        %v174 = vpop.trf.xlu0
        %v175 = vpop.trf.xlu0
        %v176 = vpop.trf.xlu0
        %v177 = vpop.trf.xlu0
        %v178 = vpop.trf.xlu0
        %179 = vxpose.xlu0.b32.start [1/16] %v143, 128
        %180 = vxpose.xlu0.b32.cont [2/16] 0.0, 128
        %181 = vxpose.xlu0.b32.cont [3/16] 0.0, 128
        %182 = vxpose.xlu0.b32.cont [4/16] 0.0, 128
        %183 = vxpose.xlu0.b32.cont [5/16] 0.0, 128
        %184 = vxpose.xlu0.b32.cont [6/16] 0.0, 128
        %185 = vxpose.xlu0.b32.cont [7/16] 0.0, 128
        %186 = vxpose.xlu0.b32.cont [8/16] 0.0, 128
        %187 = vxpose.xlu0.b32.cont [9/16] 0.0, 128
        %188 = vxpose.xlu0.b32.cont [10/16] 0.0, 128
        %189 = vxpose.xlu0.b32.cont [11/16] 0.0, 128
        %190 = vxpose.xlu0.b32.cont [12/16] 0.0, 128
        %191 = vxpose.xlu0.b32.cont [13/16] 0.0, 128
        %192 = vxpose.xlu0.b32.cont [14/16] 0.0, 128
        %193 = vxpose.xlu0.b32.cont [15/16] 0.0, 128
        %194 = vxpose.xlu0.b32.end [16/16] 0.0, 128
        %v195 = vpop.trf.xlu0
        %v196 = vpop.trf.xlu0
        %v197 = vpop.trf.xlu0
        %v198 = vpop.trf.xlu0
        %v199 = vpop.trf.xlu0
        %v200 = vpop.trf.xlu0
        %v201 = vpop.trf.xlu0
        %v202 = vpop.trf.xlu0
        %v203 = vpop.trf.xlu0
        %v204 = vpop.trf.xlu0
        %v205 = vpop.trf.xlu0
        %v206 = vpop.trf.xlu0
        %v207 = vpop.trf.xlu0
        %v208 = vpop.trf.xlu0
        %v209 = vpop.trf.xlu0
        %v210 = vpop.trf.xlu0
        %211 = vxpose.xlu0.b32.start [1/16] %v144, 128
        %212 = vxpose.xlu0.b32.cont [2/16] 0.0, 128
        %213 = vxpose.xlu0.b32.cont [3/16] 0.0, 128
        %214 = vxpose.xlu0.b32.cont [4/16] 0.0, 128
        %215 = vxpose.xlu0.b32.cont [5/16] 0.0, 128
        %216 = vxpose.xlu0.b32.cont [6/16] 0.0, 128
        %217 = vxpose.xlu0.b32.cont [7/16] 0.0, 128
        %218 = vxpose.xlu0.b32.cont [8/16] 0.0, 128
        %219 = vxpose.xlu0.b32.cont [9/16] 0.0, 128
        %220 = vxpose.xlu0.b32.cont [10/16] 0.0, 128
        %221 = vxpose.xlu0.b32.cont [11/16] 0.0, 128
        %222 = vxpose.xlu0.b32.cont [12/16] 0.0, 128
        %223 = vxpose.xlu0.b32.cont [13/16] 0.0, 128
        %224 = vxpose.xlu0.b32.cont [14/16] 0.0, 128
        %225 = vxpose.xlu0.b32.cont [15/16] 0.0, 128
        %226 = vxpose.xlu0.b32.end [16/16] 0.0, 128
        %v227 = vpop.trf.xlu0
        %v228 = vpop.trf.xlu0
        %v229 = vpop.trf.xlu0
        %v230 = vpop.trf.xlu0
        %v231 = vpop.trf.xlu0
        %v232 = vpop.trf.xlu0
        %v233 = vpop.trf.xlu0
        %v234 = vpop.trf.xlu0
        %v235 = vpop.trf.xlu0
        %v236 = vpop.trf.xlu0
        %v237 = vpop.trf.xlu0
        %v238 = vpop.trf.xlu0
        %v239 = vpop.trf.xlu0
        %v240 = vpop.trf.xlu0
        %v241 = vpop.trf.xlu0
        %v242 = vpop.trf.xlu0
        %vm243 = vcmask 39936
        %v245 = vsel %vm243, %v163, 0
        %v248 = vsel %vm243, %v164, 0
        %v251 = vsel %vm243, %v165, 0
        %v254 = vsel %vm243, %v166, 0
        %v257 = vsel %vm243, %v167, 0
        %v260 = vsel %vm243, %v168, 0
        %v263 = vsel %vm243, %v169, 0
        %v266 = vsel %vm243, %v170, 0
        %v269 = vsel %vm243, %v171, 0
        %v272 = vsel %vm243, %v172, 0
        %v275 = vsel %vm243, %v173, 0
        %v278 = vsel %vm243, %v174, 0
        %v281 = vsel %vm243, %v175, 0
        %v284 = vsel %vm243, %v176, 0
        %v287 = vsel %vm243, %v177, 0
        %v290 = vsel %vm243, %v178, 0
        %v293 = vsel %vm243, %v195, 0
        %v296 = vsel %vm243, %v196, 0
        %v299 = vsel %vm243, %v197, 0
        %v302 = vsel %vm243, %v198, 0
        %v305 = vsel %vm243, %v199, 0
        %v308 = vsel %vm243, %v200, 0
        %v311 = vsel %vm243, %v201, 0
        %v314 = vsel %vm243, %v202, 0
        %v317 = vsel %vm243, %v203, 0
        %v320 = vsel %vm243, %v204, 0
        %v323 = vsel %vm243, %v205, 0
        %v326 = vsel %vm243, %v206, 0
        %v329 = vsel %vm243, %v207, 0
        %v332 = vsel %vm243, %v208, 0
        %v335 = vsel %vm243, %v209, 0
        %v338 = vsel %vm243, %v210, 0
        %v341 = vsel %vm243, %v227, 0
        %v344 = vsel %vm243, %v228, 0
        %v347 = vsel %vm243, %v229, 0
        %v350 = vsel %vm243, %v230, 0
        %v353 = vsel %vm243, %v231, 0
        %v356 = vsel %vm243, %v232, 0
        %v359 = vsel %vm243, %v233, 0
        %v362 = vsel %vm243, %v234, 0
        %v365 = vsel %vm243, %v235, 0
        %v368 = vsel %vm243, %v236, 0
        %v371 = vsel %vm243, %v237, 0
        %v374 = vsel %vm243, %v238, 0
        %v377 = vsel %vm243, %v239, 0
        %v380 = vsel %vm243, %v240, 0
        %v383 = vsel %vm243, %v241, 0
        %v386 = vsel %vm243, %v242, 0
        %vm388 = vcmask 1044480
        %v390 = vsel %vm388, %v145, 0
        %v393 = vsel %vm388, %v146, 0
        %v395 = vand.u32 %v393, 4294901760
        %396 = vmatprep.subr.mxu0 %v395
        %v397 = vand.u32 %v390, 4294901760
        %398 = vmatpush1.msra.mxu0 %v397
        %399 = vmatprep.subr.mxu0 0.0
        %400 = vmatpush1.msra.mxu0 0.0
        %401 = vmatprep.subr.mxu0 0.0
        %402 = vmatpush1.msra.mxu0 0.0
        %403 = vmatprep.subr.mxu0 0.0
        %404 = vmatpush1.msra.mxu0 0.0
        %405 = vmatprep.subr.mxu0 0.0
        %406 = vmatpush1.msra.mxu0 0.0
        %407 = vmatprep.subr.mxu0 0.0
        %408 = vmatpush1.msra.mxu0 0.0
        %409 = vmatprep.subr.mxu0 0.0
        %410 = vmatpush1.msra.mxu0 0.0
        %411 = vmatprep.subr.mxu0 0.0
        %412 = vmatpush1.msra.mxu0 0.0
        %413 = vmatprep.subr.mxu0 0.0
        %414 = vmatpush1.msra.mxu0 0.0
        %415 = vmatprep.subr.mxu0 0.0
        %416 = vmatpush1.msra.mxu0 0.0
        %417 = vmatprep.subr.mxu0 0.0
        %418 = vmatpush1.msra.mxu0 0.0
        %419 = vmatprep.subr.mxu0 0.0
        %420 = vmatpush1.msra.mxu0 0.0
        %421 = vmatprep.subr.mxu0 0.0
        %422 = vmatpush1.msra.mxu0 0.0
        %423 = vmatprep.subr.mxu0 0.0
        %424 = vmatpush1.msra.mxu0 0.0
        %425 = vmatprep.subr.mxu0 0.0
        %426 = vmatpush1.msra.mxu0 0.0
        %427 = vmatprep.subr.mxu0 0.0
        %428 = vmatpush1.msra.mxu0 0.0
        %429 = vmatprep.subr.mxu0 0.0
        %430 = vmatpush1.msra.mxu0 0.0
        %431 = vmatprep.subr.mxu0 0.0
        %432 = vmatpush1.msra.mxu0 0.0
        %433 = vmatprep.subr.mxu0 0.0
        %434 = vmatpush1.msra.mxu0 0.0
        %435 = vmatprep.subr.mxu0 0.0
        %436 = vmatpush1.msra.mxu0 0.0
        %437 = vmatprep.subr.mxu0 0.0
        %438 = vmatpush1.msra.mxu0 0.0
        %439 = vmatprep.subr.mxu0 0.0
        %440 = vmatpush1.msra.mxu0 0.0
        %441 = vmatprep.subr.mxu0 0.0
        %442 = vmatpush1.msra.mxu0 0.0
        %443 = vmatprep.subr.mxu0 0.0
        %444 = vmatpush1.msra.mxu0 0.0
        %445 = vmatprep.subr.mxu0 0.0
        %446 = vmatpush1.msra.mxu0 0.0
        %447 = vmatprep.subr.mxu0 0.0
        %448 = vmatpush1.msra.mxu0 0.0
        %449 = vmatprep.subr.mxu0 0.0
        %450 = vmatpush1.msra.mxu0 0.0
        %451 = vmatprep.subr.mxu0 0.0
        %452 = vmatpush1.msra.mxu0 0.0
        %453 = vmatprep.subr.mxu0 0.0
        %454 = vmatpush1.msra.mxu0 0.0
        %455 = vmatprep.subr.mxu0 0.0
        %456 = vmatpush1.msra.mxu0 0.0
        %457 = vmatprep.subr.mxu0 0.0
        %458 = vmatpush1.msra.mxu0 0.0
        %459 = vmatprep.subr.mxu0 0.0
        %460 = vmatpush1.msra.mxu0 0.0
        %461 = vmatprep.mubr.f32.mxu0 0.0
        %v462 = vand.u32 %v245, 4294901760
        %v463 = vsub.f32 %v245, %v462
        %v464 = vand.u32 %v463, 4294901760
        %v465 = vsub.f32 %v463, %v464
        %v466 = vand.u32 %v465, 4294901760
        %467 = vmatmul.mubr.f32.gmra.mrb[0].mxu0 %v466
        %v468 = vpop.f32.mrb[0].mxu0
        %v469 = vadd.f32 0.0, %v468
        %v470 = vpop.f32.mrb[0].mxu0
        %v471 = vadd.f32 0.0, %v470
        %472 = vmatprep.mubr.f32.mxu0 0.0
        %v473 = vand.u32 %v248, 4294901760
        %v474 = vsub.f32 %v248, %v473
        %v475 = vand.u32 %v474, 4294901760
        %v476 = vsub.f32 %v474, %v475
        %v477 = vand.u32 %v476, 4294901760
        %478 = vmatmul.mubr.f32.gmra.mrb[0].mxu0 %v477
        %v479 = vpop.f32.mrb[0].mxu0
        %v480 = vadd.f32 0.0, %v479
        %v481 = vpop.f32.mrb[0].mxu0
        %v482 = vadd.f32 0.0, %v481
        %483 = vmatprep.mubr.f32.mxu0 0.0
        %v484 = vand.u32 %v251, 4294901760
        %v485 = vsub.f32 %v251, %v484
        %v486 = vand.u32 %v485, 4294901760
        %v487 = vsub.f32 %v485, %v486
        %v488 = vand.u32 %v487, 4294901760
        %489 = vmatmul.mubr.f32.gmra.mrb[0].mxu0 %v488
        %v490 = vpop.f32.mrb[0].mxu0
        %v491 = vadd.f32 0.0, %v490
        %v492 = vpop.f32.mrb[0].mxu0
        %v493 = vadd.f32 0.0, %v492
        %494 = vmatprep.mubr.f32.mxu0 0.0
        %v495 = vand.u32 %v254, 4294901760
        %v496 = vsub.f32 %v254, %v495
        %v497 = vand.u32 %v496, 4294901760
        %v498 = vsub.f32 %v496, %v497
        %v499 = vand.u32 %v498, 4294901760
        %500 = vmatmul.mubr.f32.gmra.mrb[0].mxu0 %v499
        %v501 = vpop.f32.mrb[0].mxu0
        %v502 = vadd.f32 0.0, %v501
        %v503 = vpop.f32.mrb[0].mxu0
        %v504 = vadd.f32 0.0, %v503
        %505 = vmatprep.mubr.f32.mxu0 0.0
        %v506 = vand.u32 %v257, 4294901760
        %v507 = vsub.f32 %v257, %v506
        %v508 = vand.u32 %v507, 4294901760
        %v509 = vsub.f32 %v507, %v508
        %v510 = vand.u32 %v509, 4294901760
        %511 = vmatmul.mubr.f32.gmra.mrb[0].mxu0 %v510
        %v512 = vpop.f32.mrb[0].mxu0
        %v513 = vadd.f32 0.0, %v512
        %v514 = vpop.f32.mrb[0].mxu0
        %v515 = vadd.f32 0.0, %v514
        %516 = vmatprep.mubr.f32.mxu0 0.0
        %v517 = vand.u32 %v260, 4294901760
        %v518 = vsub.f32 %v260, %v517
        %v519 = vand.u32 %v518, 4294901760
        %v520 = vsub.f32 %v518, %v519
        %v521 = vand.u32 %v520, 4294901760
        %522 = vmatmul.mubr.f32.gmra.mrb[0].mxu0 %v521
        %v523 = vpop.f32.mrb[0].mxu0
        %v524 = vadd.f32 0.0, %v523
        %v525 = vpop.f32.mrb[0].mxu0
        %v526 = vadd.f32 0.0, %v525
        %527 = vmatprep.mubr.f32.mxu0 0.0
        %v528 = vand.u32 %v263, 4294901760
        %v529 = vsub.f32 %v263, %v528
        %v530 = vand.u32 %v529, 4294901760
        %v531 = vsub.f32 %v529, %v530
        %v532 = vand.u32 %v531, 4294901760
        %533 = vmatmul.mubr.f32.gmra.mrb[0].mxu0 %v532
        %v534 = vpop.f32.mrb[0].mxu0
        %v535 = vadd.f32 0.0, %v534
        %v536 = vpop.f32.mrb[0].mxu0
        %v537 = vadd.f32 0.0, %v536
        %538 = vmatprep.mubr.f32.mxu0 0.0
        %v539 = vand.u32 %v266, 4294901760
        %v540 = vsub.f32 %v266, %v539
        %v541 = vand.u32 %v540, 4294901760
        %v542 = vsub.f32 %v540, %v541
        %v543 = vand.u32 %v542, 4294901760
        %544 = vmatmul.mubr.f32.gmra.mrb[0].mxu0 %v543
        %v545 = vpop.f32.mrb[0].mxu0
        %v546 = vadd.f32 0.0, %v545
        %v547 = vpop.f32.mrb[0].mxu0
        %v548 = vadd.f32 0.0, %v547
        %549 = vmatprep.mubr.f32.mxu0 0.0
        %v550 = vand.u32 %v269, 4294901760
        %v551 = vsub.f32 %v269, %v550
        %v552 = vand.u32 %v551, 4294901760
        %v553 = vsub.f32 %v551, %v552
        %v554 = vand.u32 %v553, 4294901760
        %555 = vmatmul.mubr.f32.gmra.mrb[0].mxu0 %v554
        %v556 = vpop.f32.mrb[0].mxu0
        %v557 = vadd.f32 0.0, %v556
        %v558 = vpop.f32.mrb[0].mxu0
        %v559 = vadd.f32 0.0, %v558
        %560 = vmatprep.mubr.f32.mxu0 0.0
        %v561 = vand.u32 %v272, 4294901760
        %v562 = vsub.f32 %v272, %v561
        %v563 = vand.u32 %v562, 4294901760
        %v564 = vsub.f32 %v562, %v563
        %v565 = vand.u32 %v564, 4294901760
        %566 = vmatmul.mubr.f32.gmra.mrb[0].mxu0 %v565
        %v567 = vpop.f32.mrb[0].mxu0
        %v568 = vadd.f32 0.0, %v567
        %v569 = vpop.f32.mrb[0].mxu0
        %v570 = vadd.f32 0.0, %v569
        %571 = vmatprep.mubr.f32.mxu0 0.0
        %v572 = vand.u32 %v275, 4294901760
        %v573 = vsub.f32 %v275, %v572
        %v574 = vand.u32 %v573, 4294901760
        %v575 = vsub.f32 %v573, %v574
        %v576 = vand.u32 %v575, 4294901760
        %577 = vmatmul.mubr.f32.gmra.mrb[0].mxu0 %v576
        %v578 = vpop.f32.mrb[0].mxu0
        %v579 = vadd.f32 0.0, %v578
        %v580 = vpop.f32.mrb[0].mxu0
        %v581 = vadd.f32 0.0, %v580
        %582 = vmatprep.mubr.f32.mxu0 0.0
        %v583 = vand.u32 %v278, 4294901760
        %v584 = vsub.f32 %v278, %v583
        %v585 = vand.u32 %v584, 4294901760
        %v586 = vsub.f32 %v584, %v585
        %v587 = vand.u32 %v586, 4294901760
        %588 = vmatmul.mubr.f32.gmra.mrb[0].mxu0 %v587
        %v589 = vpop.f32.mrb[0].mxu0
        %v590 = vadd.f32 0.0, %v589
        %v591 = vpop.f32.mrb[0].mxu0
        %v592 = vadd.f32 0.0, %v591
        %593 = vmatprep.mubr.f32.mxu0 0.0
        %v594 = vand.u32 %v281, 4294901760
        %v595 = vsub.f32 %v281, %v594
        %v596 = vand.u32 %v595, 4294901760
        %v597 = vsub.f32 %v595, %v596
        %v598 = vand.u32 %v597, 4294901760
        %599 = vmatmul.mubr.f32.gmra.mrb[0].mxu0 %v598
        %v600 = vpop.f32.mrb[0].mxu0
        %v601 = vadd.f32 0.0, %v600
        %v602 = vpop.f32.mrb[0].mxu0
        %v603 = vadd.f32 0.0, %v602
        %604 = vmatprep.mubr.f32.mxu0 0.0
        %v605 = vand.u32 %v284, 4294901760
        %v606 = vsub.f32 %v284, %v605
        %v607 = vand.u32 %v606, 4294901760
        %v608 = vsub.f32 %v606, %v607
        %v609 = vand.u32 %v608, 4294901760
        %610 = vmatmul.mubr.f32.gmra.mrb[0].mxu0 %v609
        %v611 = vpop.f32.mrb[0].mxu0
        %v612 = vadd.f32 0.0, %v611
        %v613 = vpop.f32.mrb[0].mxu0
        %v614 = vadd.f32 0.0, %v613
        %615 = vmatprep.mubr.f32.mxu0 0.0
        %v616 = vand.u32 %v287, 4294901760
        %v617 = vsub.f32 %v287, %v616
        %v618 = vand.u32 %v617, 4294901760
        %v619 = vsub.f32 %v617, %v618
        %v620 = vand.u32 %v619, 4294901760
        %621 = vmatmul.mubr.f32.gmra.mrb[0].mxu0 %v620
        %v622 = vpop.f32.mrb[0].mxu0
        %v623 = vadd.f32 0.0, %v622
        %v624 = vpop.f32.mrb[0].mxu0
        %v625 = vadd.f32 0.0, %v624
        %626 = vmatprep.mubr.f32.mxu0 0.0
        %v627 = vand.u32 %v290, 4294901760
        %v628 = vsub.f32 %v290, %v627
        %v629 = vand.u32 %v628, 4294901760
        %v630 = vsub.f32 %v628, %v629
        %v631 = vand.u32 %v630, 4294901760
        %632 = vmatmul.mubr.f32.gmra.mrb[0].mxu0 %v631
        %v633 = vpop.f32.mrb[0].mxu0
        %v634 = vadd.f32 0.0, %v633
        %v635 = vpop.f32.mrb[0].mxu0
        %v636 = vadd.f32 0.0, %v635
        %637 = vmatprep.mubr.f32.mxu0 0.0
        %v638 = vand.u32 %v293, 4294901760
        %v639 = vsub.f32 %v293, %v638
        %v640 = vand.u32 %v639, 4294901760
        %v641 = vsub.f32 %v639, %v640
        %v642 = vand.u32 %v641, 4294901760
        %643 = vmatmul.mubr.f32.gmra.mrb[0].mxu0 %v642
        %v644 = vpop.f32.mrb[0].mxu0
        %v645 = vadd.f32 0.0, %v644
        %v646 = vpop.f32.mrb[0].mxu0
        %v647 = vadd.f32 0.0, %v646
        %648 = vmatprep.mubr.f32.mxu0 0.0
        %v649 = vand.u32 %v296, 4294901760
        %v650 = vsub.f32 %v296, %v649
        %v651 = vand.u32 %v650, 4294901760
        %v652 = vsub.f32 %v650, %v651
        %v653 = vand.u32 %v652, 4294901760
        %654 = vmatmul.mubr.f32.gmra.mrb[0].mxu0 %v653
        %v655 = vpop.f32.mrb[0].mxu0
        %v656 = vadd.f32 0.0, %v655
        %v657 = vpop.f32.mrb[0].mxu0
        %v658 = vadd.f32 0.0, %v657
        %659 = vmatprep.mubr.f32.mxu0 0.0
        %v660 = vand.u32 %v299, 4294901760
        %v661 = vsub.f32 %v299, %v660
        %v662 = vand.u32 %v661, 4294901760
        %v663 = vsub.f32 %v661, %v662
        %v664 = vand.u32 %v663, 4294901760
        %665 = vmatmul.mubr.f32.gmra.mrb[0].mxu0 %v664
        %v666 = vpop.f32.mrb[0].mxu0
        %v667 = vadd.f32 0.0, %v666
        %v668 = vpop.f32.mrb[0].mxu0
        %v669 = vadd.f32 0.0, %v668
        %670 = vmatprep.mubr.f32.mxu0 0.0
        %v671 = vand.u32 %v302, 4294901760
        %v672 = vsub.f32 %v302, %v671
        %v673 = vand.u32 %v672, 4294901760
        %v674 = vsub.f32 %v672, %v673
        %v675 = vand.u32 %v674, 4294901760
        %676 = vmatmul.mubr.f32.gmra.mrb[0].mxu0 %v675
        %v677 = vpop.f32.mrb[0].mxu0
        %v678 = vadd.f32 0.0, %v677
        %v679 = vpop.f32.mrb[0].mxu0
        %v680 = vadd.f32 0.0, %v679
        %681 = vmatprep.mubr.f32.mxu0 0.0
        %v682 = vand.u32 %v305, 4294901760
        %v683 = vsub.f32 %v305, %v682
        %v684 = vand.u32 %v683, 4294901760
        %v685 = vsub.f32 %v683, %v684
        %v686 = vand.u32 %v685, 4294901760
        %687 = vmatmul.mubr.f32.gmra.mrb[0].mxu0 %v686
        %v688 = vpop.f32.mrb[0].mxu0
        %v689 = vadd.f32 0.0, %v688
        %v690 = vpop.f32.mrb[0].mxu0
        %v691 = vadd.f32 0.0, %v690
        %692 = vmatprep.mubr.f32.mxu0 0.0
        %v693 = vand.u32 %v308, 4294901760
        %v694 = vsub.f32 %v308, %v693
        %v695 = vand.u32 %v694, 4294901760
        %v696 = vsub.f32 %v694, %v695
        %v697 = vand.u32 %v696, 4294901760
        %698 = vmatmul.mubr.f32.gmra.mrb[0].mxu0 %v697
        %v699 = vpop.f32.mrb[0].mxu0
        %v700 = vadd.f32 0.0, %v699
        %v701 = vpop.f32.mrb[0].mxu0
        %v702 = vadd.f32 0.0, %v701
        %703 = vmatprep.mubr.f32.mxu0 0.0
        %v704 = vand.u32 %v311, 4294901760
        %v705 = vsub.f32 %v311, %v704
        %v706 = vand.u32 %v705, 4294901760
        %v707 = vsub.f32 %v705, %v706
        %v708 = vand.u32 %v707, 4294901760
        %709 = vmatmul.mubr.f32.gmra.mrb[0].mxu0 %v708
        %v710 = vpop.f32.mrb[0].mxu0
        %v711 = vadd.f32 0.0, %v710
        %v712 = vpop.f32.mrb[0].mxu0
        %v713 = vadd.f32 0.0, %v712
        %714 = vmatprep.mubr.f32.mxu0 0.0
        %v715 = vand.u32 %v314, 4294901760
        %v716 = vsub.f32 %v314, %v715
        %v717 = vand.u32 %v716, 4294901760
        %v718 = vsub.f32 %v716, %v717
        %v719 = vand.u32 %v718, 4294901760
        %720 = vmatmul.mubr.f32.gmra.mrb[0].mxu0 %v719
        %v721 = vpop.f32.mrb[0].mxu0
        %v722 = vadd.f32 0.0, %v721
        %v723 = vpop.f32.mrb[0].mxu0
        %v724 = vadd.f32 0.0, %v723
        %725 = vmatprep.mubr.f32.mxu0 0.0
        %v726 = vand.u32 %v317, 4294901760
        %v727 = vsub.f32 %v317, %v726
        %v728 = vand.u32 %v727, 4294901760
        %v729 = vsub.f32 %v727, %v728
        %v730 = vand.u32 %v729, 4294901760
        %731 = vmatmul.mubr.f32.gmra.mrb[0].mxu0 %v730
        %v732 = vpop.f32.mrb[0].mxu0
        %v733 = vadd.f32 0.0, %v732
        %v734 = vpop.f32.mrb[0].mxu0
        %v735 = vadd.f32 0.0, %v734
        %736 = vmatprep.mubr.f32.mxu0 0.0
        %v737 = vand.u32 %v320, 4294901760
        %v738 = vsub.f32 %v320, %v737
        %v739 = vand.u32 %v738, 4294901760
        %v740 = vsub.f32 %v738, %v739
        %v741 = vand.u32 %v740, 4294901760
        %742 = vmatmul.mubr.f32.gmra.mrb[0].mxu0 %v741
        %v743 = vpop.f32.mrb[0].mxu0
        %v744 = vadd.f32 0.0, %v743
        %v745 = vpop.f32.mrb[0].mxu0
        %v746 = vadd.f32 0.0, %v745
        %747 = vmatprep.mubr.f32.mxu0 0.0
        %v748 = vand.u32 %v323, 4294901760
        %v749 = vsub.f32 %v323, %v748
        %v750 = vand.u32 %v749, 4294901760
        %v751 = vsub.f32 %v749, %v750
        %v752 = vand.u32 %v751, 4294901760
        %753 = vmatmul.mubr.f32.gmra.mrb[0].mxu0 %v752
        %v754 = vpop.f32.mrb[0].mxu0
        %v755 = vadd.f32 0.0, %v754
        %v756 = vpop.f32.mrb[0].mxu0
        %v757 = vadd.f32 0.0, %v756
        %758 = vmatprep.mubr.f32.mxu0 0.0
        %v759 = vand.u32 %v326, 4294901760
        %v760 = vsub.f32 %v326, %v759
        %v761 = vand.u32 %v760, 4294901760
        %v762 = vsub.f32 %v760, %v761
        %v763 = vand.u32 %v762, 4294901760
        %764 = vmatmul.mubr.f32.gmra.mrb[0].mxu0 %v763
        %v765 = vpop.f32.mrb[0].mxu0
        %v766 = vadd.f32 0.0, %v765
        %v767 = vpop.f32.mrb[0].mxu0
        %v768 = vadd.f32 0.0, %v767
        %769 = vmatprep.mubr.f32.mxu0 0.0
        %v770 = vand.u32 %v329, 4294901760
        %v771 = vsub.f32 %v329, %v770
        %v772 = vand.u32 %v771, 4294901760
        %v773 = vsub.f32 %v771, %v772
        %v774 = vand.u32 %v773, 4294901760
        %775 = vmatmul.mubr.f32.gmra.mrb[0].mxu0 %v774
        %v776 = vpop.f32.mrb[0].mxu0
        %v777 = vadd.f32 0.0, %v776
        %v778 = vpop.f32.mrb[0].mxu0
        %v779 = vadd.f32 0.0, %v778
        %780 = vmatprep.mubr.f32.mxu0 0.0
        %v781 = vand.u32 %v332, 4294901760
        %v782 = vsub.f32 %v332, %v781
        %v783 = vand.u32 %v782, 4294901760
        %v784 = vsub.f32 %v782, %v783
        %v785 = vand.u32 %v784, 4294901760
        %786 = vmatmul.mubr.f32.gmra.mrb[0].mxu0 %v785
        %v787 = vpop.f32.mrb[0].mxu0
        %v788 = vadd.f32 0.0, %v787
        %v789 = vpop.f32.mrb[0].mxu0
        %v790 = vadd.f32 0.0, %v789
        %791 = vmatprep.mubr.f32.mxu0 0.0
        %v792 = vand.u32 %v335, 4294901760
        %v793 = vsub.f32 %v335, %v792
        %v794 = vand.u32 %v793, 4294901760
        %v795 = vsub.f32 %v793, %v794
        %v796 = vand.u32 %v795, 4294901760
        %797 = vmatmul.mubr.f32.gmra.mrb[0].mxu0 %v796
        %v798 = vpop.f32.mrb[0].mxu0
        %v799 = vadd.f32 0.0, %v798
        %v800 = vpop.f32.mrb[0].mxu0
        %v801 = vadd.f32 0.0, %v800
        %802 = vmatprep.mubr.f32.mxu0 0.0
        %v803 = vand.u32 %v338, 4294901760
        %v804 = vsub.f32 %v338, %v803
        %v805 = vand.u32 %v804, 4294901760
        %v806 = vsub.f32 %v804, %v805
        %v807 = vand.u32 %v806, 4294901760
        %808 = vmatmul.mubr.f32.gmra.mrb[0].mxu0 %v807
        %v809 = vpop.f32.mrb[0].mxu0
        %v810 = vadd.f32 0.0, %v809
        %v811 = vpop.f32.mrb[0].mxu0
        %v812 = vadd.f32 0.0, %v811
        %813 = vmatprep.mubr.f32.mxu0 0.0
        %v814 = vand.u32 %v341, 4294901760
        %v815 = vsub.f32 %v341, %v814
        %v816 = vand.u32 %v815, 4294901760
        %v817 = vsub.f32 %v815, %v816
        %v818 = vand.u32 %v817, 4294901760
        %819 = vmatmul.mubr.f32.gmra.mrb[0].mxu0 %v818
        %v820 = vpop.f32.mrb[0].mxu0
        %v821 = vadd.f32 0.0, %v820
        %v822 = vpop.f32.mrb[0].mxu0
        %v823 = vadd.f32 0.0, %v822
        %824 = vmatprep.mubr.f32.mxu0 0.0
        %v825 = vand.u32 %v344, 4294901760
        %v826 = vsub.f32 %v344, %v825
        %v827 = vand.u32 %v826, 4294901760
        %v828 = vsub.f32 %v826, %v827
        %v829 = vand.u32 %v828, 4294901760
        %830 = vmatmul.mubr.f32.gmra.mrb[0].mxu0 %v829
        %v831 = vpop.f32.mrb[0].mxu0
        %v832 = vadd.f32 0.0, %v831
        %v833 = vpop.f32.mrb[0].mxu0
        %v834 = vadd.f32 0.0, %v833
        %835 = vmatprep.mubr.f32.mxu0 0.0
        %v836 = vand.u32 %v347, 4294901760
        %v837 = vsub.f32 %v347, %v836
        %v838 = vand.u32 %v837, 4294901760
        %v839 = vsub.f32 %v837, %v838
        %v840 = vand.u32 %v839, 4294901760
        %841 = vmatmul.mubr.f32.gmra.mrb[0].mxu0 %v840
        %v842 = vpop.f32.mrb[0].mxu0
        %v843 = vadd.f32 0.0, %v842
        %v844 = vpop.f32.mrb[0].mxu0
        %v845 = vadd.f32 0.0, %v844
        %846 = vmatprep.mubr.f32.mxu0 0.0
        %v847 = vand.u32 %v350, 4294901760
        %v848 = vsub.f32 %v350, %v847
        %v849 = vand.u32 %v848, 4294901760
        %v850 = vsub.f32 %v848, %v849
        %v851 = vand.u32 %v850, 4294901760
        %852 = vmatmul.mubr.f32.gmra.mrb[0].mxu0 %v851
        %v853 = vpop.f32.mrb[0].mxu0
        %v854 = vadd.f32 0.0, %v853
        %v855 = vpop.f32.mrb[0].mxu0
        %v856 = vadd.f32 0.0, %v855
        %857 = vmatprep.mubr.f32.mxu0 0.0
        %v858 = vand.u32 %v353, 4294901760
        %v859 = vsub.f32 %v353, %v858
        %v860 = vand.u32 %v859, 4294901760
        %v861 = vsub.f32 %v859, %v860
        %v862 = vand.u32 %v861, 4294901760
        %863 = vmatmul.mubr.f32.gmra.mrb[0].mxu0 %v862
        %v864 = vpop.f32.mrb[0].mxu0
        %v865 = vadd.f32 0.0, %v864
        %v866 = vpop.f32.mrb[0].mxu0
        %v867 = vadd.f32 0.0, %v866
        %868 = vmatprep.mubr.f32.mxu0 0.0
        %v869 = vand.u32 %v356, 4294901760
        %v870 = vsub.f32 %v356, %v869
        %v871 = vand.u32 %v870, 4294901760
        %v872 = vsub.f32 %v870, %v871
        %v873 = vand.u32 %v872, 4294901760
        %874 = vmatmul.mubr.f32.gmra.mrb[0].mxu0 %v873
        %v875 = vpop.f32.mrb[0].mxu0
        %v876 = vadd.f32 0.0, %v875
        %v877 = vpop.f32.mrb[0].mxu0
        %v878 = vadd.f32 0.0, %v877
        %879 = vmatprep.mubr.f32.mxu0 0.0
        %v880 = vand.u32 %v359, 4294901760
        %v881 = vsub.f32 %v359, %v880
        %v882 = vand.u32 %v881, 4294901760
        %v883 = vsub.f32 %v881, %v882
        %v884 = vand.u32 %v883, 4294901760
        %885 = vmatmul.mubr.f32.gmra.mrb[0].mxu0 %v884
        %v886 = vpop.f32.mrb[0].mxu0
        %v887 = vadd.f32 0.0, %v886
        %v888 = vpop.f32.mrb[0].mxu0
        %v889 = vadd.f32 0.0, %v888
        %890 = vmatprep.mubr.f32.mxu0 0.0
        %v891 = vand.u32 %v362, 4294901760
        %v892 = vsub.f32 %v362, %v891
        %v893 = vand.u32 %v892, 4294901760
        %v894 = vsub.f32 %v892, %v893
        %v895 = vand.u32 %v894, 4294901760
        %896 = vmatmul.mubr.f32.gmra.mrb[0].mxu0 %v895
        %v897 = vpop.f32.mrb[0].mxu0
        %v898 = vadd.f32 0.0, %v897
        %v899 = vpop.f32.mrb[0].mxu0
        %v900 = vadd.f32 0.0, %v899
        %901 = vmatprep.mubr.f32.mxu0 0.0
        %v902 = vand.u32 %v365, 4294901760
        %v903 = vsub.f32 %v365, %v902
        %v904 = vand.u32 %v903, 4294901760
        %v905 = vsub.f32 %v903, %v904
        %v906 = vand.u32 %v905, 4294901760
        %907 = vmatmul.mubr.f32.gmra.mrb[0].mxu0 %v906
        %v908 = vpop.f32.mrb[0].mxu0
        %v909 = vadd.f32 0.0, %v908
        %v910 = vpop.f32.mrb[0].mxu0
        %v911 = vadd.f32 0.0, %v910
        %912 = vmatprep.mubr.f32.mxu0 0.0
        %v913 = vand.u32 %v368, 4294901760
        %v914 = vsub.f32 %v368, %v913
        %v915 = vand.u32 %v914, 4294901760
        %v916 = vsub.f32 %v914, %v915
        %v917 = vand.u32 %v916, 4294901760
        %918 = vmatmul.mubr.f32.gmra.mrb[0].mxu0 %v917
        %v919 = vpop.f32.mrb[0].mxu0
        %v920 = vadd.f32 0.0, %v919
        %v921 = vpop.f32.mrb[0].mxu0
        %v922 = vadd.f32 0.0, %v921
        %923 = vmatprep.mubr.f32.mxu0 0.0
        %v924 = vand.u32 %v371, 4294901760
        %v925 = vsub.f32 %v371, %v924
        %v926 = vand.u32 %v925, 4294901760
        %v927 = vsub.f32 %v925, %v926
        %v928 = vand.u32 %v927, 4294901760
        %929 = vmatmul.mubr.f32.gmra.mrb[0].mxu0 %v928
        %v930 = vpop.f32.mrb[0].mxu0
        %v931 = vadd.f32 0.0, %v930
        %v932 = vpop.f32.mrb[0].mxu0
        %v933 = vadd.f32 0.0, %v932
        %934 = vmatprep.mubr.f32.mxu0 0.0
        %v935 = vand.u32 %v374, 4294901760
        %v936 = vsub.f32 %v374, %v935
        %v937 = vand.u32 %v936, 4294901760
        %v938 = vsub.f32 %v936, %v937
        %v939 = vand.u32 %v938, 4294901760
        %940 = vmatmul.mubr.f32.gmra.mrb[0].mxu0 %v939
        %v941 = vpop.f32.mrb[0].mxu0
        %v942 = vadd.f32 0.0, %v941
        %v943 = vpop.f32.mrb[0].mxu0
        %v944 = vadd.f32 0.0, %v943
        %945 = vmatprep.mubr.f32.mxu0 0.0
        %v946 = vand.u32 %v377, 4294901760
        %v947 = vsub.f32 %v377, %v946
        %v948 = vand.u32 %v947, 4294901760
        %v949 = vsub.f32 %v947, %v948
        %v950 = vand.u32 %v949, 4294901760
        %951 = vmatmul.mubr.f32.gmra.mrb[0].mxu0 %v950
        %v952 = vpop.f32.mrb[0].mxu0
        %v953 = vadd.f32 0.0, %v952
        %v954 = vpop.f32.mrb[0].mxu0
        %v955 = vadd.f32 0.0, %v954
        %956 = vmatprep.mubr.f32.mxu0 0.0
        %v957 = vand.u32 %v380, 4294901760
        %v958 = vsub.f32 %v380, %v957
        %v959 = vand.u32 %v958, 4294901760
        %v960 = vsub.f32 %v958, %v959
        %v961 = vand.u32 %v960, 4294901760
        %962 = vmatmul.mubr.f32.gmra.mrb[0].mxu0 %v961
        %v963 = vpop.f32.mrb[0].mxu0
        %v964 = vadd.f32 0.0, %v963
        %v965 = vpop.f32.mrb[0].mxu0
        %v966 = vadd.f32 0.0, %v965
        %967 = vmatprep.mubr.f32.mxu0 0.0
        %v968 = vand.u32 %v383, 4294901760
        %v969 = vsub.f32 %v383, %v968
        %v970 = vand.u32 %v969, 4294901760
        %v971 = vsub.f32 %v969, %v970
        %v972 = vand.u32 %v971, 4294901760
        %973 = vmatmul.mubr.f32.gmra.mrb[0].mxu0 %v972
        %v974 = vpop.f32.mrb[0].mxu0
        %v975 = vadd.f32 0.0, %v974
        %v976 = vpop.f32.mrb[0].mxu0
        %v977 = vadd.f32 0.0, %v976
        %978 = vmatprep.mubr.f32.mxu0 0.0
        %v979 = vand.u32 %v386, 4294901760
        %v980 = vsub.f32 %v386, %v979
        %v981 = vand.u32 %v980, 4294901760
        %v982 = vsub.f32 %v980, %v981
        %v983 = vand.u32 %v982, 4294901760
        %984 = vmatmul.mubr.f32.gmra.mrb[0].mxu0 %v983
        %v985 = vpop.f32.mrb[0].mxu0
        %v986 = vadd.f32 0.0, %v985
        %v987 = vpop.f32.mrb[0].mxu0
        %v988 = vadd.f32 0.0, %v987
        %989 = vdwg.mxu0
        %v990 = vand.u32 %v393, 4294901760
        %v991 = vsub.f32 %v393, %v990
        %v992 = vand.u32 %v991, 4294901760
        %v993 = vsub.f32 %v991, %v992
        %v994 = vand.u32 %v993, 4294901760
        %995 = vmatprep.subr.mxu0 %v994
        %v996 = vand.u32 %v390, 4294901760
        %v997 = vsub.f32 %v390, %v996
        %v998 = vand.u32 %v997, 4294901760
        %v999 = vsub.f32 %v997, %v998
        %v1000 = vand.u32 %v999, 4294901760
        %1001 = vmatpush1.msra.mxu0 %v1000
        %1002 = vmatprep.subr.mxu0 0.0
        %1003 = vmatpush1.msra.mxu0 0.0
        %1004 = vmatprep.subr.mxu0 0.0
        %1005 = vmatpush1.msra.mxu0 0.0
        %1006 = vmatprep.subr.mxu0 0.0
        %1007 = vmatpush1.msra.mxu0 0.0
        %1008 = vmatprep.subr.mxu0 0.0
        %1009 = vmatpush1.msra.mxu0 0.0
        %1010 = vmatprep.subr.mxu0 0.0
        %1011 = vmatpush1.msra.mxu0 0.0
        %1012 = vmatprep.subr.mxu0 0.0
        %1013 = vmatpush1.msra.mxu0 0.0
        %1014 = vmatprep.subr.mxu0 0.0
        %1015 = vmatpush1.msra.mxu0 0.0
        %1016 = vmatprep.subr.mxu0 0.0
        %1017 = vmatpush1.msra.mxu0 0.0
        %1018 = vmatprep.subr.mxu0 0.0
        %1019 = vmatpush1.msra.mxu0 0.0
        %1020 = vmatprep.subr.mxu0 0.0
        %1021 = vmatpush1.msra.mxu0 0.0
        %1022 = vmatprep.subr.mxu0 0.0
        %1023 = vmatpush1.msra.mxu0 0.0
        %1024 = vmatprep.subr.mxu0 0.0
        %1025 = vmatpush1.msra.mxu0 0.0
        %1026 = vmatprep.subr.mxu0 0.0
        %1027 = vmatpush1.msra.mxu0 0.0
        %1028 = vmatprep.subr.mxu0 0.0
        %1029 = vmatpush1.msra.mxu0 0.0
        %1030 = vmatprep.subr.mxu0 0.0
        %1031 = vmatpush1.msra.mxu0 0.0
        %1032 = vmatprep.subr.mxu0 0.0
        %1033 = vmatpush1.msra.mxu0 0.0
        %1034 = vmatprep.subr.mxu0 0.0
        %1035 = vmatpush1.msra.mxu0 0.0
        %1036 = vmatprep.subr.mxu0 0.0
        %1037 = vmatpush1.msra.mxu0 0.0
        %1038 = vmatprep.subr.mxu0 0.0
        %1039 = vmatpush1.msra.mxu0 0.0
        %1040 = vmatprep.subr.mxu0 0.0
        %1041 = vmatpush1.msra.mxu0 0.0
        %1042 = vmatprep.subr.mxu0 0.0
        %1043 = vmatpush1.msra.mxu0 0.0
        %1044 = vmatprep.subr.mxu0 0.0
        %1045 = vmatpush1.msra.mxu0 0.0
        %1046 = vmatprep.subr.mxu0 0.0
        %1047 = vmatpush1.msra.mxu0 0.0
        %1048 = vmatprep.subr.mxu0 0.0
        %1049 = vmatpush1.msra.mxu0 0.0
        %1050 = vmatprep.subr.mxu0 0.0
        %1051 = vmatpush1.msra.mxu0 0.0
        %1052 = vmatprep.subr.mxu0 0.0
        %1053 = vmatpush1.msra.mxu0 0.0
        %1054 = vmatprep.subr.mxu0 0.0
        %1055 = vmatpush1.msra.mxu0 0.0
        %1056 = vmatprep.subr.mxu0 0.0
        %1057 = vmatpush1.msra.mxu0 0.0
        %1058 = vmatprep.subr.mxu0 0.0
        %1059 = vmatpush1.msra.mxu0 0.0
        %1060 = vmatprep.subr.mxu0 0.0
        %1061 = vmatpush1.msra.mxu0 0.0
        %1062 = vmatprep.subr.mxu0 0.0
        %1063 = vmatpush1.msra.mxu0 0.0
        %1064 = vmatprep.mubr.f32.mxu0 0.0
        %v1065 = vand.u32 %v245, 4294901760
        %1066 = vmatmul.mubr.f32.gmra.mrb[0].mxu0 %v1065
        %v1067 = vpop.f32.mrb[0].mxu0
        %v1068 = vadd.f32 %v469, %v1067
        %v1069 = vpop.f32.mrb[0].mxu0
        %v1070 = vadd.f32 %v471, %v1069
        %1071 = vmatprep.mubr.f32.mxu0 0.0
        %v1072 = vand.u32 %v248, 4294901760
        %1073 = vmatmul.mubr.f32.gmra.mrb[0].mxu0 %v1072
        %v1074 = vpop.f32.mrb[0].mxu0
        %v1075 = vadd.f32 %v480, %v1074
        %v1076 = vpop.f32.mrb[0].mxu0
        %v1077 = vadd.f32 %v482, %v1076
        %1078 = vmatprep.mubr.f32.mxu0 0.0
        %v1079 = vand.u32 %v251, 4294901760
        %1080 = vmatmul.mubr.f32.gmra.mrb[0].mxu0 %v1079
        %v1081 = vpop.f32.mrb[0].mxu0
        %v1082 = vadd.f32 %v491, %v1081
        %v1083 = vpop.f32.mrb[0].mxu0
        %v1084 = vadd.f32 %v493, %v1083
        %1085 = vmatprep.mubr.f32.mxu0 0.0
        %v1086 = vand.u32 %v254, 4294901760
        %1087 = vmatmul.mubr.f32.gmra.mrb[0].mxu0 %v1086
        %v1088 = vpop.f32.mrb[0].mxu0
        %v1089 = vadd.f32 %v502, %v1088
        %v1090 = vpop.f32.mrb[0].mxu0
        %v1091 = vadd.f32 %v504, %v1090
        %1092 = vmatprep.mubr.f32.mxu0 0.0
        %v1093 = vand.u32 %v257, 4294901760
        %1094 = vmatmul.mubr.f32.gmra.mrb[0].mxu0 %v1093
        %v1095 = vpop.f32.mrb[0].mxu0
        %v1096 = vadd.f32 %v513, %v1095
        %v1097 = vpop.f32.mrb[0].mxu0
        %v1098 = vadd.f32 %v515, %v1097
        %1099 = vmatprep.mubr.f32.mxu0 0.0
        %v1100 = vand.u32 %v260, 4294901760
        %1101 = vmatmul.mubr.f32.gmra.mrb[0].mxu0 %v1100
        %v1102 = vpop.f32.mrb[0].mxu0
        %v1103 = vadd.f32 %v524, %v1102
        %v1104 = vpop.f32.mrb[0].mxu0
        %v1105 = vadd.f32 %v526, %v1104
        %1106 = vmatprep.mubr.f32.mxu0 0.0
        %v1107 = vand.u32 %v263, 4294901760
        %1108 = vmatmul.mubr.f32.gmra.mrb[0].mxu0 %v1107
        %v1109 = vpop.f32.mrb[0].mxu0
        %v1110 = vadd.f32 %v535, %v1109
        %v1111 = vpop.f32.mrb[0].mxu0
        %v1112 = vadd.f32 %v537, %v1111
        %1113 = vmatprep.mubr.f32.mxu0 0.0
        %v1114 = vand.u32 %v266, 4294901760
        %1115 = vmatmul.mubr.f32.gmra.mrb[0].mxu0 %v1114
        %v1116 = vpop.f32.mrb[0].mxu0
        %v1117 = vadd.f32 %v546, %v1116
        %v1118 = vpop.f32.mrb[0].mxu0
        %v1119 = vadd.f32 %v548, %v1118
        %1120 = vmatprep.mubr.f32.mxu0 0.0
        %v1121 = vand.u32 %v269, 4294901760
        %1122 = vmatmul.mubr.f32.gmra.mrb[0].mxu0 %v1121
        %v1123 = vpop.f32.mrb[0].mxu0
        %v1124 = vadd.f32 %v557, %v1123
        %v1125 = vpop.f32.mrb[0].mxu0
        %v1126 = vadd.f32 %v559, %v1125
        %1127 = vmatprep.mubr.f32.mxu0 0.0
        %v1128 = vand.u32 %v272, 4294901760
        %1129 = vmatmul.mubr.f32.gmra.mrb[0].mxu0 %v1128
        %v1130 = vpop.f32.mrb[0].mxu0
        %v1131 = vadd.f32 %v568, %v1130
        %v1132 = vpop.f32.mrb[0].mxu0
        %v1133 = vadd.f32 %v570, %v1132
        %1134 = vmatprep.mubr.f32.mxu0 0.0
        %v1135 = vand.u32 %v275, 4294901760
        %1136 = vmatmul.mubr.f32.gmra.mrb[0].mxu0 %v1135
        %v1137 = vpop.f32.mrb[0].mxu0
        %v1138 = vadd.f32 %v579, %v1137
        %v1139 = vpop.f32.mrb[0].mxu0
        %v1140 = vadd.f32 %v581, %v1139
        %1141 = vmatprep.mubr.f32.mxu0 0.0
        %v1142 = vand.u32 %v278, 4294901760
        %1143 = vmatmul.mubr.f32.gmra.mrb[0].mxu0 %v1142
        %v1144 = vpop.f32.mrb[0].mxu0
        %v1145 = vadd.f32 %v590, %v1144
        %v1146 = vpop.f32.mrb[0].mxu0
        %v1147 = vadd.f32 %v592, %v1146
        %1148 = vmatprep.mubr.f32.mxu0 0.0
        %v1149 = vand.u32 %v281, 4294901760
        %1150 = vmatmul.mubr.f32.gmra.mrb[0].mxu0 %v1149
        %v1151 = vpop.f32.mrb[0].mxu0
        %v1152 = vadd.f32 %v601, %v1151
        %v1153 = vpop.f32.mrb[0].mxu0
        %v1154 = vadd.f32 %v603, %v1153
        %1155 = vmatprep.mubr.f32.mxu0 0.0
        %v1156 = vand.u32 %v284, 4294901760
        %1157 = vmatmul.mubr.f32.gmra.mrb[0].mxu0 %v1156
        %v1158 = vpop.f32.mrb[0].mxu0
        %v1159 = vadd.f32 %v612, %v1158
        %v1160 = vpop.f32.mrb[0].mxu0
        %v1161 = vadd.f32 %v614, %v1160
        %1162 = vmatprep.mubr.f32.mxu0 0.0
        %v1163 = vand.u32 %v287, 4294901760
        %1164 = vmatmul.mubr.f32.gmra.mrb[0].mxu0 %v1163
        %v1165 = vpop.f32.mrb[0].mxu0
        %v1166 = vadd.f32 %v623, %v1165
        %v1167 = vpop.f32.mrb[0].mxu0
        %v1168 = vadd.f32 %v625, %v1167
        %1169 = vmatprep.mubr.f32.mxu0 0.0
        %v1170 = vand.u32 %v290, 4294901760
        %1171 = vmatmul.mubr.f32.gmra.mrb[0].mxu0 %v1170
        %v1172 = vpop.f32.mrb[0].mxu0
        %v1173 = vadd.f32 %v634, %v1172
        %v1174 = vpop.f32.mrb[0].mxu0
        %v1175 = vadd.f32 %v636, %v1174
        %1176 = vmatprep.mubr.f32.mxu0 0.0
        %v1177 = vand.u32 %v293, 4294901760
        %1178 = vmatmul.mubr.f32.gmra.mrb[0].mxu0 %v1177
        %v1179 = vpop.f32.mrb[0].mxu0
        %v1180 = vadd.f32 %v645, %v1179
        %v1181 = vpop.f32.mrb[0].mxu0
        %v1182 = vadd.f32 %v647, %v1181
        %1183 = vmatprep.mubr.f32.mxu0 0.0
        %v1184 = vand.u32 %v296, 4294901760
        %1185 = vmatmul.mubr.f32.gmra.mrb[0].mxu0 %v1184
        %v1186 = vpop.f32.mrb[0].mxu0
        %v1187 = vadd.f32 %v656, %v1186
        %v1188 = vpop.f32.mrb[0].mxu0
        %v1189 = vadd.f32 %v658, %v1188
        %1190 = vmatprep.mubr.f32.mxu0 0.0
        %v1191 = vand.u32 %v299, 4294901760
        %1192 = vmatmul.mubr.f32.gmra.mrb[0].mxu0 %v1191
        %v1193 = vpop.f32.mrb[0].mxu0
        %v1194 = vadd.f32 %v667, %v1193
        %v1195 = vpop.f32.mrb[0].mxu0
        %v1196 = vadd.f32 %v669, %v1195
        %1197 = vmatprep.mubr.f32.mxu0 0.0
        %v1198 = vand.u32 %v302, 4294901760
        %1199 = vmatmul.mubr.f32.gmra.mrb[0].mxu0 %v1198
        %v1200 = vpop.f32.mrb[0].mxu0
        %v1201 = vadd.f32 %v678, %v1200
        %v1202 = vpop.f32.mrb[0].mxu0
        %v1203 = vadd.f32 %v680, %v1202
        %1204 = vmatprep.mubr.f32.mxu0 0.0
        %v1205 = vand.u32 %v305, 4294901760
        %1206 = vmatmul.mubr.f32.gmra.mrb[0].mxu0 %v1205
        %v1207 = vpop.f32.mrb[0].mxu0
        %v1208 = vadd.f32 %v689, %v1207
        %v1209 = vpop.f32.mrb[0].mxu0
        %v1210 = vadd.f32 %v691, %v1209
        %1211 = vmatprep.mubr.f32.mxu0 0.0
        %v1212 = vand.u32 %v308, 4294901760
        %1213 = vmatmul.mubr.f32.gmra.mrb[0].mxu0 %v1212
        %v1214 = vpop.f32.mrb[0].mxu0
        %v1215 = vadd.f32 %v700, %v1214
        %v1216 = vpop.f32.mrb[0].mxu0
        %v1217 = vadd.f32 %v702, %v1216
        %1218 = vmatprep.mubr.f32.mxu0 0.0
        %v1219 = vand.u32 %v311, 4294901760
        %1220 = vmatmul.mubr.f32.gmra.mrb[0].mxu0 %v1219
        %v1221 = vpop.f32.mrb[0].mxu0
        %v1222 = vadd.f32 %v711, %v1221
        %v1223 = vpop.f32.mrb[0].mxu0
        %v1224 = vadd.f32 %v713, %v1223
        %1225 = vmatprep.mubr.f32.mxu0 0.0
        %v1226 = vand.u32 %v314, 4294901760
        %1227 = vmatmul.mubr.f32.gmra.mrb[0].mxu0 %v1226
        %v1228 = vpop.f32.mrb[0].mxu0
        %v1229 = vadd.f32 %v722, %v1228
        %v1230 = vpop.f32.mrb[0].mxu0
        %v1231 = vadd.f32 %v724, %v1230
        %1232 = vmatprep.mubr.f32.mxu0 0.0
        %v1233 = vand.u32 %v317, 4294901760
        %1234 = vmatmul.mubr.f32.gmra.mrb[0].mxu0 %v1233
        %v1235 = vpop.f32.mrb[0].mxu0
        %v1236 = vadd.f32 %v733, %v1235
        %v1237 = vpop.f32.mrb[0].mxu0
        %v1238 = vadd.f32 %v735, %v1237
        %1239 = vmatprep.mubr.f32.mxu0 0.0
        %v1240 = vand.u32 %v320, 4294901760
        %1241 = vmatmul.mubr.f32.gmra.mrb[0].mxu0 %v1240
        %v1242 = vpop.f32.mrb[0].mxu0
        %v1243 = vadd.f32 %v744, %v1242
        %v1244 = vpop.f32.mrb[0].mxu0
        %v1245 = vadd.f32 %v746, %v1244
        %1246 = vmatprep.mubr.f32.mxu0 0.0
        %v1247 = vand.u32 %v323, 4294901760
        %1248 = vmatmul.mubr.f32.gmra.mrb[0].mxu0 %v1247
        %v1249 = vpop.f32.mrb[0].mxu0
        %v1250 = vadd.f32 %v755, %v1249
        %v1251 = vpop.f32.mrb[0].mxu0
        %v1252 = vadd.f32 %v757, %v1251
        %1253 = vmatprep.mubr.f32.mxu0 0.0
        %v1254 = vand.u32 %v326, 4294901760
        %1255 = vmatmul.mubr.f32.gmra.mrb[0].mxu0 %v1254
        %v1256 = vpop.f32.mrb[0].mxu0
        %v1257 = vadd.f32 %v766, %v1256
        %v1258 = vpop.f32.mrb[0].mxu0
        %v1259 = vadd.f32 %v768, %v1258
        %1260 = vmatprep.mubr.f32.mxu0 0.0
        %v1261 = vand.u32 %v329, 4294901760
        %1262 = vmatmul.mubr.f32.gmra.mrb[0].mxu0 %v1261
        %v1263 = vpop.f32.mrb[0].mxu0
        %v1264 = vadd.f32 %v777, %v1263
        %v1265 = vpop.f32.mrb[0].mxu0
        %v1266 = vadd.f32 %v779, %v1265
        %1267 = vmatprep.mubr.f32.mxu0 0.0
        %v1268 = vand.u32 %v332, 4294901760
        %1269 = vmatmul.mubr.f32.gmra.mrb[0].mxu0 %v1268
        %v1270 = vpop.f32.mrb[0].mxu0
        %v1271 = vadd.f32 %v788, %v1270
        %v1272 = vpop.f32.mrb[0].mxu0
        %v1273 = vadd.f32 %v790, %v1272
        %1274 = vmatprep.mubr.f32.mxu0 0.0
        %v1275 = vand.u32 %v335, 4294901760
        %1276 = vmatmul.mubr.f32.gmra.mrb[0].mxu0 %v1275
        %v1277 = vpop.f32.mrb[0].mxu0
        %v1278 = vadd.f32 %v799, %v1277
        %v1279 = vpop.f32.mrb[0].mxu0
        %v1280 = vadd.f32 %v801, %v1279
        %1281 = vmatprep.mubr.f32.mxu0 0.0
        %v1282 = vand.u32 %v338, 4294901760
        %1283 = vmatmul.mubr.f32.gmra.mrb[0].mxu0 %v1282
        %v1284 = vpop.f32.mrb[0].mxu0
        %v1285 = vadd.f32 %v810, %v1284
        %v1286 = vpop.f32.mrb[0].mxu0
        %v1287 = vadd.f32 %v812, %v1286
        %1288 = vmatprep.mubr.f32.mxu0 0.0
        %v1289 = vand.u32 %v341, 4294901760
        %1290 = vmatmul.mubr.f32.gmra.mrb[0].mxu0 %v1289
        %v1291 = vpop.f32.mrb[0].mxu0
        %v1292 = vadd.f32 %v821, %v1291
        %v1293 = vpop.f32.mrb[0].mxu0
        %v1294 = vadd.f32 %v823, %v1293
        %1295 = vmatprep.mubr.f32.mxu0 0.0
        %v1296 = vand.u32 %v344, 4294901760
        %1297 = vmatmul.mubr.f32.gmra.mrb[0].mxu0 %v1296
        %v1298 = vpop.f32.mrb[0].mxu0
        %v1299 = vadd.f32 %v832, %v1298
        %v1300 = vpop.f32.mrb[0].mxu0
        %v1301 = vadd.f32 %v834, %v1300
        %1302 = vmatprep.mubr.f32.mxu0 0.0
        %v1303 = vand.u32 %v347, 4294901760
        %1304 = vmatmul.mubr.f32.gmra.mrb[0].mxu0 %v1303
        %v1305 = vpop.f32.mrb[0].mxu0
        %v1306 = vadd.f32 %v843, %v1305
        %v1307 = vpop.f32.mrb[0].mxu0
        %v1308 = vadd.f32 %v845, %v1307
        %1309 = vmatprep.mubr.f32.mxu0 0.0
        %v1310 = vand.u32 %v350, 4294901760
        %1311 = vmatmul.mubr.f32.gmra.mrb[0].mxu0 %v1310
        %v1312 = vpop.f32.mrb[0].mxu0
        %v1313 = vadd.f32 %v854, %v1312
        %v1314 = vpop.f32.mrb[0].mxu0
        %v1315 = vadd.f32 %v856, %v1314
        %1316 = vmatprep.mubr.f32.mxu0 0.0
        %v1317 = vand.u32 %v353, 4294901760
        %1318 = vmatmul.mubr.f32.gmra.mrb[0].mxu0 %v1317
        %v1319 = vpop.f32.mrb[0].mxu0
        %v1320 = vadd.f32 %v865, %v1319
        %v1321 = vpop.f32.mrb[0].mxu0
        %v1322 = vadd.f32 %v867, %v1321
        %1323 = vmatprep.mubr.f32.mxu0 0.0
        %v1324 = vand.u32 %v356, 4294901760
        %1325 = vmatmul.mubr.f32.gmra.mrb[0].mxu0 %v1324
        %v1326 = vpop.f32.mrb[0].mxu0
        %v1327 = vadd.f32 %v876, %v1326
        %v1328 = vpop.f32.mrb[0].mxu0
        %v1329 = vadd.f32 %v878, %v1328
        %1330 = vmatprep.mubr.f32.mxu0 0.0
        %v1331 = vand.u32 %v359, 4294901760
        %1332 = vmatmul.mubr.f32.gmra.mrb[0].mxu0 %v1331
        %v1333 = vpop.f32.mrb[0].mxu0
        %v1334 = vadd.f32 %v887, %v1333
        %v1335 = vpop.f32.mrb[0].mxu0
        %v1336 = vadd.f32 %v889, %v1335
        %1337 = vmatprep.mubr.f32.mxu0 0.0
        %v1338 = vand.u32 %v362, 4294901760
        %1339 = vmatmul.mubr.f32.gmra.mrb[0].mxu0 %v1338
        %v1340 = vpop.f32.mrb[0].mxu0
        %v1341 = vadd.f32 %v898, %v1340
        %v1342 = vpop.f32.mrb[0].mxu0
        %v1343 = vadd.f32 %v900, %v1342
        %1344 = vmatprep.mubr.f32.mxu0 0.0
        %v1345 = vand.u32 %v365, 4294901760
        %1346 = vmatmul.mubr.f32.gmra.mrb[0].mxu0 %v1345
        %v1347 = vpop.f32.mrb[0].mxu0
        %v1348 = vadd.f32 %v909, %v1347
        %v1349 = vpop.f32.mrb[0].mxu0
        %v1350 = vadd.f32 %v911, %v1349
        %1351 = vmatprep.mubr.f32.mxu0 0.0
        %v1352 = vand.u32 %v368, 4294901760
        %1353 = vmatmul.mubr.f32.gmra.mrb[0].mxu0 %v1352
        %v1354 = vpop.f32.mrb[0].mxu0
        %v1355 = vadd.f32 %v920, %v1354
        %v1356 = vpop.f32.mrb[0].mxu0
        %v1357 = vadd.f32 %v922, %v1356
        %1358 = vmatprep.mubr.f32.mxu0 0.0
        %v1359 = vand.u32 %v371, 4294901760
        %1360 = vmatmul.mubr.f32.gmra.mrb[0].mxu0 %v1359
        %v1361 = vpop.f32.mrb[0].mxu0
        %v1362 = vadd.f32 %v931, %v1361
        %v1363 = vpop.f32.mrb[0].mxu0
        %v1364 = vadd.f32 %v933, %v1363
        %1365 = vmatprep.mubr.f32.mxu0 0.0
        %v1366 = vand.u32 %v374, 4294901760
        %1367 = vmatmul.mubr.f32.gmra.mrb[0].mxu0 %v1366
        %v1368 = vpop.f32.mrb[0].mxu0
        %v1369 = vadd.f32 %v942, %v1368
        %v1370 = vpop.f32.mrb[0].mxu0
        %v1371 = vadd.f32 %v944, %v1370
        %1372 = vmatprep.mubr.f32.mxu0 0.0
        %v1373 = vand.u32 %v377, 4294901760
        %1374 = vmatmul.mubr.f32.gmra.mrb[0].mxu0 %v1373
        %v1375 = vpop.f32.mrb[0].mxu0
        %v1376 = vadd.f32 %v953, %v1375
        %v1377 = vpop.f32.mrb[0].mxu0
        %v1378 = vadd.f32 %v955, %v1377
        %1379 = vmatprep.mubr.f32.mxu0 0.0
        %v1380 = vand.u32 %v380, 4294901760
        %1381 = vmatmul.mubr.f32.gmra.mrb[0].mxu0 %v1380
        %v1382 = vpop.f32.mrb[0].mxu0
        %v1383 = vadd.f32 %v964, %v1382
        %v1384 = vpop.f32.mrb[0].mxu0
        %v1385 = vadd.f32 %v966, %v1384
        %1386 = vmatprep.mubr.f32.mxu0 0.0
        %v1387 = vand.u32 %v383, 4294901760
        %1388 = vmatmul.mubr.f32.gmra.mrb[0].mxu0 %v1387
        %v1389 = vpop.f32.mrb[0].mxu0
        %v1390 = vadd.f32 %v975, %v1389
        %v1391 = vpop.f32.mrb[0].mxu0
        %v1392 = vadd.f32 %v977, %v1391
        %1393 = vmatprep.mubr.f32.mxu0 0.0
        %v1394 = vand.u32 %v386, 4294901760
        %1395 = vmatmul.mubr.f32.gmra.mrb[0].mxu0 %v1394
        %v1396 = vpop.f32.mrb[0].mxu0
        %v1397 = vadd.f32 %v986, %v1396
        %v1398 = vpop.f32.mrb[0].mxu0
        %v1399 = vadd.f32 %v988, %v1398
        %1400 = vdwg.mxu0
        %v1401 = vand.u32 %v393, 4294901760
        %v1402 = vsub.f32 %v393, %v1401
        %1403 = vmatprep.subr.mxu0 %v1402
        %v1404 = vand.u32 %v390, 4294901760
        %v1405 = vsub.f32 %v390, %v1404
        %1406 = vmatpush1.msra.mxu0 %v1405
        %1407 = vmatprep.subr.mxu0 0.0
        %1408 = vmatpush1.msra.mxu0 0.0
        %1409 = vmatprep.subr.mxu0 0.0
        %1410 = vmatpush1.msra.mxu0 0.0
        %1411 = vmatprep.subr.mxu0 0.0
        %1412 = vmatpush1.msra.mxu0 0.0
        %1413 = vmatprep.subr.mxu0 0.0
        %1414 = vmatpush1.msra.mxu0 0.0
        %1415 = vmatprep.subr.mxu0 0.0
        %1416 = vmatpush1.msra.mxu0 0.0
        %1417 = vmatprep.subr.mxu0 0.0
        %1418 = vmatpush1.msra.mxu0 0.0
        %1419 = vmatprep.subr.mxu0 0.0
        %1420 = vmatpush1.msra.mxu0 0.0
        %1421 = vmatprep.subr.mxu0 0.0
        %1422 = vmatpush1.msra.mxu0 0.0
        %1423 = vmatprep.subr.mxu0 0.0
        %1424 = vmatpush1.msra.mxu0 0.0
        %1425 = vmatprep.subr.mxu0 0.0
        %1426 = vmatpush1.msra.mxu0 0.0
        %1427 = vmatprep.subr.mxu0 0.0
        %1428 = vmatpush1.msra.mxu0 0.0
        %1429 = vmatprep.subr.mxu0 0.0
        %1430 = vmatpush1.msra.mxu0 0.0
        %1431 = vmatprep.subr.mxu0 0.0
        %1432 = vmatpush1.msra.mxu0 0.0
        %1433 = vmatprep.subr.mxu0 0.0
        %1434 = vmatpush1.msra.mxu0 0.0
        %1435 = vmatprep.subr.mxu0 0.0
        %1436 = vmatpush1.msra.mxu0 0.0
        %1437 = vmatprep.subr.mxu0 0.0
        %1438 = vmatpush1.msra.mxu0 0.0
        %1439 = vmatprep.subr.mxu0 0.0
        %1440 = vmatpush1.msra.mxu0 0.0
        %1441 = vmatprep.subr.mxu0 0.0
        %1442 = vmatpush1.msra.mxu0 0.0
        %1443 = vmatprep.subr.mxu0 0.0
        %1444 = vmatpush1.msra.mxu0 0.0
        %1445 = vmatprep.subr.mxu0 0.0
        %1446 = vmatpush1.msra.mxu0 0.0
        %1447 = vmatprep.subr.mxu0 0.0
        %1448 = vmatpush1.msra.mxu0 0.0
        %1449 = vmatprep.subr.mxu0 0.0
        %1450 = vmatpush1.msra.mxu0 0.0
        %1451 = vmatprep.subr.mxu0 0.0
        %1452 = vmatpush1.msra.mxu0 0.0
        %1453 = vmatprep.subr.mxu0 0.0
        %1454 = vmatpush1.msra.mxu0 0.0
        %1455 = vmatprep.subr.mxu0 0.0
        %1456 = vmatpush1.msra.mxu0 0.0
        %1457 = vmatprep.subr.mxu0 0.0
        %1458 = vmatpush1.msra.mxu0 0.0
        %1459 = vmatprep.subr.mxu0 0.0
        %1460 = vmatpush1.msra.mxu0 0.0
        %1461 = vmatprep.subr.mxu0 0.0
        %1462 = vmatpush1.msra.mxu0 0.0
        %1463 = vmatprep.subr.mxu0 0.0
        %1464 = vmatpush1.msra.mxu0 0.0
        %1465 = vmatprep.subr.mxu0 0.0
        %1466 = vmatpush1.msra.mxu0 0.0
        %1467 = vmatprep.subr.mxu0 0.0
        %1468 = vmatpush1.msra.mxu0 0.0
        %1469 = vmatprep.mubr.f32.mxu0 0.0
        %v1470 = vand.u32 %v245, 4294901760
        %v1471 = vsub.f32 %v245, %v1470
        %1472 = vmatmul.mubr.f32.gmra.mrb[0].mxu0 %v1471
        %v1473 = vpop.f32.mrb[0].mxu0
        %v1474 = vadd.f32 %v1068, %v1473
        %v1475 = vpop.f32.mrb[0].mxu0
        %v1476 = vadd.f32 %v1070, %v1475
        %1477 = vmatprep.mubr.f32.mxu0 0.0
        %v1478 = vand.u32 %v248, 4294901760
        %v1479 = vsub.f32 %v248, %v1478
        %1480 = vmatmul.mubr.f32.gmra.mrb[0].mxu0 %v1479
        %v1481 = vpop.f32.mrb[0].mxu0
        %v1482 = vadd.f32 %v1075, %v1481
        %v1483 = vpop.f32.mrb[0].mxu0
        %v1484 = vadd.f32 %v1077, %v1483
        %1485 = vmatprep.mubr.f32.mxu0 0.0
        %v1486 = vand.u32 %v251, 4294901760
        %v1487 = vsub.f32 %v251, %v1486
        %1488 = vmatmul.mubr.f32.gmra.mrb[0].mxu0 %v1487
        %v1489 = vpop.f32.mrb[0].mxu0
        %v1490 = vadd.f32 %v1082, %v1489
        %v1491 = vpop.f32.mrb[0].mxu0
        %v1492 = vadd.f32 %v1084, %v1491
        %1493 = vmatprep.mubr.f32.mxu0 0.0
        %v1494 = vand.u32 %v254, 4294901760
        %v1495 = vsub.f32 %v254, %v1494
        %1496 = vmatmul.mubr.f32.gmra.mrb[0].mxu0 %v1495
        %v1497 = vpop.f32.mrb[0].mxu0
        %v1498 = vadd.f32 %v1089, %v1497
        %v1499 = vpop.f32.mrb[0].mxu0
        %v1500 = vadd.f32 %v1091, %v1499
        %1501 = vmatprep.mubr.f32.mxu0 0.0
        %v1502 = vand.u32 %v257, 4294901760
        %v1503 = vsub.f32 %v257, %v1502
        %1504 = vmatmul.mubr.f32.gmra.mrb[0].mxu0 %v1503
        %v1505 = vpop.f32.mrb[0].mxu0
        %v1506 = vadd.f32 %v1096, %v1505
        %v1507 = vpop.f32.mrb[0].mxu0
        %v1508 = vadd.f32 %v1098, %v1507
        %1509 = vmatprep.mubr.f32.mxu0 0.0
        %v1510 = vand.u32 %v260, 4294901760
        %v1511 = vsub.f32 %v260, %v1510
        %1512 = vmatmul.mubr.f32.gmra.mrb[0].mxu0 %v1511
        %v1513 = vpop.f32.mrb[0].mxu0
        %v1514 = vadd.f32 %v1103, %v1513
        %v1515 = vpop.f32.mrb[0].mxu0
        %v1516 = vadd.f32 %v1105, %v1515
        %1517 = vmatprep.mubr.f32.mxu0 0.0
        %v1518 = vand.u32 %v263, 4294901760
        %v1519 = vsub.f32 %v263, %v1518
        %1520 = vmatmul.mubr.f32.gmra.mrb[0].mxu0 %v1519
        %v1521 = vpop.f32.mrb[0].mxu0
        %v1522 = vadd.f32 %v1110, %v1521
        %v1523 = vpop.f32.mrb[0].mxu0
        %v1524 = vadd.f32 %v1112, %v1523
        %1525 = vmatprep.mubr.f32.mxu0 0.0
        %v1526 = vand.u32 %v266, 4294901760
        %v1527 = vsub.f32 %v266, %v1526
        %1528 = vmatmul.mubr.f32.gmra.mrb[0].mxu0 %v1527
        %v1529 = vpop.f32.mrb[0].mxu0
        %v1530 = vadd.f32 %v1117, %v1529
        %v1531 = vpop.f32.mrb[0].mxu0
        %v1532 = vadd.f32 %v1119, %v1531
        %1533 = vmatprep.mubr.f32.mxu0 0.0
        %v1534 = vand.u32 %v269, 4294901760
        %v1535 = vsub.f32 %v269, %v1534
        %1536 = vmatmul.mubr.f32.gmra.mrb[0].mxu0 %v1535
        %v1537 = vpop.f32.mrb[0].mxu0
        %v1538 = vadd.f32 %v1124, %v1537
        %v1539 = vpop.f32.mrb[0].mxu0
        %v1540 = vadd.f32 %v1126, %v1539
        %1541 = vmatprep.mubr.f32.mxu0 0.0
        %v1542 = vand.u32 %v272, 4294901760
        %v1543 = vsub.f32 %v272, %v1542
        %1544 = vmatmul.mubr.f32.gmra.mrb[0].mxu0 %v1543
        %v1545 = vpop.f32.mrb[0].mxu0
        %v1546 = vadd.f32 %v1131, %v1545
        %v1547 = vpop.f32.mrb[0].mxu0
        %v1548 = vadd.f32 %v1133, %v1547
        %1549 = vmatprep.mubr.f32.mxu0 0.0
        %v1550 = vand.u32 %v275, 4294901760
        %v1551 = vsub.f32 %v275, %v1550
        %1552 = vmatmul.mubr.f32.gmra.mrb[0].mxu0 %v1551
        %v1553 = vpop.f32.mrb[0].mxu0
        %v1554 = vadd.f32 %v1138, %v1553
        %v1555 = vpop.f32.mrb[0].mxu0
        %v1556 = vadd.f32 %v1140, %v1555
        %1557 = vmatprep.mubr.f32.mxu0 0.0
        %v1558 = vand.u32 %v278, 4294901760
        %v1559 = vsub.f32 %v278, %v1558
        %1560 = vmatmul.mubr.f32.gmra.mrb[0].mxu0 %v1559
        %v1561 = vpop.f32.mrb[0].mxu0
        %v1562 = vadd.f32 %v1145, %v1561
        %v1563 = vpop.f32.mrb[0].mxu0
        %v1564 = vadd.f32 %v1147, %v1563
        %1565 = vmatprep.mubr.f32.mxu0 0.0
        %v1566 = vand.u32 %v281, 4294901760
        %v1567 = vsub.f32 %v281, %v1566
        %1568 = vmatmul.mubr.f32.gmra.mrb[0].mxu0 %v1567
        %v1569 = vpop.f32.mrb[0].mxu0
        %v1570 = vadd.f32 %v1152, %v1569
        %v1571 = vpop.f32.mrb[0].mxu0
        %v1572 = vadd.f32 %v1154, %v1571
        %1573 = vmatprep.mubr.f32.mxu0 0.0
        %v1574 = vand.u32 %v284, 4294901760
        %v1575 = vsub.f32 %v284, %v1574
        %1576 = vmatmul.mubr.f32.gmra.mrb[0].mxu0 %v1575
        %v1577 = vpop.f32.mrb[0].mxu0
        %v1578 = vadd.f32 %v1159, %v1577
        %v1579 = vpop.f32.mrb[0].mxu0
        %v1580 = vadd.f32 %v1161, %v1579
        %1581 = vmatprep.mubr.f32.mxu0 0.0
        %v1582 = vand.u32 %v287, 4294901760
        %v1583 = vsub.f32 %v287, %v1582
        %1584 = vmatmul.mubr.f32.gmra.mrb[0].mxu0 %v1583
        %v1585 = vpop.f32.mrb[0].mxu0
        %v1586 = vadd.f32 %v1166, %v1585
        %v1587 = vpop.f32.mrb[0].mxu0
        %v1588 = vadd.f32 %v1168, %v1587
        %1589 = vmatprep.mubr.f32.mxu0 0.0
        %v1590 = vand.u32 %v290, 4294901760
        %v1591 = vsub.f32 %v290, %v1590
        %1592 = vmatmul.mubr.f32.gmra.mrb[0].mxu0 %v1591
        %v1593 = vpop.f32.mrb[0].mxu0
        %v1594 = vadd.f32 %v1173, %v1593
        %v1595 = vpop.f32.mrb[0].mxu0
        %v1596 = vadd.f32 %v1175, %v1595
        %1597 = vmatprep.mubr.f32.mxu0 0.0
        %v1598 = vand.u32 %v293, 4294901760
        %v1599 = vsub.f32 %v293, %v1598
        %1600 = vmatmul.mubr.f32.gmra.mrb[0].mxu0 %v1599
        %v1601 = vpop.f32.mrb[0].mxu0
        %v1602 = vadd.f32 %v1180, %v1601
        %v1603 = vpop.f32.mrb[0].mxu0
        %v1604 = vadd.f32 %v1182, %v1603
        %1605 = vmatprep.mubr.f32.mxu0 0.0
        %v1606 = vand.u32 %v296, 4294901760
        %v1607 = vsub.f32 %v296, %v1606
        %1608 = vmatmul.mubr.f32.gmra.mrb[0].mxu0 %v1607
        %v1609 = vpop.f32.mrb[0].mxu0
        %v1610 = vadd.f32 %v1187, %v1609
        %v1611 = vpop.f32.mrb[0].mxu0
        %v1612 = vadd.f32 %v1189, %v1611
        %1613 = vmatprep.mubr.f32.mxu0 0.0
        %v1614 = vand.u32 %v299, 4294901760
        %v1615 = vsub.f32 %v299, %v1614
        %1616 = vmatmul.mubr.f32.gmra.mrb[0].mxu0 %v1615
        %v1617 = vpop.f32.mrb[0].mxu0
        %v1618 = vadd.f32 %v1194, %v1617
        %v1619 = vpop.f32.mrb[0].mxu0
        %v1620 = vadd.f32 %v1196, %v1619
        %1621 = vmatprep.mubr.f32.mxu0 0.0
        %v1622 = vand.u32 %v302, 4294901760
        %v1623 = vsub.f32 %v302, %v1622
        %1624 = vmatmul.mubr.f32.gmra.mrb[0].mxu0 %v1623
        %v1625 = vpop.f32.mrb[0].mxu0
        %v1626 = vadd.f32 %v1201, %v1625
        %v1627 = vpop.f32.mrb[0].mxu0
        %v1628 = vadd.f32 %v1203, %v1627
        %1629 = vmatprep.mubr.f32.mxu0 0.0
        %v1630 = vand.u32 %v305, 4294901760
        %v1631 = vsub.f32 %v305, %v1630
        %1632 = vmatmul.mubr.f32.gmra.mrb[0].mxu0 %v1631
        %v1633 = vpop.f32.mrb[0].mxu0
        %v1634 = vadd.f32 %v1208, %v1633
        %v1635 = vpop.f32.mrb[0].mxu0
        %v1636 = vadd.f32 %v1210, %v1635
        %1637 = vmatprep.mubr.f32.mxu0 0.0
        %v1638 = vand.u32 %v308, 4294901760
        %v1639 = vsub.f32 %v308, %v1638
        %1640 = vmatmul.mubr.f32.gmra.mrb[0].mxu0 %v1639
        %v1641 = vpop.f32.mrb[0].mxu0
        %v1642 = vadd.f32 %v1215, %v1641
        %v1643 = vpop.f32.mrb[0].mxu0
        %v1644 = vadd.f32 %v1217, %v1643
        %1645 = vmatprep.mubr.f32.mxu0 0.0
        %v1646 = vand.u32 %v311, 4294901760
        %v1647 = vsub.f32 %v311, %v1646
        %1648 = vmatmul.mubr.f32.gmra.mrb[0].mxu0 %v1647
        %v1649 = vpop.f32.mrb[0].mxu0
        %v1650 = vadd.f32 %v1222, %v1649
        %v1651 = vpop.f32.mrb[0].mxu0
        %v1652 = vadd.f32 %v1224, %v1651
        %1653 = vmatprep.mubr.f32.mxu0 0.0
        %v1654 = vand.u32 %v314, 4294901760
        %v1655 = vsub.f32 %v314, %v1654
        %1656 = vmatmul.mubr.f32.gmra.mrb[0].mxu0 %v1655
        %v1657 = vpop.f32.mrb[0].mxu0
        %v1658 = vadd.f32 %v1229, %v1657
        %v1659 = vpop.f32.mrb[0].mxu0
        %v1660 = vadd.f32 %v1231, %v1659
        %1661 = vmatprep.mubr.f32.mxu0 0.0
        %v1662 = vand.u32 %v317, 4294901760
        %v1663 = vsub.f32 %v317, %v1662
        %1664 = vmatmul.mubr.f32.gmra.mrb[0].mxu0 %v1663
        %v1665 = vpop.f32.mrb[0].mxu0
        %v1666 = vadd.f32 %v1236, %v1665
        %v1667 = vpop.f32.mrb[0].mxu0
        %v1668 = vadd.f32 %v1238, %v1667
        %1669 = vmatprep.mubr.f32.mxu0 0.0
        %v1670 = vand.u32 %v320, 4294901760
        %v1671 = vsub.f32 %v320, %v1670
        %1672 = vmatmul.mubr.f32.gmra.mrb[0].mxu0 %v1671
        %v1673 = vpop.f32.mrb[0].mxu0
        %v1674 = vadd.f32 %v1243, %v1673
        %v1675 = vpop.f32.mrb[0].mxu0
        %v1676 = vadd.f32 %v1245, %v1675
        %1677 = vmatprep.mubr.f32.mxu0 0.0
        %v1678 = vand.u32 %v323, 4294901760
        %v1679 = vsub.f32 %v323, %v1678
        %1680 = vmatmul.mubr.f32.gmra.mrb[0].mxu0 %v1679
        %v1681 = vpop.f32.mrb[0].mxu0
        %v1682 = vadd.f32 %v1250, %v1681
        %v1683 = vpop.f32.mrb[0].mxu0
        %v1684 = vadd.f32 %v1252, %v1683
        %1685 = vmatprep.mubr.f32.mxu0 0.0
        %v1686 = vand.u32 %v326, 4294901760
        %v1687 = vsub.f32 %v326, %v1686
        %1688 = vmatmul.mubr.f32.gmra.mrb[0].mxu0 %v1687
        %v1689 = vpop.f32.mrb[0].mxu0
        %v1690 = vadd.f32 %v1257, %v1689
        %v1691 = vpop.f32.mrb[0].mxu0
        %v1692 = vadd.f32 %v1259, %v1691
        %1693 = vmatprep.mubr.f32.mxu0 0.0
        %v1694 = vand.u32 %v329, 4294901760
        %v1695 = vsub.f32 %v329, %v1694
        %1696 = vmatmul.mubr.f32.gmra.mrb[0].mxu0 %v1695
        %v1697 = vpop.f32.mrb[0].mxu0
        %v1698 = vadd.f32 %v1264, %v1697
        %v1699 = vpop.f32.mrb[0].mxu0
        %v1700 = vadd.f32 %v1266, %v1699
        %1701 = vmatprep.mubr.f32.mxu0 0.0
        %v1702 = vand.u32 %v332, 4294901760
        %v1703 = vsub.f32 %v332, %v1702
        %1704 = vmatmul.mubr.f32.gmra.mrb[0].mxu0 %v1703
        %v1705 = vpop.f32.mrb[0].mxu0
        %v1706 = vadd.f32 %v1271, %v1705
        %v1707 = vpop.f32.mrb[0].mxu0
        %v1708 = vadd.f32 %v1273, %v1707
        %1709 = vmatprep.mubr.f32.mxu0 0.0
        %v1710 = vand.u32 %v335, 4294901760
        %v1711 = vsub.f32 %v335, %v1710
        %1712 = vmatmul.mubr.f32.gmra.mrb[0].mxu0 %v1711
        %v1713 = vpop.f32.mrb[0].mxu0
        %v1714 = vadd.f32 %v1278, %v1713
        %v1715 = vpop.f32.mrb[0].mxu0
        %v1716 = vadd.f32 %v1280, %v1715
        %1717 = vmatprep.mubr.f32.mxu0 0.0
        %v1718 = vand.u32 %v338, 4294901760
        %v1719 = vsub.f32 %v338, %v1718
        %1720 = vmatmul.mubr.f32.gmra.mrb[0].mxu0 %v1719
        %v1721 = vpop.f32.mrb[0].mxu0
        %v1722 = vadd.f32 %v1285, %v1721
        %v1723 = vpop.f32.mrb[0].mxu0
        %v1724 = vadd.f32 %v1287, %v1723
        %1725 = vmatprep.mubr.f32.mxu0 0.0
        %v1726 = vand.u32 %v341, 4294901760
        %v1727 = vsub.f32 %v341, %v1726
        %1728 = vmatmul.mubr.f32.gmra.mrb[0].mxu0 %v1727
        %v1729 = vpop.f32.mrb[0].mxu0
        %v1730 = vadd.f32 %v1292, %v1729
        %v1731 = vpop.f32.mrb[0].mxu0
        %v1732 = vadd.f32 %v1294, %v1731
        %1733 = vmatprep.mubr.f32.mxu0 0.0
        %v1734 = vand.u32 %v344, 4294901760
        %v1735 = vsub.f32 %v344, %v1734
        %1736 = vmatmul.mubr.f32.gmra.mrb[0].mxu0 %v1735
        %v1737 = vpop.f32.mrb[0].mxu0
        %v1738 = vadd.f32 %v1299, %v1737
        %v1739 = vpop.f32.mrb[0].mxu0
        %v1740 = vadd.f32 %v1301, %v1739
        %1741 = vmatprep.mubr.f32.mxu0 0.0
        %v1742 = vand.u32 %v347, 4294901760
        %v1743 = vsub.f32 %v347, %v1742
        %1744 = vmatmul.mubr.f32.gmra.mrb[0].mxu0 %v1743
        %v1745 = vpop.f32.mrb[0].mxu0
        %v1746 = vadd.f32 %v1306, %v1745
        %v1747 = vpop.f32.mrb[0].mxu0
        %v1748 = vadd.f32 %v1308, %v1747
        %1749 = vmatprep.mubr.f32.mxu0 0.0
        %v1750 = vand.u32 %v350, 4294901760
        %v1751 = vsub.f32 %v350, %v1750
        %1752 = vmatmul.mubr.f32.gmra.mrb[0].mxu0 %v1751
        %v1753 = vpop.f32.mrb[0].mxu0
        %v1754 = vadd.f32 %v1313, %v1753
        %v1755 = vpop.f32.mrb[0].mxu0
        %v1756 = vadd.f32 %v1315, %v1755
        %1757 = vmatprep.mubr.f32.mxu0 0.0
        %v1758 = vand.u32 %v353, 4294901760
        %v1759 = vsub.f32 %v353, %v1758
        %1760 = vmatmul.mubr.f32.gmra.mrb[0].mxu0 %v1759
        %v1761 = vpop.f32.mrb[0].mxu0
        %v1762 = vadd.f32 %v1320, %v1761
        %v1763 = vpop.f32.mrb[0].mxu0
        %v1764 = vadd.f32 %v1322, %v1763
        %1765 = vmatprep.mubr.f32.mxu0 0.0
        %v1766 = vand.u32 %v356, 4294901760
        %v1767 = vsub.f32 %v356, %v1766
        %1768 = vmatmul.mubr.f32.gmra.mrb[0].mxu0 %v1767
        %v1769 = vpop.f32.mrb[0].mxu0
        %v1770 = vadd.f32 %v1327, %v1769
        %v1771 = vpop.f32.mrb[0].mxu0
        %v1772 = vadd.f32 %v1329, %v1771
        %1773 = vmatprep.mubr.f32.mxu0 0.0
        %v1774 = vand.u32 %v359, 4294901760
        %v1775 = vsub.f32 %v359, %v1774
        %1776 = vmatmul.mubr.f32.gmra.mrb[0].mxu0 %v1775
        %v1777 = vpop.f32.mrb[0].mxu0
        %v1778 = vadd.f32 %v1334, %v1777
        %v1779 = vpop.f32.mrb[0].mxu0
        %v1780 = vadd.f32 %v1336, %v1779
        %1781 = vmatprep.mubr.f32.mxu0 0.0
        %v1782 = vand.u32 %v362, 4294901760
        %v1783 = vsub.f32 %v362, %v1782
        %1784 = vmatmul.mubr.f32.gmra.mrb[0].mxu0 %v1783
        %v1785 = vpop.f32.mrb[0].mxu0
        %v1786 = vadd.f32 %v1341, %v1785
        %v1787 = vpop.f32.mrb[0].mxu0
        %v1788 = vadd.f32 %v1343, %v1787
        %1789 = vmatprep.mubr.f32.mxu0 0.0
        %v1790 = vand.u32 %v365, 4294901760
        %v1791 = vsub.f32 %v365, %v1790
        %1792 = vmatmul.mubr.f32.gmra.mrb[0].mxu0 %v1791
        %v1793 = vpop.f32.mrb[0].mxu0
        %v1794 = vadd.f32 %v1348, %v1793
        %v1795 = vpop.f32.mrb[0].mxu0
        %v1796 = vadd.f32 %v1350, %v1795
        %1797 = vmatprep.mubr.f32.mxu0 0.0
        %v1798 = vand.u32 %v368, 4294901760
        %v1799 = vsub.f32 %v368, %v1798
        %1800 = vmatmul.mubr.f32.gmra.mrb[0].mxu0 %v1799
        %v1801 = vpop.f32.mrb[0].mxu0
        %v1802 = vadd.f32 %v1355, %v1801
        %v1803 = vpop.f32.mrb[0].mxu0
        %v1804 = vadd.f32 %v1357, %v1803
        %1805 = vmatprep.mubr.f32.mxu0 0.0
        %v1806 = vand.u32 %v371, 4294901760
        %v1807 = vsub.f32 %v371, %v1806
        %1808 = vmatmul.mubr.f32.gmra.mrb[0].mxu0 %v1807
        %v1809 = vpop.f32.mrb[0].mxu0
        %v1810 = vadd.f32 %v1362, %v1809
        %v1811 = vpop.f32.mrb[0].mxu0
        %v1812 = vadd.f32 %v1364, %v1811
        %1813 = vmatprep.mubr.f32.mxu0 0.0
        %v1814 = vand.u32 %v374, 4294901760
        %v1815 = vsub.f32 %v374, %v1814
        %1816 = vmatmul.mubr.f32.gmra.mrb[0].mxu0 %v1815
        %v1817 = vpop.f32.mrb[0].mxu0
        %v1818 = vadd.f32 %v1369, %v1817
        %v1819 = vpop.f32.mrb[0].mxu0
        %v1820 = vadd.f32 %v1371, %v1819
        %1821 = vmatprep.mubr.f32.mxu0 0.0
        %v1822 = vand.u32 %v377, 4294901760
        %v1823 = vsub.f32 %v377, %v1822
        %1824 = vmatmul.mubr.f32.gmra.mrb[0].mxu0 %v1823
        %v1825 = vpop.f32.mrb[0].mxu0
        %v1826 = vadd.f32 %v1376, %v1825
        %v1827 = vpop.f32.mrb[0].mxu0
        %v1828 = vadd.f32 %v1378, %v1827
        %1829 = vmatprep.mubr.f32.mxu0 0.0
        %v1830 = vand.u32 %v380, 4294901760
        %v1831 = vsub.f32 %v380, %v1830
        %1832 = vmatmul.mubr.f32.gmra.mrb[0].mxu0 %v1831
        %v1833 = vpop.f32.mrb[0].mxu0
        %v1834 = vadd.f32 %v1383, %v1833
        %v1835 = vpop.f32.mrb[0].mxu0
        %v1836 = vadd.f32 %v1385, %v1835
        %1837 = vmatprep.mubr.f32.mxu0 0.0
        %v1838 = vand.u32 %v383, 4294901760
        %v1839 = vsub.f32 %v383, %v1838
        %1840 = vmatmul.mubr.f32.gmra.mrb[0].mxu0 %v1839
        %v1841 = vpop.f32.mrb[0].mxu0
        %v1842 = vadd.f32 %v1390, %v1841
        %v1843 = vpop.f32.mrb[0].mxu0
        %v1844 = vadd.f32 %v1392, %v1843
        %1845 = vmatprep.mubr.f32.mxu0 0.0
        %v1846 = vand.u32 %v386, 4294901760
        %v1847 = vsub.f32 %v386, %v1846
        %1848 = vmatmul.mubr.f32.gmra.mrb[0].mxu0 %v1847
        %v1849 = vpop.f32.mrb[0].mxu0
        %v1850 = vadd.f32 %v1397, %v1849
        %v1851 = vpop.f32.mrb[0].mxu0
        %v1852 = vadd.f32 %v1399, %v1851
        %1853 = vdwg.mxu0
        %v1854 = vand.u32 %v393, 4294901760
        %1855 = vmatprep.subr.mxu0 %v1854
        %v1856 = vand.u32 %v390, 4294901760
        %1857 = vmatpush1.msra.mxu0 %v1856
        %1858 = vmatprep.subr.mxu0 0.0
        %1859 = vmatpush1.msra.mxu0 0.0
        %1860 = vmatprep.subr.mxu0 0.0
        %1861 = vmatpush1.msra.mxu0 0.0
        %1862 = vmatprep.subr.mxu0 0.0
        %1863 = vmatpush1.msra.mxu0 0.0
        %1864 = vmatprep.subr.mxu0 0.0
        %1865 = vmatpush1.msra.mxu0 0.0
        %1866 = vmatprep.subr.mxu0 0.0
        %1867 = vmatpush1.msra.mxu0 0.0
        %1868 = vmatprep.subr.mxu0 0.0
        %1869 = vmatpush1.msra.mxu0 0.0
        %1870 = vmatprep.subr.mxu0 0.0
        %1871 = vmatpush1.msra.mxu0 0.0
        %1872 = vmatprep.subr.mxu0 0.0
        %1873 = vmatpush1.msra.mxu0 0.0
        %1874 = vmatprep.subr.mxu0 0.0
        %1875 = vmatpush1.msra.mxu0 0.0
        %1876 = vmatprep.subr.mxu0 0.0
        %1877 = vmatpush1.msra.mxu0 0.0
        %1878 = vmatprep.subr.mxu0 0.0
        %1879 = vmatpush1.msra.mxu0 0.0
        %1880 = vmatprep.subr.mxu0 0.0
        %1881 = vmatpush1.msra.mxu0 0.0
        %1882 = vmatprep.subr.mxu0 0.0
        %1883 = vmatpush1.msra.mxu0 0.0
        %1884 = vmatprep.subr.mxu0 0.0
        %1885 = vmatpush1.msra.mxu0 0.0
        %1886 = vmatprep.subr.mxu0 0.0
        %1887 = vmatpush1.msra.mxu0 0.0
        %1888 = vmatprep.subr.mxu0 0.0
        %1889 = vmatpush1.msra.mxu0 0.0
        %1890 = vmatprep.subr.mxu0 0.0
        %1891 = vmatpush1.msra.mxu0 0.0
        %1892 = vmatprep.subr.mxu0 0.0
        %1893 = vmatpush1.msra.mxu0 0.0
        %1894 = vmatprep.subr.mxu0 0.0
        %1895 = vmatpush1.msra.mxu0 0.0
        %1896 = vmatprep.subr.mxu0 0.0
        %1897 = vmatpush1.msra.mxu0 0.0
        %1898 = vmatprep.subr.mxu0 0.0
        %1899 = vmatpush1.msra.mxu0 0.0
        %1900 = vmatprep.subr.mxu0 0.0
        %1901 = vmatpush1.msra.mxu0 0.0
        %1902 = vmatprep.subr.mxu0 0.0
        %1903 = vmatpush1.msra.mxu0 0.0
        %1904 = vmatprep.subr.mxu0 0.0
        %1905 = vmatpush1.msra.mxu0 0.0
        %1906 = vmatprep.subr.mxu0 0.0
        %1907 = vmatpush1.msra.mxu0 0.0
        %1908 = vmatprep.subr.mxu0 0.0
        %1909 = vmatpush1.msra.mxu0 0.0
        %1910 = vmatprep.subr.mxu0 0.0
        %1911 = vmatpush1.msra.mxu0 0.0
        %1912 = vmatprep.subr.mxu0 0.0
        %1913 = vmatpush1.msra.mxu0 0.0
        %1914 = vmatprep.subr.mxu0 0.0
        %1915 = vmatpush1.msra.mxu0 0.0
        %1916 = vmatprep.subr.mxu0 0.0
        %1917 = vmatpush1.msra.mxu0 0.0
        %1918 = vmatprep.subr.mxu0 0.0
        %1919 = vmatpush1.msra.mxu0 0.0
        %1920 = vmatprep.mubr.f32.mxu0 0.0
        %v1921 = vand.u32 %v245, 4294901760
        %v1922 = vsub.f32 %v245, %v1921
        %v1923 = vand.u32 %v1922, 4294901760
        %1924 = vmatmul.mubr.f32.gmra.mrb[0].mxu0 %v1923
        %v1925 = vpop.f32.mrb[0].mxu0
        %v1926 = vadd.f32 %v1474, %v1925
        %v1927 = vpop.f32.mrb[0].mxu0
        %v1928 = vadd.f32 %v1476, %v1927
        %1929 = vmatprep.mubr.f32.mxu0 0.0
        %v1930 = vand.u32 %v248, 4294901760
        %v1931 = vsub.f32 %v248, %v1930
        %v1932 = vand.u32 %v1931, 4294901760
        %1933 = vmatmul.mubr.f32.gmra.mrb[0].mxu0 %v1932
        %v1934 = vpop.f32.mrb[0].mxu0
        %v1935 = vadd.f32 %v1482, %v1934
        %v1936 = vpop.f32.mrb[0].mxu0
        %v1937 = vadd.f32 %v1484, %v1936
        %1938 = vmatprep.mubr.f32.mxu0 0.0
        %v1939 = vand.u32 %v251, 4294901760
        %v1940 = vsub.f32 %v251, %v1939
        %v1941 = vand.u32 %v1940, 4294901760
        %1942 = vmatmul.mubr.f32.gmra.mrb[0].mxu0 %v1941
        %v1943 = vpop.f32.mrb[0].mxu0
        %v1944 = vadd.f32 %v1490, %v1943
        %v1945 = vpop.f32.mrb[0].mxu0
        %v1946 = vadd.f32 %v1492, %v1945
        %1947 = vmatprep.mubr.f32.mxu0 0.0
        %v1948 = vand.u32 %v254, 4294901760
        %v1949 = vsub.f32 %v254, %v1948
        %v1950 = vand.u32 %v1949, 4294901760
        %1951 = vmatmul.mubr.f32.gmra.mrb[0].mxu0 %v1950
        %v1952 = vpop.f32.mrb[0].mxu0
        %v1953 = vadd.f32 %v1498, %v1952
        %v1954 = vpop.f32.mrb[0].mxu0
        %v1955 = vadd.f32 %v1500, %v1954
        %1956 = vmatprep.mubr.f32.mxu0 0.0
        %v1957 = vand.u32 %v257, 4294901760
        %v1958 = vsub.f32 %v257, %v1957
        %v1959 = vand.u32 %v1958, 4294901760
        %1960 = vmatmul.mubr.f32.gmra.mrb[0].mxu0 %v1959
        %v1961 = vpop.f32.mrb[0].mxu0
        %v1962 = vadd.f32 %v1506, %v1961
        %v1963 = vpop.f32.mrb[0].mxu0
        %v1964 = vadd.f32 %v1508, %v1963
        %1965 = vmatprep.mubr.f32.mxu0 0.0
        %v1966 = vand.u32 %v260, 4294901760
        %v1967 = vsub.f32 %v260, %v1966
        %v1968 = vand.u32 %v1967, 4294901760
        %1969 = vmatmul.mubr.f32.gmra.mrb[0].mxu0 %v1968
        %v1970 = vpop.f32.mrb[0].mxu0
        %v1971 = vadd.f32 %v1514, %v1970
        %v1972 = vpop.f32.mrb[0].mxu0
        %v1973 = vadd.f32 %v1516, %v1972
        %1974 = vmatprep.mubr.f32.mxu0 0.0
        %v1975 = vand.u32 %v263, 4294901760
        %v1976 = vsub.f32 %v263, %v1975
        %v1977 = vand.u32 %v1976, 4294901760
        %1978 = vmatmul.mubr.f32.gmra.mrb[0].mxu0 %v1977
        %v1979 = vpop.f32.mrb[0].mxu0
        %v1980 = vadd.f32 %v1522, %v1979
        %v1981 = vpop.f32.mrb[0].mxu0
        %v1982 = vadd.f32 %v1524, %v1981
        %1983 = vmatprep.mubr.f32.mxu0 0.0
        %v1984 = vand.u32 %v266, 4294901760
        %v1985 = vsub.f32 %v266, %v1984
        %v1986 = vand.u32 %v1985, 4294901760
        %1987 = vmatmul.mubr.f32.gmra.mrb[0].mxu0 %v1986
        %v1988 = vpop.f32.mrb[0].mxu0
        %v1989 = vadd.f32 %v1530, %v1988
        %v1990 = vpop.f32.mrb[0].mxu0
        %v1991 = vadd.f32 %v1532, %v1990
        %1992 = vmatprep.mubr.f32.mxu0 0.0
        %v1993 = vand.u32 %v269, 4294901760
        %v1994 = vsub.f32 %v269, %v1993
        %v1995 = vand.u32 %v1994, 4294901760
        %1996 = vmatmul.mubr.f32.gmra.mrb[0].mxu0 %v1995
        %v1997 = vpop.f32.mrb[0].mxu0
        %v1998 = vadd.f32 %v1538, %v1997
        %v1999 = vpop.f32.mrb[0].mxu0
        %v2000 = vadd.f32 %v1540, %v1999
        %2001 = vmatprep.mubr.f32.mxu0 0.0
        %v2002 = vand.u32 %v272, 4294901760
        %v2003 = vsub.f32 %v272, %v2002
        %v2004 = vand.u32 %v2003, 4294901760
        %2005 = vmatmul.mubr.f32.gmra.mrb[0].mxu0 %v2004
        %v2006 = vpop.f32.mrb[0].mxu0
        %v2007 = vadd.f32 %v1546, %v2006
        %v2008 = vpop.f32.mrb[0].mxu0
        %v2009 = vadd.f32 %v1548, %v2008
        %2010 = vmatprep.mubr.f32.mxu0 0.0
        %v2011 = vand.u32 %v275, 4294901760
        %v2012 = vsub.f32 %v275, %v2011
        %v2013 = vand.u32 %v2012, 4294901760
        %2014 = vmatmul.mubr.f32.gmra.mrb[0].mxu0 %v2013
        %v2015 = vpop.f32.mrb[0].mxu0
        %v2016 = vadd.f32 %v1554, %v2015
        %v2017 = vpop.f32.mrb[0].mxu0
        %v2018 = vadd.f32 %v1556, %v2017
        %2019 = vmatprep.mubr.f32.mxu0 0.0
        %v2020 = vand.u32 %v278, 4294901760
        %v2021 = vsub.f32 %v278, %v2020
        %v2022 = vand.u32 %v2021, 4294901760
        %2023 = vmatmul.mubr.f32.gmra.mrb[0].mxu0 %v2022
        %v2024 = vpop.f32.mrb[0].mxu0
        %v2025 = vadd.f32 %v1562, %v2024
        %v2026 = vpop.f32.mrb[0].mxu0
        %v2027 = vadd.f32 %v1564, %v2026
        %2028 = vmatprep.mubr.f32.mxu0 0.0
        %v2029 = vand.u32 %v281, 4294901760
        %v2030 = vsub.f32 %v281, %v2029
        %v2031 = vand.u32 %v2030, 4294901760
        %2032 = vmatmul.mubr.f32.gmra.mrb[0].mxu0 %v2031
        %v2033 = vpop.f32.mrb[0].mxu0
        %v2034 = vadd.f32 %v1570, %v2033
        %v2035 = vpop.f32.mrb[0].mxu0
        %v2036 = vadd.f32 %v1572, %v2035
        %2037 = vmatprep.mubr.f32.mxu0 0.0
        %v2038 = vand.u32 %v284, 4294901760
        %v2039 = vsub.f32 %v284, %v2038
        %v2040 = vand.u32 %v2039, 4294901760
        %2041 = vmatmul.mubr.f32.gmra.mrb[0].mxu0 %v2040
        %v2042 = vpop.f32.mrb[0].mxu0
        %v2043 = vadd.f32 %v1578, %v2042
        %v2044 = vpop.f32.mrb[0].mxu0
        %v2045 = vadd.f32 %v1580, %v2044
        %2046 = vmatprep.mubr.f32.mxu0 0.0
        %v2047 = vand.u32 %v287, 4294901760
        %v2048 = vsub.f32 %v287, %v2047
        %v2049 = vand.u32 %v2048, 4294901760
        %2050 = vmatmul.mubr.f32.gmra.mrb[0].mxu0 %v2049
        %v2051 = vpop.f32.mrb[0].mxu0
        %v2052 = vadd.f32 %v1586, %v2051
        %v2053 = vpop.f32.mrb[0].mxu0
        %v2054 = vadd.f32 %v1588, %v2053
        %2055 = vmatprep.mubr.f32.mxu0 0.0
        %v2056 = vand.u32 %v290, 4294901760
        %v2057 = vsub.f32 %v290, %v2056
        %v2058 = vand.u32 %v2057, 4294901760
        %2059 = vmatmul.mubr.f32.gmra.mrb[0].mxu0 %v2058
        %v2060 = vpop.f32.mrb[0].mxu0
        %v2061 = vadd.f32 %v1594, %v2060
        %v2062 = vpop.f32.mrb[0].mxu0
        %v2063 = vadd.f32 %v1596, %v2062
        %2064 = vmatprep.mubr.f32.mxu0 0.0
        %v2065 = vand.u32 %v293, 4294901760
        %v2066 = vsub.f32 %v293, %v2065
        %v2067 = vand.u32 %v2066, 4294901760
        %2068 = vmatmul.mubr.f32.gmra.mrb[0].mxu0 %v2067
        %v2069 = vpop.f32.mrb[0].mxu0
        %v2070 = vadd.f32 %v1602, %v2069
        %v2071 = vpop.f32.mrb[0].mxu0
        %v2072 = vadd.f32 %v1604, %v2071
        %2073 = vmatprep.mubr.f32.mxu0 0.0
        %v2074 = vand.u32 %v296, 4294901760
        %v2075 = vsub.f32 %v296, %v2074
        %v2076 = vand.u32 %v2075, 4294901760
        %2077 = vmatmul.mubr.f32.gmra.mrb[0].mxu0 %v2076
        %v2078 = vpop.f32.mrb[0].mxu0
        %v2079 = vadd.f32 %v1610, %v2078
        %v2080 = vpop.f32.mrb[0].mxu0
        %v2081 = vadd.f32 %v1612, %v2080
        %2082 = vmatprep.mubr.f32.mxu0 0.0
        %v2083 = vand.u32 %v299, 4294901760
        %v2084 = vsub.f32 %v299, %v2083
        %v2085 = vand.u32 %v2084, 4294901760
        %2086 = vmatmul.mubr.f32.gmra.mrb[0].mxu0 %v2085
        %v2087 = vpop.f32.mrb[0].mxu0
        %v2088 = vadd.f32 %v1618, %v2087
        %v2089 = vpop.f32.mrb[0].mxu0
        %v2090 = vadd.f32 %v1620, %v2089
        %2091 = vmatprep.mubr.f32.mxu0 0.0
        %v2092 = vand.u32 %v302, 4294901760
        %v2093 = vsub.f32 %v302, %v2092
        %v2094 = vand.u32 %v2093, 4294901760
        %2095 = vmatmul.mubr.f32.gmra.mrb[0].mxu0 %v2094
        %v2096 = vpop.f32.mrb[0].mxu0
        %v2097 = vadd.f32 %v1626, %v2096
        %v2098 = vpop.f32.mrb[0].mxu0
        %v2099 = vadd.f32 %v1628, %v2098
        %2100 = vmatprep.mubr.f32.mxu0 0.0
        %v2101 = vand.u32 %v305, 4294901760
        %v2102 = vsub.f32 %v305, %v2101
        %v2103 = vand.u32 %v2102, 4294901760
        %2104 = vmatmul.mubr.f32.gmra.mrb[0].mxu0 %v2103
        %v2105 = vpop.f32.mrb[0].mxu0
        %v2106 = vadd.f32 %v1634, %v2105
        %v2107 = vpop.f32.mrb[0].mxu0
        %v2108 = vadd.f32 %v1636, %v2107
        %2109 = vmatprep.mubr.f32.mxu0 0.0
        %v2110 = vand.u32 %v308, 4294901760
        %v2111 = vsub.f32 %v308, %v2110
        %v2112 = vand.u32 %v2111, 4294901760
        %2113 = vmatmul.mubr.f32.gmra.mrb[0].mxu0 %v2112
        %v2114 = vpop.f32.mrb[0].mxu0
        %v2115 = vadd.f32 %v1642, %v2114
        %v2116 = vpop.f32.mrb[0].mxu0
        %v2117 = vadd.f32 %v1644, %v2116
        %2118 = vmatprep.mubr.f32.mxu0 0.0
        %v2119 = vand.u32 %v311, 4294901760
        %v2120 = vsub.f32 %v311, %v2119
        %v2121 = vand.u32 %v2120, 4294901760
        %2122 = vmatmul.mubr.f32.gmra.mrb[0].mxu0 %v2121
        %v2123 = vpop.f32.mrb[0].mxu0
        %v2124 = vadd.f32 %v1650, %v2123
        %v2125 = vpop.f32.mrb[0].mxu0
        %v2126 = vadd.f32 %v1652, %v2125
        %2127 = vmatprep.mubr.f32.mxu0 0.0
        %v2128 = vand.u32 %v314, 4294901760
        %v2129 = vsub.f32 %v314, %v2128
        %v2130 = vand.u32 %v2129, 4294901760
        %2131 = vmatmul.mubr.f32.gmra.mrb[0].mxu0 %v2130
        %v2132 = vpop.f32.mrb[0].mxu0
        %v2133 = vadd.f32 %v1658, %v2132
        %v2134 = vpop.f32.mrb[0].mxu0
        %v2135 = vadd.f32 %v1660, %v2134
        %2136 = vmatprep.mubr.f32.mxu0 0.0
        %v2137 = vand.u32 %v317, 4294901760
        %v2138 = vsub.f32 %v317, %v2137
        %v2139 = vand.u32 %v2138, 4294901760
        %2140 = vmatmul.mubr.f32.gmra.mrb[0].mxu0 %v2139
        %v2141 = vpop.f32.mrb[0].mxu0
        %v2142 = vadd.f32 %v1666, %v2141
        %v2143 = vpop.f32.mrb[0].mxu0
        %v2144 = vadd.f32 %v1668, %v2143
        %2145 = vmatprep.mubr.f32.mxu0 0.0
        %v2146 = vand.u32 %v320, 4294901760
        %v2147 = vsub.f32 %v320, %v2146
        %v2148 = vand.u32 %v2147, 4294901760
        %2149 = vmatmul.mubr.f32.gmra.mrb[0].mxu0 %v2148
        %v2150 = vpop.f32.mrb[0].mxu0
        %v2151 = vadd.f32 %v1674, %v2150
        %v2152 = vpop.f32.mrb[0].mxu0
        %v2153 = vadd.f32 %v1676, %v2152
        %2154 = vmatprep.mubr.f32.mxu0 0.0
        %v2155 = vand.u32 %v323, 4294901760
        %v2156 = vsub.f32 %v323, %v2155
        %v2157 = vand.u32 %v2156, 4294901760
        %2158 = vmatmul.mubr.f32.gmra.mrb[0].mxu0 %v2157
        %v2159 = vpop.f32.mrb[0].mxu0
        %v2160 = vadd.f32 %v1682, %v2159
        %v2161 = vpop.f32.mrb[0].mxu0
        %v2162 = vadd.f32 %v1684, %v2161
        %2163 = vmatprep.mubr.f32.mxu0 0.0
        %v2164 = vand.u32 %v326, 4294901760
        %v2165 = vsub.f32 %v326, %v2164
        %v2166 = vand.u32 %v2165, 4294901760
        %2167 = vmatmul.mubr.f32.gmra.mrb[0].mxu0 %v2166
        %v2168 = vpop.f32.mrb[0].mxu0
        %v2169 = vadd.f32 %v1690, %v2168
        %v2170 = vpop.f32.mrb[0].mxu0
        %v2171 = vadd.f32 %v1692, %v2170
        %2172 = vmatprep.mubr.f32.mxu0 0.0
        %v2173 = vand.u32 %v329, 4294901760
        %v2174 = vsub.f32 %v329, %v2173
        %v2175 = vand.u32 %v2174, 4294901760
        %2176 = vmatmul.mubr.f32.gmra.mrb[0].mxu0 %v2175
        %v2177 = vpop.f32.mrb[0].mxu0
        %v2178 = vadd.f32 %v1698, %v2177
        %v2179 = vpop.f32.mrb[0].mxu0
        %v2180 = vadd.f32 %v1700, %v2179
        %2181 = vmatprep.mubr.f32.mxu0 0.0
        %v2182 = vand.u32 %v332, 4294901760
        %v2183 = vsub.f32 %v332, %v2182
        %v2184 = vand.u32 %v2183, 4294901760
        %2185 = vmatmul.mubr.f32.gmra.mrb[0].mxu0 %v2184
        %v2186 = vpop.f32.mrb[0].mxu0
        %v2187 = vadd.f32 %v1706, %v2186
        %v2188 = vpop.f32.mrb[0].mxu0
        %v2189 = vadd.f32 %v1708, %v2188
        %2190 = vmatprep.mubr.f32.mxu0 0.0
        %v2191 = vand.u32 %v335, 4294901760
        %v2192 = vsub.f32 %v335, %v2191
        %v2193 = vand.u32 %v2192, 4294901760
        %2194 = vmatmul.mubr.f32.gmra.mrb[0].mxu0 %v2193
        %v2195 = vpop.f32.mrb[0].mxu0
        %v2196 = vadd.f32 %v1714, %v2195
        %v2197 = vpop.f32.mrb[0].mxu0
        %v2198 = vadd.f32 %v1716, %v2197
        %2199 = vmatprep.mubr.f32.mxu0 0.0
        %v2200 = vand.u32 %v338, 4294901760
        %v2201 = vsub.f32 %v338, %v2200
        %v2202 = vand.u32 %v2201, 4294901760
        %2203 = vmatmul.mubr.f32.gmra.mrb[0].mxu0 %v2202
        %v2204 = vpop.f32.mrb[0].mxu0
        %v2205 = vadd.f32 %v1722, %v2204
        %v2206 = vpop.f32.mrb[0].mxu0
        %v2207 = vadd.f32 %v1724, %v2206
        %2208 = vmatprep.mubr.f32.mxu0 0.0
        %v2209 = vand.u32 %v341, 4294901760
        %v2210 = vsub.f32 %v341, %v2209
        %v2211 = vand.u32 %v2210, 4294901760
        %2212 = vmatmul.mubr.f32.gmra.mrb[0].mxu0 %v2211
        %v2213 = vpop.f32.mrb[0].mxu0
        %v2214 = vadd.f32 %v1730, %v2213
        %v2215 = vpop.f32.mrb[0].mxu0
        %v2216 = vadd.f32 %v1732, %v2215
        %2217 = vmatprep.mubr.f32.mxu0 0.0
        %v2218 = vand.u32 %v344, 4294901760
        %v2219 = vsub.f32 %v344, %v2218
        %v2220 = vand.u32 %v2219, 4294901760
        %2221 = vmatmul.mubr.f32.gmra.mrb[0].mxu0 %v2220
        %v2222 = vpop.f32.mrb[0].mxu0
        %v2223 = vadd.f32 %v1738, %v2222
        %v2224 = vpop.f32.mrb[0].mxu0
        %v2225 = vadd.f32 %v1740, %v2224
        %2226 = vmatprep.mubr.f32.mxu0 0.0
        %v2227 = vand.u32 %v347, 4294901760
        %v2228 = vsub.f32 %v347, %v2227
        %v2229 = vand.u32 %v2228, 4294901760
        %2230 = vmatmul.mubr.f32.gmra.mrb[0].mxu0 %v2229
        %v2231 = vpop.f32.mrb[0].mxu0
        %v2232 = vadd.f32 %v1746, %v2231
        %v2233 = vpop.f32.mrb[0].mxu0
        %v2234 = vadd.f32 %v1748, %v2233
        %2235 = vmatprep.mubr.f32.mxu0 0.0
        %v2236 = vand.u32 %v350, 4294901760
        %v2237 = vsub.f32 %v350, %v2236
        %v2238 = vand.u32 %v2237, 4294901760
        %2239 = vmatmul.mubr.f32.gmra.mrb[0].mxu0 %v2238
        %v2240 = vpop.f32.mrb[0].mxu0
        %v2241 = vadd.f32 %v1754, %v2240
        %v2242 = vpop.f32.mrb[0].mxu0
        %v2243 = vadd.f32 %v1756, %v2242
        %2244 = vmatprep.mubr.f32.mxu0 0.0
        %v2245 = vand.u32 %v353, 4294901760
        %v2246 = vsub.f32 %v353, %v2245
        %v2247 = vand.u32 %v2246, 4294901760
        %2248 = vmatmul.mubr.f32.gmra.mrb[0].mxu0 %v2247
        %v2249 = vpop.f32.mrb[0].mxu0
        %v2250 = vadd.f32 %v1762, %v2249
        %v2251 = vpop.f32.mrb[0].mxu0
        %v2252 = vadd.f32 %v1764, %v2251
        %2253 = vmatprep.mubr.f32.mxu0 0.0
        %v2254 = vand.u32 %v356, 4294901760
        %v2255 = vsub.f32 %v356, %v2254
        %v2256 = vand.u32 %v2255, 4294901760
        %2257 = vmatmul.mubr.f32.gmra.mrb[0].mxu0 %v2256
        %v2258 = vpop.f32.mrb[0].mxu0
        %v2259 = vadd.f32 %v1770, %v2258
        %v2260 = vpop.f32.mrb[0].mxu0
        %v2261 = vadd.f32 %v1772, %v2260
        %2262 = vmatprep.mubr.f32.mxu0 0.0
        %v2263 = vand.u32 %v359, 4294901760
        %v2264 = vsub.f32 %v359, %v2263
        %v2265 = vand.u32 %v2264, 4294901760
        %2266 = vmatmul.mubr.f32.gmra.mrb[0].mxu0 %v2265
        %v2267 = vpop.f32.mrb[0].mxu0
        %v2268 = vadd.f32 %v1778, %v2267
        %v2269 = vpop.f32.mrb[0].mxu0
        %v2270 = vadd.f32 %v1780, %v2269
        %2271 = vmatprep.mubr.f32.mxu0 0.0
        %v2272 = vand.u32 %v362, 4294901760
        %v2273 = vsub.f32 %v362, %v2272
        %v2274 = vand.u32 %v2273, 4294901760
        %2275 = vmatmul.mubr.f32.gmra.mrb[0].mxu0 %v2274
        %v2276 = vpop.f32.mrb[0].mxu0
        %v2277 = vadd.f32 %v1786, %v2276
        %v2278 = vpop.f32.mrb[0].mxu0
        %v2279 = vadd.f32 %v1788, %v2278
        %2280 = vmatprep.mubr.f32.mxu0 0.0
        %v2281 = vand.u32 %v365, 4294901760
        %v2282 = vsub.f32 %v365, %v2281
        %v2283 = vand.u32 %v2282, 4294901760
        %2284 = vmatmul.mubr.f32.gmra.mrb[0].mxu0 %v2283
        %v2285 = vpop.f32.mrb[0].mxu0
        %v2286 = vadd.f32 %v1794, %v2285
        %v2287 = vpop.f32.mrb[0].mxu0
        %v2288 = vadd.f32 %v1796, %v2287
        %2289 = vmatprep.mubr.f32.mxu0 0.0
        %v2290 = vand.u32 %v368, 4294901760
        %v2291 = vsub.f32 %v368, %v2290
        %v2292 = vand.u32 %v2291, 4294901760
        %2293 = vmatmul.mubr.f32.gmra.mrb[0].mxu0 %v2292
        %v2294 = vpop.f32.mrb[0].mxu0
        %v2295 = vadd.f32 %v1802, %v2294
        %v2296 = vpop.f32.mrb[0].mxu0
        %v2297 = vadd.f32 %v1804, %v2296
        %2298 = vmatprep.mubr.f32.mxu0 0.0
        %v2299 = vand.u32 %v371, 4294901760
        %v2300 = vsub.f32 %v371, %v2299
        %v2301 = vand.u32 %v2300, 4294901760
        %2302 = vmatmul.mubr.f32.gmra.mrb[0].mxu0 %v2301
        %v2303 = vpop.f32.mrb[0].mxu0
        %v2304 = vadd.f32 %v1810, %v2303
        %v2305 = vpop.f32.mrb[0].mxu0
        %v2306 = vadd.f32 %v1812, %v2305
        %2307 = vmatprep.mubr.f32.mxu0 0.0
        %v2308 = vand.u32 %v374, 4294901760
        %v2309 = vsub.f32 %v374, %v2308
        %v2310 = vand.u32 %v2309, 4294901760
        %2311 = vmatmul.mubr.f32.gmra.mrb[0].mxu0 %v2310
        %v2312 = vpop.f32.mrb[0].mxu0
        %v2313 = vadd.f32 %v1818, %v2312
        %v2314 = vpop.f32.mrb[0].mxu0
        %v2315 = vadd.f32 %v1820, %v2314
        %2316 = vmatprep.mubr.f32.mxu0 0.0
        %v2317 = vand.u32 %v377, 4294901760
        %v2318 = vsub.f32 %v377, %v2317
        %v2319 = vand.u32 %v2318, 4294901760
        %2320 = vmatmul.mubr.f32.gmra.mrb[0].mxu0 %v2319
        %v2321 = vpop.f32.mrb[0].mxu0
        %v2322 = vadd.f32 %v1826, %v2321
        %v2323 = vpop.f32.mrb[0].mxu0
        %v2324 = vadd.f32 %v1828, %v2323
        %2325 = vmatprep.mubr.f32.mxu0 0.0
        %v2326 = vand.u32 %v380, 4294901760
        %v2327 = vsub.f32 %v380, %v2326
        %v2328 = vand.u32 %v2327, 4294901760
        %2329 = vmatmul.mubr.f32.gmra.mrb[0].mxu0 %v2328
        %v2330 = vpop.f32.mrb[0].mxu0
        %v2331 = vadd.f32 %v1834, %v2330
        %v2332 = vpop.f32.mrb[0].mxu0
        %v2333 = vadd.f32 %v1836, %v2332
        %2334 = vmatprep.mubr.f32.mxu0 0.0
        %v2335 = vand.u32 %v383, 4294901760
        %v2336 = vsub.f32 %v383, %v2335
        %v2337 = vand.u32 %v2336, 4294901760
        %2338 = vmatmul.mubr.f32.gmra.mrb[0].mxu0 %v2337
        %v2339 = vpop.f32.mrb[0].mxu0
        %v2340 = vadd.f32 %v1842, %v2339
        %v2341 = vpop.f32.mrb[0].mxu0
        %v2342 = vadd.f32 %v1844, %v2341
        %2343 = vmatprep.mubr.f32.mxu0 0.0
        %v2344 = vand.u32 %v386, 4294901760
        %v2345 = vsub.f32 %v386, %v2344
        %v2346 = vand.u32 %v2345, 4294901760
        %2347 = vmatmul.mubr.f32.gmra.mrb[0].mxu0 %v2346
        %v2348 = vpop.f32.mrb[0].mxu0
        %v2349 = vadd.f32 %v1850, %v2348
        %v2350 = vpop.f32.mrb[0].mxu0
        %v2351 = vadd.f32 %v1852, %v2350
        %2352 = vdwg.mxu0
        %v2353 = vand.u32 %v393, 4294901760
        %v2354 = vsub.f32 %v393, %v2353
        %v2355 = vand.u32 %v2354, 4294901760
        %2356 = vmatprep.subr.mxu0 %v2355
        %v2357 = vand.u32 %v390, 4294901760
        %v2358 = vsub.f32 %v390, %v2357
        %v2359 = vand.u32 %v2358, 4294901760
        %2360 = vmatpush1.msra.mxu0 %v2359
        %2361 = vmatprep.subr.mxu0 0.0
        %2362 = vmatpush1.msra.mxu0 0.0
        %2363 = vmatprep.subr.mxu0 0.0
        %2364 = vmatpush1.msra.mxu0 0.0
        %2365 = vmatprep.subr.mxu0 0.0
        %2366 = vmatpush1.msra.mxu0 0.0
        %2367 = vmatprep.subr.mxu0 0.0
        %2368 = vmatpush1.msra.mxu0 0.0
        %2369 = vmatprep.subr.mxu0 0.0
        %2370 = vmatpush1.msra.mxu0 0.0
        %2371 = vmatprep.subr.mxu0 0.0
        %2372 = vmatpush1.msra.mxu0 0.0
        %2373 = vmatprep.subr.mxu0 0.0
        %2374 = vmatpush1.msra.mxu0 0.0
        %2375 = vmatprep.subr.mxu0 0.0
        %2376 = vmatpush1.msra.mxu0 0.0
        %2377 = vmatprep.subr.mxu0 0.0
        %2378 = vmatpush1.msra.mxu0 0.0
        %2379 = vmatprep.subr.mxu0 0.0
        %2380 = vmatpush1.msra.mxu0 0.0
        %2381 = vmatprep.subr.mxu0 0.0
        %2382 = vmatpush1.msra.mxu0 0.0
        %2383 = vmatprep.subr.mxu0 0.0
        %2384 = vmatpush1.msra.mxu0 0.0
        %2385 = vmatprep.subr.mxu0 0.0
        %2386 = vmatpush1.msra.mxu0 0.0
        %2387 = vmatprep.subr.mxu0 0.0
        %2388 = vmatpush1.msra.mxu0 0.0
        %2389 = vmatprep.subr.mxu0 0.0
        %2390 = vmatpush1.msra.mxu0 0.0
        %2391 = vmatprep.subr.mxu0 0.0
        %2392 = vmatpush1.msra.mxu0 0.0
        %2393 = vmatprep.subr.mxu0 0.0
        %2394 = vmatpush1.msra.mxu0 0.0
        %2395 = vmatprep.subr.mxu0 0.0
        %2396 = vmatpush1.msra.mxu0 0.0
        %2397 = vmatprep.subr.mxu0 0.0
        %2398 = vmatpush1.msra.mxu0 0.0
        %2399 = vmatprep.subr.mxu0 0.0
        %2400 = vmatpush1.msra.mxu0 0.0
        %2401 = vmatprep.subr.mxu0 0.0
        %2402 = vmatpush1.msra.mxu0 0.0
        %2403 = vmatprep.subr.mxu0 0.0
        %2404 = vmatpush1.msra.mxu0 0.0
        %2405 = vmatprep.subr.mxu0 0.0
        %2406 = vmatpush1.msra.mxu0 0.0
        %2407 = vmatprep.subr.mxu0 0.0
        %2408 = vmatpush1.msra.mxu0 0.0
        %2409 = vmatprep.subr.mxu0 0.0
        %2410 = vmatpush1.msra.mxu0 0.0
        %2411 = vmatprep.subr.mxu0 0.0
        %2412 = vmatpush1.msra.mxu0 0.0
        %2413 = vmatprep.subr.mxu0 0.0
        %2414 = vmatpush1.msra.mxu0 0.0
        %2415 = vmatprep.subr.mxu0 0.0
        %2416 = vmatpush1.msra.mxu0 0.0
        %2417 = vmatprep.subr.mxu0 0.0
        %2418 = vmatpush1.msra.mxu0 0.0
        %2419 = vmatprep.subr.mxu0 0.0
        %2420 = vmatpush1.msra.mxu0 0.0
        %2421 = vmatprep.subr.mxu0 0.0
        %2422 = vmatpush1.msra.mxu0 0.0
        %2423 = vmatprep.mubr.f32.mxu0 0.0
        %v2424 = vand.u32 %v245, 4294901760
        %2425 = vmatmul.mubr.f32.gmra.mrb[0].mxu0 %v2424
        %v2426 = vpop.f32.mrb[0].mxu0
        %v2427 = vadd.f32 %v1926, %v2426
        %v2428 = vpop.f32.mrb[0].mxu0
        %v2429 = vadd.f32 %v1928, %v2428
        %2430 = vmatprep.mubr.f32.mxu0 0.0
        %v2431 = vand.u32 %v248, 4294901760
        %2432 = vmatmul.mubr.f32.gmra.mrb[0].mxu0 %v2431
        %v2433 = vpop.f32.mrb[0].mxu0
        %v2434 = vadd.f32 %v1935, %v2433
        %v2435 = vpop.f32.mrb[0].mxu0
        %v2436 = vadd.f32 %v1937, %v2435
        %2437 = vmatprep.mubr.f32.mxu0 0.0
        %v2438 = vand.u32 %v251, 4294901760
        %2439 = vmatmul.mubr.f32.gmra.mrb[0].mxu0 %v2438
        %v2440 = vpop.f32.mrb[0].mxu0
        %v2441 = vadd.f32 %v1944, %v2440
        %v2442 = vpop.f32.mrb[0].mxu0
        %v2443 = vadd.f32 %v1946, %v2442
        %2444 = vmatprep.mubr.f32.mxu0 0.0
        %v2445 = vand.u32 %v254, 4294901760
        %2446 = vmatmul.mubr.f32.gmra.mrb[0].mxu0 %v2445
        %v2447 = vpop.f32.mrb[0].mxu0
        %v2448 = vadd.f32 %v1953, %v2447
        %v2449 = vpop.f32.mrb[0].mxu0
        %v2450 = vadd.f32 %v1955, %v2449
        %2451 = vmatprep.mubr.f32.mxu0 0.0
        %v2452 = vand.u32 %v257, 4294901760
        %2453 = vmatmul.mubr.f32.gmra.mrb[0].mxu0 %v2452
        %v2454 = vpop.f32.mrb[0].mxu0
        %v2455 = vadd.f32 %v1962, %v2454
        %v2456 = vpop.f32.mrb[0].mxu0
        %v2457 = vadd.f32 %v1964, %v2456
        %2458 = vmatprep.mubr.f32.mxu0 0.0
        %v2459 = vand.u32 %v260, 4294901760
        %2460 = vmatmul.mubr.f32.gmra.mrb[0].mxu0 %v2459
        %v2461 = vpop.f32.mrb[0].mxu0
        %v2462 = vadd.f32 %v1971, %v2461
        %v2463 = vpop.f32.mrb[0].mxu0
        %v2464 = vadd.f32 %v1973, %v2463
        %2465 = vmatprep.mubr.f32.mxu0 0.0
        %v2466 = vand.u32 %v263, 4294901760
        %2467 = vmatmul.mubr.f32.gmra.mrb[0].mxu0 %v2466
        %v2468 = vpop.f32.mrb[0].mxu0
        %v2469 = vadd.f32 %v1980, %v2468
        %v2470 = vpop.f32.mrb[0].mxu0
        %v2471 = vadd.f32 %v1982, %v2470
        %2472 = vmatprep.mubr.f32.mxu0 0.0
        %v2473 = vand.u32 %v266, 4294901760
        %2474 = vmatmul.mubr.f32.gmra.mrb[0].mxu0 %v2473
        %v2475 = vpop.f32.mrb[0].mxu0
        %v2476 = vadd.f32 %v1989, %v2475
        %v2477 = vpop.f32.mrb[0].mxu0
        %v2478 = vadd.f32 %v1991, %v2477
        %2479 = vmatprep.mubr.f32.mxu0 0.0
        %v2480 = vand.u32 %v269, 4294901760
        %2481 = vmatmul.mubr.f32.gmra.mrb[0].mxu0 %v2480
        %v2482 = vpop.f32.mrb[0].mxu0
        %v2483 = vadd.f32 %v1998, %v2482
        %v2484 = vpop.f32.mrb[0].mxu0
        %v2485 = vadd.f32 %v2000, %v2484
        %2486 = vmatprep.mubr.f32.mxu0 0.0
        %v2487 = vand.u32 %v272, 4294901760
        %2488 = vmatmul.mubr.f32.gmra.mrb[0].mxu0 %v2487
        %v2489 = vpop.f32.mrb[0].mxu0
        %v2490 = vadd.f32 %v2007, %v2489
        %v2491 = vpop.f32.mrb[0].mxu0
        %v2492 = vadd.f32 %v2009, %v2491
        %2493 = vmatprep.mubr.f32.mxu0 0.0
        %v2494 = vand.u32 %v275, 4294901760
        %2495 = vmatmul.mubr.f32.gmra.mrb[0].mxu0 %v2494
        %v2496 = vpop.f32.mrb[0].mxu0
        %v2497 = vadd.f32 %v2016, %v2496
        %v2498 = vpop.f32.mrb[0].mxu0
        %v2499 = vadd.f32 %v2018, %v2498
        %2500 = vmatprep.mubr.f32.mxu0 0.0
        %v2501 = vand.u32 %v278, 4294901760
        %2502 = vmatmul.mubr.f32.gmra.mrb[0].mxu0 %v2501
        %v2503 = vpop.f32.mrb[0].mxu0
        %v2504 = vadd.f32 %v2025, %v2503
        %v2505 = vpop.f32.mrb[0].mxu0
        %v2506 = vadd.f32 %v2027, %v2505
        %2507 = vmatprep.mubr.f32.mxu0 0.0
        %v2508 = vand.u32 %v281, 4294901760
        %2509 = vmatmul.mubr.f32.gmra.mrb[0].mxu0 %v2508
        %v2510 = vpop.f32.mrb[0].mxu0
        %v2511 = vadd.f32 %v2034, %v2510
        %v2512 = vpop.f32.mrb[0].mxu0
        %v2513 = vadd.f32 %v2036, %v2512
        %2514 = vmatprep.mubr.f32.mxu0 0.0
        %v2515 = vand.u32 %v284, 4294901760
        %2516 = vmatmul.mubr.f32.gmra.mrb[0].mxu0 %v2515
        %v2517 = vpop.f32.mrb[0].mxu0
        %v2518 = vadd.f32 %v2043, %v2517
        %v2519 = vpop.f32.mrb[0].mxu0
        %v2520 = vadd.f32 %v2045, %v2519
        %2521 = vmatprep.mubr.f32.mxu0 0.0
        %v2522 = vand.u32 %v287, 4294901760
        %2523 = vmatmul.mubr.f32.gmra.mrb[0].mxu0 %v2522
        %v2524 = vpop.f32.mrb[0].mxu0
        %v2525 = vadd.f32 %v2052, %v2524
        %v2526 = vpop.f32.mrb[0].mxu0
        %v2527 = vadd.f32 %v2054, %v2526
        %2528 = vmatprep.mubr.f32.mxu0 0.0
        %v2529 = vand.u32 %v290, 4294901760
        %2530 = vmatmul.mubr.f32.gmra.mrb[0].mxu0 %v2529
        %v2531 = vpop.f32.mrb[0].mxu0
        %v2532 = vadd.f32 %v2061, %v2531
        %v2533 = vpop.f32.mrb[0].mxu0
        %v2534 = vadd.f32 %v2063, %v2533
        %2535 = vmatprep.mubr.f32.mxu0 0.0
        %v2536 = vand.u32 %v293, 4294901760
        %2537 = vmatmul.mubr.f32.gmra.mrb[0].mxu0 %v2536
        %v2538 = vpop.f32.mrb[0].mxu0
        %v2539 = vadd.f32 %v2070, %v2538
        %v2540 = vpop.f32.mrb[0].mxu0
        %v2541 = vadd.f32 %v2072, %v2540
        %2542 = vmatprep.mubr.f32.mxu0 0.0
        %v2543 = vand.u32 %v296, 4294901760
        %2544 = vmatmul.mubr.f32.gmra.mrb[0].mxu0 %v2543
        %v2545 = vpop.f32.mrb[0].mxu0
        %v2546 = vadd.f32 %v2079, %v2545
        %v2547 = vpop.f32.mrb[0].mxu0
        %v2548 = vadd.f32 %v2081, %v2547
        %2549 = vmatprep.mubr.f32.mxu0 0.0
        %v2550 = vand.u32 %v299, 4294901760
        %2551 = vmatmul.mubr.f32.gmra.mrb[0].mxu0 %v2550
        %v2552 = vpop.f32.mrb[0].mxu0
        %v2553 = vadd.f32 %v2088, %v2552
        %v2554 = vpop.f32.mrb[0].mxu0
        %v2555 = vadd.f32 %v2090, %v2554
        %2556 = vmatprep.mubr.f32.mxu0 0.0
        %v2557 = vand.u32 %v302, 4294901760
        %2558 = vmatmul.mubr.f32.gmra.mrb[0].mxu0 %v2557
        %v2559 = vpop.f32.mrb[0].mxu0
        %v2560 = vadd.f32 %v2097, %v2559
        %v2561 = vpop.f32.mrb[0].mxu0
        %v2562 = vadd.f32 %v2099, %v2561
        %2563 = vmatprep.mubr.f32.mxu0 0.0
        %v2564 = vand.u32 %v305, 4294901760
        %2565 = vmatmul.mubr.f32.gmra.mrb[0].mxu0 %v2564
        %v2566 = vpop.f32.mrb[0].mxu0
        %v2567 = vadd.f32 %v2106, %v2566
        %v2568 = vpop.f32.mrb[0].mxu0
        %v2569 = vadd.f32 %v2108, %v2568
        %2570 = vmatprep.mubr.f32.mxu0 0.0
        %v2571 = vand.u32 %v308, 4294901760
        %2572 = vmatmul.mubr.f32.gmra.mrb[0].mxu0 %v2571
        %v2573 = vpop.f32.mrb[0].mxu0
        %v2574 = vadd.f32 %v2115, %v2573
        %v2575 = vpop.f32.mrb[0].mxu0
        %v2576 = vadd.f32 %v2117, %v2575
        %2577 = vmatprep.mubr.f32.mxu0 0.0
        %v2578 = vand.u32 %v311, 4294901760
        %2579 = vmatmul.mubr.f32.gmra.mrb[0].mxu0 %v2578
        %v2580 = vpop.f32.mrb[0].mxu0
        %v2581 = vadd.f32 %v2124, %v2580
        %v2582 = vpop.f32.mrb[0].mxu0
        %v2583 = vadd.f32 %v2126, %v2582
        %2584 = vmatprep.mubr.f32.mxu0 0.0
        %v2585 = vand.u32 %v314, 4294901760
        %2586 = vmatmul.mubr.f32.gmra.mrb[0].mxu0 %v2585
        %v2587 = vpop.f32.mrb[0].mxu0
        %v2588 = vadd.f32 %v2133, %v2587
        %v2589 = vpop.f32.mrb[0].mxu0
        %v2590 = vadd.f32 %v2135, %v2589
        %2591 = vmatprep.mubr.f32.mxu0 0.0
        %v2592 = vand.u32 %v317, 4294901760
        %2593 = vmatmul.mubr.f32.gmra.mrb[0].mxu0 %v2592
        %v2594 = vpop.f32.mrb[0].mxu0
        %v2595 = vadd.f32 %v2142, %v2594
        %v2596 = vpop.f32.mrb[0].mxu0
        %v2597 = vadd.f32 %v2144, %v2596
        %2598 = vmatprep.mubr.f32.mxu0 0.0
        %v2599 = vand.u32 %v320, 4294901760
        %2600 = vmatmul.mubr.f32.gmra.mrb[0].mxu0 %v2599
        %v2601 = vpop.f32.mrb[0].mxu0
        %v2602 = vadd.f32 %v2151, %v2601
        %v2603 = vpop.f32.mrb[0].mxu0
        %v2604 = vadd.f32 %v2153, %v2603
        %2605 = vmatprep.mubr.f32.mxu0 0.0
        %v2606 = vand.u32 %v323, 4294901760
        %2607 = vmatmul.mubr.f32.gmra.mrb[0].mxu0 %v2606
        %v2608 = vpop.f32.mrb[0].mxu0
        %v2609 = vadd.f32 %v2160, %v2608
        %v2610 = vpop.f32.mrb[0].mxu0
        %v2611 = vadd.f32 %v2162, %v2610
        %2612 = vmatprep.mubr.f32.mxu0 0.0
        %v2613 = vand.u32 %v326, 4294901760
        %2614 = vmatmul.mubr.f32.gmra.mrb[0].mxu0 %v2613
        %v2615 = vpop.f32.mrb[0].mxu0
        %v2616 = vadd.f32 %v2169, %v2615
        %v2617 = vpop.f32.mrb[0].mxu0
        %v2618 = vadd.f32 %v2171, %v2617
        %2619 = vmatprep.mubr.f32.mxu0 0.0
        %v2620 = vand.u32 %v329, 4294901760
        %2621 = vmatmul.mubr.f32.gmra.mrb[0].mxu0 %v2620
        %v2622 = vpop.f32.mrb[0].mxu0
        %v2623 = vadd.f32 %v2178, %v2622
        %v2624 = vpop.f32.mrb[0].mxu0
        %v2625 = vadd.f32 %v2180, %v2624
        %2626 = vmatprep.mubr.f32.mxu0 0.0
        %v2627 = vand.u32 %v332, 4294901760
        %2628 = vmatmul.mubr.f32.gmra.mrb[0].mxu0 %v2627
        %v2629 = vpop.f32.mrb[0].mxu0
        %v2630 = vadd.f32 %v2187, %v2629
        %v2631 = vpop.f32.mrb[0].mxu0
        %v2632 = vadd.f32 %v2189, %v2631
        %2633 = vmatprep.mubr.f32.mxu0 0.0
        %v2634 = vand.u32 %v335, 4294901760
        %2635 = vmatmul.mubr.f32.gmra.mrb[0].mxu0 %v2634
        %v2636 = vpop.f32.mrb[0].mxu0
        %v2637 = vadd.f32 %v2196, %v2636
        %v2638 = vpop.f32.mrb[0].mxu0
        %v2639 = vadd.f32 %v2198, %v2638
        %2640 = vmatprep.mubr.f32.mxu0 0.0
        %v2641 = vand.u32 %v338, 4294901760
        %2642 = vmatmul.mubr.f32.gmra.mrb[0].mxu0 %v2641
        %v2643 = vpop.f32.mrb[0].mxu0
        %v2644 = vadd.f32 %v2205, %v2643
        %v2645 = vpop.f32.mrb[0].mxu0
        %v2646 = vadd.f32 %v2207, %v2645
        %2647 = vmatprep.mubr.f32.mxu0 0.0
        %v2648 = vand.u32 %v341, 4294901760
        %2649 = vmatmul.mubr.f32.gmra.mrb[0].mxu0 %v2648
        %v2650 = vpop.f32.mrb[0].mxu0
        %v2651 = vadd.f32 %v2214, %v2650
        %v2652 = vpop.f32.mrb[0].mxu0
        %v2653 = vadd.f32 %v2216, %v2652
        %2654 = vmatprep.mubr.f32.mxu0 0.0
        %v2655 = vand.u32 %v344, 4294901760
        %2656 = vmatmul.mubr.f32.gmra.mrb[0].mxu0 %v2655
        %v2657 = vpop.f32.mrb[0].mxu0
        %v2658 = vadd.f32 %v2223, %v2657
        %v2659 = vpop.f32.mrb[0].mxu0
        %v2660 = vadd.f32 %v2225, %v2659
        %2661 = vmatprep.mubr.f32.mxu0 0.0
        %v2662 = vand.u32 %v347, 4294901760
        %2663 = vmatmul.mubr.f32.gmra.mrb[0].mxu0 %v2662
        %v2664 = vpop.f32.mrb[0].mxu0
        %v2665 = vadd.f32 %v2232, %v2664
        %v2666 = vpop.f32.mrb[0].mxu0
        %v2667 = vadd.f32 %v2234, %v2666
        %2668 = vmatprep.mubr.f32.mxu0 0.0
        %v2669 = vand.u32 %v350, 4294901760
        %2670 = vmatmul.mubr.f32.gmra.mrb[0].mxu0 %v2669
        %v2671 = vpop.f32.mrb[0].mxu0
        %v2672 = vadd.f32 %v2241, %v2671
        %v2673 = vpop.f32.mrb[0].mxu0
        %v2674 = vadd.f32 %v2243, %v2673
        %2675 = vmatprep.mubr.f32.mxu0 0.0
        %v2676 = vand.u32 %v353, 4294901760
        %2677 = vmatmul.mubr.f32.gmra.mrb[0].mxu0 %v2676
        %v2678 = vpop.f32.mrb[0].mxu0
        %v2679 = vadd.f32 %v2250, %v2678
        %v2680 = vpop.f32.mrb[0].mxu0
        %v2681 = vadd.f32 %v2252, %v2680
        %2682 = vmatprep.mubr.f32.mxu0 0.0
        %v2683 = vand.u32 %v356, 4294901760
        %2684 = vmatmul.mubr.f32.gmra.mrb[0].mxu0 %v2683
        %v2685 = vpop.f32.mrb[0].mxu0
        %v2686 = vadd.f32 %v2259, %v2685
        %v2687 = vpop.f32.mrb[0].mxu0
        %v2688 = vadd.f32 %v2261, %v2687
        %2689 = vmatprep.mubr.f32.mxu0 0.0
        %v2690 = vand.u32 %v359, 4294901760
        %2691 = vmatmul.mubr.f32.gmra.mrb[0].mxu0 %v2690
        %v2692 = vpop.f32.mrb[0].mxu0
        %v2693 = vadd.f32 %v2268, %v2692
        %v2694 = vpop.f32.mrb[0].mxu0
        %v2695 = vadd.f32 %v2270, %v2694
        %2696 = vmatprep.mubr.f32.mxu0 0.0
        %v2697 = vand.u32 %v362, 4294901760
        %2698 = vmatmul.mubr.f32.gmra.mrb[0].mxu0 %v2697
        %v2699 = vpop.f32.mrb[0].mxu0
        %v2700 = vadd.f32 %v2277, %v2699
        %v2701 = vpop.f32.mrb[0].mxu0
        %v2702 = vadd.f32 %v2279, %v2701
        %2703 = vmatprep.mubr.f32.mxu0 0.0
        %v2704 = vand.u32 %v365, 4294901760
        %2705 = vmatmul.mubr.f32.gmra.mrb[0].mxu0 %v2704
        %v2706 = vpop.f32.mrb[0].mxu0
        %v2707 = vadd.f32 %v2286, %v2706
        %v2708 = vpop.f32.mrb[0].mxu0
        %v2709 = vadd.f32 %v2288, %v2708
        %2710 = vmatprep.mubr.f32.mxu0 0.0
        %v2711 = vand.u32 %v368, 4294901760
        %2712 = vmatmul.mubr.f32.gmra.mrb[0].mxu0 %v2711
        %v2713 = vpop.f32.mrb[0].mxu0
        %v2714 = vadd.f32 %v2295, %v2713
        %v2715 = vpop.f32.mrb[0].mxu0
        %v2716 = vadd.f32 %v2297, %v2715
        %2717 = vmatprep.mubr.f32.mxu0 0.0
        %v2718 = vand.u32 %v371, 4294901760
        %2719 = vmatmul.mubr.f32.gmra.mrb[0].mxu0 %v2718
        %v2720 = vpop.f32.mrb[0].mxu0
        %v2721 = vadd.f32 %v2304, %v2720
        %v2722 = vpop.f32.mrb[0].mxu0
        %v2723 = vadd.f32 %v2306, %v2722
        %2724 = vmatprep.mubr.f32.mxu0 0.0
        %v2725 = vand.u32 %v374, 4294901760
        %2726 = vmatmul.mubr.f32.gmra.mrb[0].mxu0 %v2725
        %v2727 = vpop.f32.mrb[0].mxu0
        %v2728 = vadd.f32 %v2313, %v2727
        %v2729 = vpop.f32.mrb[0].mxu0
        %v2730 = vadd.f32 %v2315, %v2729
        %2731 = vmatprep.mubr.f32.mxu0 0.0
        %v2732 = vand.u32 %v377, 4294901760
        %2733 = vmatmul.mubr.f32.gmra.mrb[0].mxu0 %v2732
        %v2734 = vpop.f32.mrb[0].mxu0
        %v2735 = vadd.f32 %v2322, %v2734
        %v2736 = vpop.f32.mrb[0].mxu0
        %v2737 = vadd.f32 %v2324, %v2736
        %2738 = vmatprep.mubr.f32.mxu0 0.0
        %v2739 = vand.u32 %v380, 4294901760
        %2740 = vmatmul.mubr.f32.gmra.mrb[0].mxu0 %v2739
        %v2741 = vpop.f32.mrb[0].mxu0
        %v2742 = vadd.f32 %v2331, %v2741
        %v2743 = vpop.f32.mrb[0].mxu0
        %v2744 = vadd.f32 %v2333, %v2743
        %2745 = vmatprep.mubr.f32.mxu0 0.0
        %v2746 = vand.u32 %v383, 4294901760
        %2747 = vmatmul.mubr.f32.gmra.mrb[0].mxu0 %v2746
        %v2748 = vpop.f32.mrb[0].mxu0
        %v2749 = vadd.f32 %v2340, %v2748
        %v2750 = vpop.f32.mrb[0].mxu0
        %v2751 = vadd.f32 %v2342, %v2750
        %2752 = vmatprep.mubr.f32.mxu0 0.0
        %v2753 = vand.u32 %v386, 4294901760
        %2754 = vmatmul.mubr.f32.gmra.mrb[0].mxu0 %v2753
        %v2755 = vpop.f32.mrb[0].mxu0
        %v2756 = vadd.f32 %v2349, %v2755
        %v2757 = vpop.f32.mrb[0].mxu0
        %v2758 = vadd.f32 %v2351, %v2757
        %2759 = vdwg.mxu0
        %v2760 = vand.u32 %v393, 4294901760
        %2761 = vmatprep.subr.mxu0 %v2760
        %v2762 = vand.u32 %v390, 4294901760
        %2763 = vmatpush1.msra.mxu0 %v2762
        %2764 = vmatprep.subr.mxu0 0.0
        %2765 = vmatpush1.msra.mxu0 0.0
        %2766 = vmatprep.subr.mxu0 0.0
        %2767 = vmatpush1.msra.mxu0 0.0
        %2768 = vmatprep.subr.mxu0 0.0
        %2769 = vmatpush1.msra.mxu0 0.0
        %2770 = vmatprep.subr.mxu0 0.0
        %2771 = vmatpush1.msra.mxu0 0.0
        %2772 = vmatprep.subr.mxu0 0.0
        %2773 = vmatpush1.msra.mxu0 0.0
        %2774 = vmatprep.subr.mxu0 0.0
        %2775 = vmatpush1.msra.mxu0 0.0
        %2776 = vmatprep.subr.mxu0 0.0
        %2777 = vmatpush1.msra.mxu0 0.0
        %2778 = vmatprep.subr.mxu0 0.0
        %2779 = vmatpush1.msra.mxu0 0.0
        %2780 = vmatprep.subr.mxu0 0.0
        %2781 = vmatpush1.msra.mxu0 0.0
        %2782 = vmatprep.subr.mxu0 0.0
        %2783 = vmatpush1.msra.mxu0 0.0
        %2784 = vmatprep.subr.mxu0 0.0
        %2785 = vmatpush1.msra.mxu0 0.0
        %2786 = vmatprep.subr.mxu0 0.0
        %2787 = vmatpush1.msra.mxu0 0.0
        %2788 = vmatprep.subr.mxu0 0.0
        %2789 = vmatpush1.msra.mxu0 0.0
        %2790 = vmatprep.subr.mxu0 0.0
        %2791 = vmatpush1.msra.mxu0 0.0
        %2792 = vmatprep.subr.mxu0 0.0
        %2793 = vmatpush1.msra.mxu0 0.0
        %2794 = vmatprep.subr.mxu0 0.0
        %2795 = vmatpush1.msra.mxu0 0.0
        %2796 = vmatprep.subr.mxu0 0.0
        %2797 = vmatpush1.msra.mxu0 0.0
        %2798 = vmatprep.subr.mxu0 0.0
        %2799 = vmatpush1.msra.mxu0 0.0
        %2800 = vmatprep.subr.mxu0 0.0
        %2801 = vmatpush1.msra.mxu0 0.0
        %2802 = vmatprep.subr.mxu0 0.0
        %2803 = vmatpush1.msra.mxu0 0.0
        %2804 = vmatprep.subr.mxu0 0.0
        %2805 = vmatpush1.msra.mxu0 0.0
        %2806 = vmatprep.subr.mxu0 0.0
        %2807 = vmatpush1.msra.mxu0 0.0
        %2808 = vmatprep.subr.mxu0 0.0
        %2809 = vmatpush1.msra.mxu0 0.0
        %2810 = vmatprep.subr.mxu0 0.0
        %2811 = vmatpush1.msra.mxu0 0.0
        %2812 = vmatprep.subr.mxu0 0.0
        %2813 = vmatpush1.msra.mxu0 0.0
        %2814 = vmatprep.subr.mxu0 0.0
        %2815 = vmatpush1.msra.mxu0 0.0
        %2816 = vmatprep.subr.mxu0 0.0
        %2817 = vmatpush1.msra.mxu0 0.0
        %2818 = vmatprep.subr.mxu0 0.0
        %2819 = vmatpush1.msra.mxu0 0.0
        %2820 = vmatprep.subr.mxu0 0.0
        %2821 = vmatpush1.msra.mxu0 0.0
        %2822 = vmatprep.subr.mxu0 0.0
        %2823 = vmatpush1.msra.mxu0 0.0
        %2824 = vmatprep.subr.mxu0 0.0
        %2825 = vmatpush1.msra.mxu0 0.0
        %2826 = vmatprep.mubr.f32.mxu0 0.0
        %v2827 = vand.u32 %v245, 4294901760
        %2828 = vmatmul.mubr.f32.gmra.mrb[0].mxu0 %v2827
        %v2829 = vpop.f32.mrb[0].mxu0
        %v2830 = vadd.f32 %v2427, %v2829
        %v2831 = vpop.f32.mrb[0].mxu0
        %v2832 = vadd.f32 %v2429, %v2831
        %2833 = vmatprep.mubr.f32.mxu0 0.0
        %v2834 = vand.u32 %v248, 4294901760
        %2835 = vmatmul.mubr.f32.gmra.mrb[0].mxu0 %v2834
        %v2836 = vpop.f32.mrb[0].mxu0
        %v2837 = vadd.f32 %v2434, %v2836
        %v2838 = vpop.f32.mrb[0].mxu0
        %v2839 = vadd.f32 %v2436, %v2838
        %2840 = vmatprep.mubr.f32.mxu0 0.0
        %v2841 = vand.u32 %v251, 4294901760
        %2842 = vmatmul.mubr.f32.gmra.mrb[0].mxu0 %v2841
        %v2843 = vpop.f32.mrb[0].mxu0
        %v2844 = vadd.f32 %v2441, %v2843
        %v2845 = vpop.f32.mrb[0].mxu0
        %v2846 = vadd.f32 %v2443, %v2845
        %2847 = vmatprep.mubr.f32.mxu0 0.0
        %v2848 = vand.u32 %v254, 4294901760
        %2849 = vmatmul.mubr.f32.gmra.mrb[0].mxu0 %v2848
        %v2850 = vpop.f32.mrb[0].mxu0
        %v2851 = vadd.f32 %v2448, %v2850
        %v2852 = vpop.f32.mrb[0].mxu0
        %v2853 = vadd.f32 %v2450, %v2852
        %2854 = vmatprep.mubr.f32.mxu0 0.0
        %v2855 = vand.u32 %v257, 4294901760
        %2856 = vmatmul.mubr.f32.gmra.mrb[0].mxu0 %v2855
        %v2857 = vpop.f32.mrb[0].mxu0
        %v2858 = vadd.f32 %v2455, %v2857
        %v2859 = vpop.f32.mrb[0].mxu0
        %v2860 = vadd.f32 %v2457, %v2859
        %2861 = vmatprep.mubr.f32.mxu0 0.0
        %v2862 = vand.u32 %v260, 4294901760
        %2863 = vmatmul.mubr.f32.gmra.mrb[0].mxu0 %v2862
        %v2864 = vpop.f32.mrb[0].mxu0
        %v2865 = vadd.f32 %v2462, %v2864
        %v2866 = vpop.f32.mrb[0].mxu0
        %v2867 = vadd.f32 %v2464, %v2866
        %2868 = vmatprep.mubr.f32.mxu0 0.0
        %v2869 = vand.u32 %v263, 4294901760
        %2870 = vmatmul.mubr.f32.gmra.mrb[0].mxu0 %v2869
        %v2871 = vpop.f32.mrb[0].mxu0
        %v2872 = vadd.f32 %v2469, %v2871
        %v2873 = vpop.f32.mrb[0].mxu0
        %v2874 = vadd.f32 %v2471, %v2873
        %2875 = vmatprep.mubr.f32.mxu0 0.0
        %v2876 = vand.u32 %v266, 4294901760
        %2877 = vmatmul.mubr.f32.gmra.mrb[0].mxu0 %v2876
        %v2878 = vpop.f32.mrb[0].mxu0
        %v2879 = vadd.f32 %v2476, %v2878
        %v2880 = vpop.f32.mrb[0].mxu0
        %v2881 = vadd.f32 %v2478, %v2880
        %2882 = vmatprep.mubr.f32.mxu0 0.0
        %v2883 = vand.u32 %v269, 4294901760
        %2884 = vmatmul.mubr.f32.gmra.mrb[0].mxu0 %v2883
        %v2885 = vpop.f32.mrb[0].mxu0
        %v2886 = vadd.f32 %v2483, %v2885
        %v2887 = vpop.f32.mrb[0].mxu0
        %v2888 = vadd.f32 %v2485, %v2887
        %2889 = vmatprep.mubr.f32.mxu0 0.0
        %v2890 = vand.u32 %v272, 4294901760
        %2891 = vmatmul.mubr.f32.gmra.mrb[0].mxu0 %v2890
        %v2892 = vpop.f32.mrb[0].mxu0
        %v2893 = vadd.f32 %v2490, %v2892
        %v2894 = vpop.f32.mrb[0].mxu0
        %v2895 = vadd.f32 %v2492, %v2894
        %2896 = vmatprep.mubr.f32.mxu0 0.0
        %v2897 = vand.u32 %v275, 4294901760
        %2898 = vmatmul.mubr.f32.gmra.mrb[0].mxu0 %v2897
        %v2899 = vpop.f32.mrb[0].mxu0
        %v2900 = vadd.f32 %v2497, %v2899
        %v2901 = vpop.f32.mrb[0].mxu0
        %v2902 = vadd.f32 %v2499, %v2901
        %2903 = vmatprep.mubr.f32.mxu0 0.0
        %v2904 = vand.u32 %v278, 4294901760
        %2905 = vmatmul.mubr.f32.gmra.mrb[0].mxu0 %v2904
        %v2906 = vpop.f32.mrb[0].mxu0
        %v2907 = vadd.f32 %v2504, %v2906
        %v2908 = vpop.f32.mrb[0].mxu0
        %v2909 = vadd.f32 %v2506, %v2908
        %2910 = vmatprep.mubr.f32.mxu0 0.0
        %v2911 = vand.u32 %v281, 4294901760
        %2912 = vmatmul.mubr.f32.gmra.mrb[0].mxu0 %v2911
        %v2913 = vpop.f32.mrb[0].mxu0
        %v2914 = vadd.f32 %v2511, %v2913
        %v2915 = vpop.f32.mrb[0].mxu0
        %v2916 = vadd.f32 %v2513, %v2915
        %2917 = vmatprep.mubr.f32.mxu0 0.0
        %v2918 = vand.u32 %v284, 4294901760
        %2919 = vmatmul.mubr.f32.gmra.mrb[0].mxu0 %v2918
        %v2920 = vpop.f32.mrb[0].mxu0
        %v2921 = vadd.f32 %v2518, %v2920
        %v2922 = vpop.f32.mrb[0].mxu0
        %v2923 = vadd.f32 %v2520, %v2922
        %2924 = vmatprep.mubr.f32.mxu0 0.0
        %v2925 = vand.u32 %v287, 4294901760
        %2926 = vmatmul.mubr.f32.gmra.mrb[0].mxu0 %v2925
        %v2927 = vpop.f32.mrb[0].mxu0
        %v2928 = vadd.f32 %v2525, %v2927
        %v2929 = vpop.f32.mrb[0].mxu0
        %v2930 = vadd.f32 %v2527, %v2929
        %2931 = vmatprep.mubr.f32.mxu0 0.0
        %v2932 = vand.u32 %v290, 4294901760
        %2933 = vmatmul.mubr.f32.gmra.mrb[0].mxu0 %v2932
        %v2934 = vpop.f32.mrb[0].mxu0
        %v2935 = vadd.f32 %v2532, %v2934
        %v2936 = vpop.f32.mrb[0].mxu0
        %v2937 = vadd.f32 %v2534, %v2936
        %2938 = vmatprep.mubr.f32.mxu0 0.0
        %v2939 = vand.u32 %v293, 4294901760
        %2940 = vmatmul.mubr.f32.gmra.mrb[0].mxu0 %v2939
        %v2941 = vpop.f32.mrb[0].mxu0
        %v2942 = vadd.f32 %v2539, %v2941
        %v2943 = vpop.f32.mrb[0].mxu0
        %v2944 = vadd.f32 %v2541, %v2943
        %2945 = vmatprep.mubr.f32.mxu0 0.0
        %v2946 = vand.u32 %v296, 4294901760
        %2947 = vmatmul.mubr.f32.gmra.mrb[0].mxu0 %v2946
        %v2948 = vpop.f32.mrb[0].mxu0
        %v2949 = vadd.f32 %v2546, %v2948
        %v2950 = vpop.f32.mrb[0].mxu0
        %v2951 = vadd.f32 %v2548, %v2950
        %2952 = vmatprep.mubr.f32.mxu0 0.0
        %v2953 = vand.u32 %v299, 4294901760
        %2954 = vmatmul.mubr.f32.gmra.mrb[0].mxu0 %v2953
        %v2955 = vpop.f32.mrb[0].mxu0
        %v2956 = vadd.f32 %v2553, %v2955
        %v2957 = vpop.f32.mrb[0].mxu0
        %v2958 = vadd.f32 %v2555, %v2957
        %2959 = vmatprep.mubr.f32.mxu0 0.0
        %v2960 = vand.u32 %v302, 4294901760
        %2961 = vmatmul.mubr.f32.gmra.mrb[0].mxu0 %v2960
        %v2962 = vpop.f32.mrb[0].mxu0
        %v2963 = vadd.f32 %v2560, %v2962
        %v2964 = vpop.f32.mrb[0].mxu0
        %v2965 = vadd.f32 %v2562, %v2964
        %2966 = vmatprep.mubr.f32.mxu0 0.0
        %v2967 = vand.u32 %v305, 4294901760
        %2968 = vmatmul.mubr.f32.gmra.mrb[0].mxu0 %v2967
        %v2969 = vpop.f32.mrb[0].mxu0
        %v2970 = vadd.f32 %v2567, %v2969
        %v2971 = vpop.f32.mrb[0].mxu0
        %v2972 = vadd.f32 %v2569, %v2971
        %2973 = vmatprep.mubr.f32.mxu0 0.0
        %v2974 = vand.u32 %v308, 4294901760
        %2975 = vmatmul.mubr.f32.gmra.mrb[0].mxu0 %v2974
        %v2976 = vpop.f32.mrb[0].mxu0
        %v2977 = vadd.f32 %v2574, %v2976
        %v2978 = vpop.f32.mrb[0].mxu0
        %v2979 = vadd.f32 %v2576, %v2978
        %2980 = vmatprep.mubr.f32.mxu0 0.0
        %v2981 = vand.u32 %v311, 4294901760
        %2982 = vmatmul.mubr.f32.gmra.mrb[0].mxu0 %v2981
        %v2983 = vpop.f32.mrb[0].mxu0
        %v2984 = vadd.f32 %v2581, %v2983
        %v2985 = vpop.f32.mrb[0].mxu0
        %v2986 = vadd.f32 %v2583, %v2985
        %2987 = vmatprep.mubr.f32.mxu0 0.0
        %v2988 = vand.u32 %v314, 4294901760
        %2989 = vmatmul.mubr.f32.gmra.mrb[0].mxu0 %v2988
        %v2990 = vpop.f32.mrb[0].mxu0
        %v2991 = vadd.f32 %v2588, %v2990
        %v2992 = vpop.f32.mrb[0].mxu0
        %v2993 = vadd.f32 %v2590, %v2992
        %2994 = vmatprep.mubr.f32.mxu0 0.0
        %v2995 = vand.u32 %v317, 4294901760
        %2996 = vmatmul.mubr.f32.gmra.mrb[0].mxu0 %v2995
        %v2997 = vpop.f32.mrb[0].mxu0
        %v2998 = vadd.f32 %v2595, %v2997
        %v2999 = vpop.f32.mrb[0].mxu0
        %v3000 = vadd.f32 %v2597, %v2999
        %3001 = vmatprep.mubr.f32.mxu0 0.0
        %v3002 = vand.u32 %v320, 4294901760
        %3003 = vmatmul.mubr.f32.gmra.mrb[0].mxu0 %v3002
        %v3004 = vpop.f32.mrb[0].mxu0
        %v3005 = vadd.f32 %v2602, %v3004
        %v3006 = vpop.f32.mrb[0].mxu0
        %v3007 = vadd.f32 %v2604, %v3006
        %3008 = vmatprep.mubr.f32.mxu0 0.0
        %v3009 = vand.u32 %v323, 4294901760
        %3010 = vmatmul.mubr.f32.gmra.mrb[0].mxu0 %v3009
        %v3011 = vpop.f32.mrb[0].mxu0
        %v3012 = vadd.f32 %v2609, %v3011
        %v3013 = vpop.f32.mrb[0].mxu0
        %v3014 = vadd.f32 %v2611, %v3013
        %3015 = vmatprep.mubr.f32.mxu0 0.0
        %v3016 = vand.u32 %v326, 4294901760
        %3017 = vmatmul.mubr.f32.gmra.mrb[0].mxu0 %v3016
        %v3018 = vpop.f32.mrb[0].mxu0
        %v3019 = vadd.f32 %v2616, %v3018
        %v3020 = vpop.f32.mrb[0].mxu0
        %v3021 = vadd.f32 %v2618, %v3020
        %3022 = vmatprep.mubr.f32.mxu0 0.0
        %v3023 = vand.u32 %v329, 4294901760
        %3024 = vmatmul.mubr.f32.gmra.mrb[0].mxu0 %v3023
        %v3025 = vpop.f32.mrb[0].mxu0
        %v3026 = vadd.f32 %v2623, %v3025
        %v3027 = vpop.f32.mrb[0].mxu0
        %v3028 = vadd.f32 %v2625, %v3027
        %3029 = vmatprep.mubr.f32.mxu0 0.0
        %v3030 = vand.u32 %v332, 4294901760
        %3031 = vmatmul.mubr.f32.gmra.mrb[0].mxu0 %v3030
        %v3032 = vpop.f32.mrb[0].mxu0
        %v3033 = vadd.f32 %v2630, %v3032
        %v3034 = vpop.f32.mrb[0].mxu0
        %v3035 = vadd.f32 %v2632, %v3034
        %3036 = vmatprep.mubr.f32.mxu0 0.0
        %v3037 = vand.u32 %v335, 4294901760
        %3038 = vmatmul.mubr.f32.gmra.mrb[0].mxu0 %v3037
        %v3039 = vpop.f32.mrb[0].mxu0
        %v3040 = vadd.f32 %v2637, %v3039
        %v3041 = vpop.f32.mrb[0].mxu0
        %v3042 = vadd.f32 %v2639, %v3041
        %3043 = vmatprep.mubr.f32.mxu0 0.0
        %v3044 = vand.u32 %v338, 4294901760
        %3045 = vmatmul.mubr.f32.gmra.mrb[0].mxu0 %v3044
        %v3046 = vpop.f32.mrb[0].mxu0
        %v3047 = vadd.f32 %v2644, %v3046
        %v3048 = vpop.f32.mrb[0].mxu0
        %v3049 = vadd.f32 %v2646, %v3048
        %3050 = vmatprep.mubr.f32.mxu0 0.0
        %v3051 = vand.u32 %v341, 4294901760
        %3052 = vmatmul.mubr.f32.gmra.mrb[0].mxu0 %v3051
        %v3053 = vpop.f32.mrb[0].mxu0
        %v3054 = vadd.f32 %v2651, %v3053
        %v3055 = vpop.f32.mrb[0].mxu0
        %v3056 = vadd.f32 %v2653, %v3055
        %3057 = vmatprep.mubr.f32.mxu0 0.0
        %v3058 = vand.u32 %v344, 4294901760
        %3059 = vmatmul.mubr.f32.gmra.mrb[0].mxu0 %v3058
        %v3060 = vpop.f32.mrb[0].mxu0
        %v3061 = vadd.f32 %v2658, %v3060
        %v3062 = vpop.f32.mrb[0].mxu0
        %v3063 = vadd.f32 %v2660, %v3062
        %3064 = vmatprep.mubr.f32.mxu0 0.0
        %v3065 = vand.u32 %v347, 4294901760
        %3066 = vmatmul.mubr.f32.gmra.mrb[0].mxu0 %v3065
        %v3067 = vpop.f32.mrb[0].mxu0
        %v3068 = vadd.f32 %v2665, %v3067
        %v3069 = vpop.f32.mrb[0].mxu0
        %v3070 = vadd.f32 %v2667, %v3069
        %3071 = vmatprep.mubr.f32.mxu0 0.0
        %v3072 = vand.u32 %v350, 4294901760
        %3073 = vmatmul.mubr.f32.gmra.mrb[0].mxu0 %v3072
        %v3074 = vpop.f32.mrb[0].mxu0
        %v3075 = vadd.f32 %v2672, %v3074
        %v3076 = vpop.f32.mrb[0].mxu0
        %v3077 = vadd.f32 %v2674, %v3076
        %3078 = vmatprep.mubr.f32.mxu0 0.0
        %v3079 = vand.u32 %v353, 4294901760
        %3080 = vmatmul.mubr.f32.gmra.mrb[0].mxu0 %v3079
        %v3081 = vpop.f32.mrb[0].mxu0
        %v3082 = vadd.f32 %v2679, %v3081
        %v3083 = vpop.f32.mrb[0].mxu0
        %v3084 = vadd.f32 %v2681, %v3083
        %3085 = vmatprep.mubr.f32.mxu0 0.0
        %v3086 = vand.u32 %v356, 4294901760
        %3087 = vmatmul.mubr.f32.gmra.mrb[0].mxu0 %v3086
        %v3088 = vpop.f32.mrb[0].mxu0
        %v3089 = vadd.f32 %v2686, %v3088
        %v3090 = vpop.f32.mrb[0].mxu0
        %v3091 = vadd.f32 %v2688, %v3090
        %3092 = vmatprep.mubr.f32.mxu0 0.0
        %v3093 = vand.u32 %v359, 4294901760
        %3094 = vmatmul.mubr.f32.gmra.mrb[0].mxu0 %v3093
        %v3095 = vpop.f32.mrb[0].mxu0
        %v3096 = vadd.f32 %v2693, %v3095
        %v3097 = vpop.f32.mrb[0].mxu0
        %v3098 = vadd.f32 %v2695, %v3097
        %3099 = vmatprep.mubr.f32.mxu0 0.0
        %v3100 = vand.u32 %v362, 4294901760
        %3101 = vmatmul.mubr.f32.gmra.mrb[0].mxu0 %v3100
        %v3102 = vpop.f32.mrb[0].mxu0
        %v3103 = vadd.f32 %v2700, %v3102
        %v3104 = vpop.f32.mrb[0].mxu0
        %v3105 = vadd.f32 %v2702, %v3104
        %3106 = vmatprep.mubr.f32.mxu0 0.0
        %v3107 = vand.u32 %v365, 4294901760
        %3108 = vmatmul.mubr.f32.gmra.mrb[0].mxu0 %v3107
        %v3109 = vpop.f32.mrb[0].mxu0
        %v3110 = vadd.f32 %v2707, %v3109
        %v3111 = vpop.f32.mrb[0].mxu0
        %v3112 = vadd.f32 %v2709, %v3111
        %3113 = vmatprep.mubr.f32.mxu0 0.0
        %v3114 = vand.u32 %v368, 4294901760
        %3115 = vmatmul.mubr.f32.gmra.mrb[0].mxu0 %v3114
        %v3116 = vpop.f32.mrb[0].mxu0
        %v3117 = vadd.f32 %v2714, %v3116
        %v3118 = vpop.f32.mrb[0].mxu0
        %v3119 = vadd.f32 %v2716, %v3118
        %3120 = vmatprep.mubr.f32.mxu0 0.0
        %v3121 = vand.u32 %v371, 4294901760
        %3122 = vmatmul.mubr.f32.gmra.mrb[0].mxu0 %v3121
        %v3123 = vpop.f32.mrb[0].mxu0
        %v3124 = vadd.f32 %v2721, %v3123
        %v3125 = vpop.f32.mrb[0].mxu0
        %v3126 = vadd.f32 %v2723, %v3125
        %3127 = vmatprep.mubr.f32.mxu0 0.0
        %v3128 = vand.u32 %v374, 4294901760
        %3129 = vmatmul.mubr.f32.gmra.mrb[0].mxu0 %v3128
        %v3130 = vpop.f32.mrb[0].mxu0
        %v3131 = vadd.f32 %v2728, %v3130
        %v3132 = vpop.f32.mrb[0].mxu0
        %v3133 = vadd.f32 %v2730, %v3132
        %3134 = vmatprep.mubr.f32.mxu0 0.0
        %v3135 = vand.u32 %v377, 4294901760
        %3136 = vmatmul.mubr.f32.gmra.mrb[0].mxu0 %v3135
        %v3137 = vpop.f32.mrb[0].mxu0
        %v3138 = vadd.f32 %v2735, %v3137
        %v3139 = vpop.f32.mrb[0].mxu0
        %v3140 = vadd.f32 %v2737, %v3139
        %3141 = vmatprep.mubr.f32.mxu0 0.0
        %v3142 = vand.u32 %v380, 4294901760
        %3143 = vmatmul.mubr.f32.gmra.mrb[0].mxu0 %v3142
        %v3144 = vpop.f32.mrb[0].mxu0
        %v3145 = vadd.f32 %v2742, %v3144
        %v3146 = vpop.f32.mrb[0].mxu0
        %v3147 = vadd.f32 %v2744, %v3146
        %3148 = vmatprep.mubr.f32.mxu0 0.0
        %v3149 = vand.u32 %v383, 4294901760
        %3150 = vmatmul.mubr.f32.gmra.mrb[0].mxu0 %v3149
        %v3151 = vpop.f32.mrb[0].mxu0
        %v3152 = vadd.f32 %v2749, %v3151
        %v3153 = vpop.f32.mrb[0].mxu0
        %v3154 = vadd.f32 %v2751, %v3153
        %3155 = vmatprep.mubr.f32.mxu0 0.0
        %v3156 = vand.u32 %v386, 4294901760
        %3157 = vmatmul.mubr.f32.gmra.mrb[0].mxu0 %v3156
        %v3158 = vpop.f32.mrb[0].mxu0
        %v3159 = vadd.f32 %v2756, %v3158
        %v3160 = vpop.f32.mrb[0].mxu0
        %v3161 = vadd.f32 %v2758, %v3160
        %3162 = vdwg.mxu0
        %3163 = vst [vmem:[%s136] sm:$0xff] %v2830
        %3164 = vst [vmem:[%s136 + $0x8] sm:$0xff] %v2832
        %3165 = vst [vmem:[%s136 + $0x10] sm:$0xff] %v2837
        %3166 = vst [vmem:[%s136 + $0x18] sm:$0xff] %v2839
        %3167 = vst [vmem:[%s136 + $0x20] sm:$0xff] %v2844
        %3168 = vst [vmem:[%s136 + $0x28] sm:$0xff] %v2846
        %3169 = vst [vmem:[%s136 + $0x30] sm:$0xff] %v2851
        %3170 = vst [vmem:[%s136 + $0x38] sm:$0xff] %v2853
        %3171 = vst [vmem:[%s136 + $0x40] sm:$0xff] %v2858
        %3172 = vst [vmem:[%s136 + $0x48] sm:$0xff] %v2860
        %3173 = vst [vmem:[%s136 + $0x50] sm:$0xff] %v2865
        %3174 = vst [vmem:[%s136 + $0x58] sm:$0xff] %v2867
        %3175 = vst [vmem:[%s136 + $0x60] sm:$0xff] %v2872
        %3176 = vst [vmem:[%s136 + $0x68] sm:$0xff] %v2874
        %3177 = vst [vmem:[%s136 + $0x70] sm:$0xff] %v2879
        %3178 = vst [vmem:[%s136 + $0x78] sm:$0xff] %v2881
        %3179 = vst [vmem:[%s136 + $0x80] sm:$0xff] %v2886
        %3180 = vst [vmem:[%s136 + $0x88] sm:$0xff] %v2888
        %3181 = vst [vmem:[%s136 + $0x90] sm:$0xff] %v2893
        %3182 = vst [vmem:[%s136 + $0x98] sm:$0xff] %v2895
        %3183 = vst [vmem:[%s136 + $0xa0] sm:$0xff] %v2900
        %3184 = vst [vmem:[%s136 + $0xa8] sm:$0xff] %v2902
        %3185 = vst [vmem:[%s136 + $0xb0] sm:$0xff] %v2907
        %3186 = vst [vmem:[%s136 + $0xb8] sm:$0xff] %v2909
        %3187 = vst [vmem:[%s136 + $0xc0] sm:$0xff] %v2914
        %3188 = vst [vmem:[%s136 + $0xc8] sm:$0xff] %v2916
        %3189 = vst [vmem:[%s136 + $0xd0] sm:$0xff] %v2921
        %3190 = vst [vmem:[%s136 + $0xd8] sm:$0xff] %v2923
        %3191 = vst [vmem:[%s136 + $0xe0] sm:$0xff] %v2928
        %3192 = vst [vmem:[%s136 + $0xe8] sm:$0xff] %v2930
        %3193 = vst [vmem:[%s136 + $0xf0] sm:$0xff] %v2935
        %3194 = vst [vmem:[%s136 + $0xf8] sm:$0xff] %v2937
        %3195 = vst [vmem:[%s136 + $0x100] sm:$0xff] %v2942
        %3196 = vst [vmem:[%s136 + $0x108] sm:$0xff] %v2944
        %3197 = vst [vmem:[%s136 + $0x110] sm:$0xff] %v2949
        %3198 = vst [vmem:[%s136 + $0x118] sm:$0xff] %v2951
        %3199 = vst [vmem:[%s136 + $0x120] sm:$0xff] %v2956
        %3200 = vst [vmem:[%s136 + $0x128] sm:$0xff] %v2958
        %3201 = vst [vmem:[%s136 + $0x130] sm:$0xff] %v2963
        %3202 = vst [vmem:[%s136 + $0x138] sm:$0xff] %v2965
        %3203 = vst [vmem:[%s136 + $0x140] sm:$0xff] %v2970
        %3204 = vst [vmem:[%s136 + $0x148] sm:$0xff] %v2972
        %3205 = vst [vmem:[%s136 + $0x150] sm:$0xff] %v2977
        %3206 = vst [vmem:[%s136 + $0x158] sm:$0xff] %v2979
        %3207 = vst [vmem:[%s136 + $0x160] sm:$0xff] %v2984
        %3208 = vst [vmem:[%s136 + $0x168] sm:$0xff] %v2986
        %3209 = vst [vmem:[%s136 + $0x170] sm:$0xff] %v2991
        %3210 = vst [vmem:[%s136 + $0x178] sm:$0xff] %v2993
        %3211 = vst [vmem:[%s136 + $0x180] sm:$0xff] %v2998
        %3212 = vst [vmem:[%s136 + $0x188] sm:$0xff] %v3000
        %3213 = vst [vmem:[%s136 + $0x190] sm:$0xff] %v3005
        %3214 = vst [vmem:[%s136 + $0x198] sm:$0xff] %v3007
        %3215 = vst [vmem:[%s136 + $0x1a0] sm:$0xff] %v3012
        %3216 = vst [vmem:[%s136 + $0x1a8] sm:$0xff] %v3014
        %3217 = vst [vmem:[%s136 + $0x1b0] sm:$0xff] %v3019
        %3218 = vst [vmem:[%s136 + $0x1b8] sm:$0xff] %v3021
        %3219 = vst [vmem:[%s136 + $0x1c0] sm:$0xff] %v3026
        %3220 = vst [vmem:[%s136 + $0x1c8] sm:$0xff] %v3028
        %3221 = vst [vmem:[%s136 + $0x1d0] sm:$0xff] %v3033
        %3222 = vst [vmem:[%s136 + $0x1d8] sm:$0xff] %v3035
        %3223 = vst [vmem:[%s136 + $0x1e0] sm:$0xff] %v3040
        %3224 = vst [vmem:[%s136 + $0x1e8] sm:$0xff] %v3042
        %3225 = vst [vmem:[%s136 + $0x1f0] sm:$0xff] %v3047
        %3226 = vst [vmem:[%s136 + $0x1f8] sm:$0xff] %v3049
        %3227 = vst [vmem:[%s136 + $0x200] sm:$0xff] %v3054
        %3228 = vst [vmem:[%s136 + $0x208] sm:$0xff] %v3056
        %3229 = vst [vmem:[%s136 + $0x210] sm:$0xff] %v3061
        %3230 = vst [vmem:[%s136 + $0x218] sm:$0xff] %v3063
        %3231 = vst [vmem:[%s136 + $0x220] sm:$0xff] %v3068
        %3232 = vst [vmem:[%s136 + $0x228] sm:$0xff] %v3070
        %3233 = vst [vmem:[%s136 + $0x230] sm:$0xff] %v3075
        %3234 = vst [vmem:[%s136 + $0x238] sm:$0xff] %v3077
        %3235 = vst [vmem:[%s136 + $0x240] sm:$0xff] %v3082
        %3236 = vst [vmem:[%s136 + $0x248] sm:$0xff] %v3084
        %3237 = vst [vmem:[%s136 + $0x250] sm:$0xff] %v3089
        %3238 = vst [vmem:[%s136 + $0x258] sm:$0xff] %v3091
        %3239 = vst [vmem:[%s136 + $0x260] sm:$0xff] %v3096
        %3240 = vst [vmem:[%s136 + $0x268] sm:$0xff] %v3098
        %3241 = vst [vmem:[%s136 + $0x270] sm:$0xff] %v3103
        %3242 = vst [vmem:[%s136 + $0x278] sm:$0xff] %v3105
        %3243 = vst [vmem:[%s136 + $0x280] sm:$0xff] %v3110
        %3244 = vst [vmem:[%s136 + $0x288] sm:$0xff] %v3112
        %3245 = vst [vmem:[%s136 + $0x290] sm:$0xff] %v3117
        %3246 = vst [vmem:[%s136 + $0x298] sm:$0xff] %v3119
        %3247 = vst [vmem:[%s136 + $0x2a0] sm:$0xff] %v3124
        %3248 = vst [vmem:[%s136 + $0x2a8] sm:$0xff] %v3126
        %3249 = vst [vmem:[%s136 + $0x2b0] sm:$0xff] %v3131
        %3250 = vst [vmem:[%s136 + $0x2b8] sm:$0xff] %v3133
        %3251 = vst [vmem:[%s136 + $0x2c0] sm:$0xff] %v3138
        %3252 = vst [vmem:[%s136 + $0x2c8] sm:$0xff] %v3140
        %3253 = vst [vmem:[%s136 + $0x2d0] sm:$0xff] %v3145
        %3254 = vst [vmem:[%s136 + $0x2d8] sm:$0xff] %v3147
        %3255 = vst [vmem:[%s136 + $0x2e0] sm:$0xff] %v3152
        %3256 = vst [vmem:[%s136 + $0x2e8] sm:$0xff] %v3154
        %3257 = vst [vmem:[%s136 + $0x2f0] sm:$0xff] %v3159
        %3258 = vst [vmem:[%s136 + $0x2f8] sm:$0xff] %v3161
        %s3259 = sand.u32 %s71, 1
        %s3260 = scalar_lea.sflag [#allocation3], %s3259
        %s3261 = sand.u32 %s71, 1
        %s3262 = smul.addr %s3261, 768
        %s3263 = scalar_lea.vmem [#allocation2], %s3262
        // Predicated region
        $region29: #{tpu_custom_call.1} parent=27 // pred_check
          %p3264 = pneg %p81
        $region30: #{tpu_custom_call.1} parent=27 // pred_check_branch
          %3266 = sbr.rel (%p3264) target = $region32
        $region31: #{tpu_custom_call.1} parent=27 // pred_region
          %s3268 = ssub.s32 12288, 12288
          %3269 = vsyncadd %s3260, %s3268
          %s3270 = smul.addr %s16, 96
          %s3271 = smul.addr %s3270, 128
          %s3272 = scalar_lea.hbm %s2, %s3271
          %s3273 = sshll.u32 %s3263, 4
          %s3274 = int_to_ptr.vmem [resolvable:$true] %s3273
          %3279 = dma.vmem_to_hbm [thread:$0]  %s3274, 12288, %s3272, %s3260, 256, 256, 16
        $region32: #{tpu_custom_call.1} parent=27 // pred_fallthru
          _
      $region28: #{tpu_custom_call.1} parent=5 // pred_fallthru
        _
      %p3280 = scmp.le.s32.totalorder 2, %s11
      // Predicated region
      $region33: #{tpu_custom_call.1} parent=5 // pred_check
        %p3281 = pneg %p3280
      $region34: #{tpu_custom_call.1} parent=5 // pred_check_branch
        %3283 = sbr.rel (%p3281) target = $region36
      $region35: #{tpu_custom_call.1} parent=5 // pred_region
        %s3284 = ssub.s32 %s11, 2
        // Predicated region
        $region37: #{tpu_custom_call.1} parent=35 // pred_check
          %p3285 = pneg %p87
        $region38: #{tpu_custom_call.1} parent=35 // pred_check_branch
          %3287 = sbr.rel (%p3285) target = $region40
        $region39: #{tpu_custom_call.1} parent=35 // pred_region
          %s3288 = sand.u32 %s72, 1
          %s3289 = scalar_lea.sflag [#allocation3], %s3288
          %s3290 = sand.u32 %s72, 1
          %s3291 = smul.addr %s3290, 768
          %s3292 = scalar_lea.vmem [#allocation2], %s3291
          %3293 = dma.done %s3289, 12288
        $region40: #{tpu_custom_call.1} parent=35 // pred_fallthru
          _
      $region36: #{tpu_custom_call.1} parent=5 // pred_fallthru
        _
    $region6: #{tpu_custom_call.1} parent=1 // loop_footer
      %s15 = sadd.s32 1, %s11
    $region7: #{tpu_custom_call.1} parent=1 // loop_footer_branch
      %10 = sbr.rel target = $region3
    $region8: #{tpu_custom_call.1} parent=1 // loop_exit
      _
    %3294 = vsyncpa [#allocation3], 1
    %s3295 = scalar_lea.sflag [#allocation3], 1
    %3296 = vsyncpa %s3295, 1

</llo_original>
